<compile_context>
chip_gen: v5e
topology: v5e:2x2
jax: 0.10.0
libtpu: 0.0.40
codegen_flags: <defaults>
</compile_context>

<pallas_src>
import functools

import jax
import jax.numpy as jnp
from jax import lax
from jax.experimental import pallas as pl
from jax.experimental.pallas import tpu as pltpu

K = 5            # TNet k
KK = K * K
EPS = 1e-5       # PyTorch BatchNorm default eps

C1, C2, C3 = 16, 32, 64      # conv channels
C4, C5 = 32, 16              # fc hidden channels

# --- packed weight buffer: (Cout, Cin) blocks stacked on sublanes, Cin on lanes
W_PACK_SHAPE = (192, 64)
W1_R0, W1_R1 = 0, 16         # conv1  (16, 5)
W2_R0, W2_R1 = 16, 48        # conv2  (32, 16)
W3_R0, W3_R1 = 48, 112       # conv3  (64, 32)
F1_R0, F1_R1 = 112, 144      # fc1    (32, 64)
F2_R0, F2_R1 = 144, 160      # fc2    (16, 32)
F3_R0, F3_R1 = 160, 185      # fc3    (25, 16)

# --- packed BN / bias buffer: channels on sublanes, one column per parameter
P_PACK_SHAPE = (64, 12)
G1_C, B1_C = 0, 1
G2_C, B2_C = 2, 3
G3_C, B3_C = 4, 5
G4_C, B4_C = 6, 7
G5_C, B5_C = 8, 9
FB3_C = 10

# grid phases
PH_STAT1, PH_STAT2, PH_STAT3 = 0, 1, 2

# columns of the hoisted scale/shift scratch (ss)
SS_S1, SS_SH1, SS_S2, SS_SH2, SS_SGN3 = 0, 1, 2, 3, 4
SS_COLS = 8


def _bn_scale_shift(acc_ref, gamma, beta, inv_count):
    """Fold accumulated (sum, sumsq) + affine params into y*scale + shift."""
    mean = acc_ref[:, 0:1] * inv_count                       # (C, 1)
    var = jnp.maximum(acc_ref[:, 1:2] * inv_count - mean * mean, 0.0)
    scale = gamma * lax.rsqrt(var + EPS)
    shift = beta - mean * scale
    return scale, shift


def _accumulate(acc_ref, y, ones):
    # Cross-lane sums done as matmuls with a ones vector: the conv matmuls have tiny
    # contraction dims, so the MXU slot has large slack while the XLU is the busy unit
    # in the stats phases.
    acc_ref[:, 0:1] = acc_ref[:, 0:1] + jnp.dot(
        y, ones, preferred_element_type=jnp.float32)
    acc_ref[:, 1:2] = acc_ref[:, 1:2] + jnp.dot(
        y * y, ones, preferred_element_type=jnp.float32)


def _bn_relu_over_lanes(z, gamma, beta):
    """Training-mode BN over the lane (= batch) axis of a (C, B) tile, then ReLU."""
    m = jnp.mean(z, axis=-1, keepdims=True)
    v = jnp.mean((z - m) ** 2, axis=-1, keepdims=True)
    return jnp.maximum((z - m) * lax.rsqrt(v + EPS) * gamma + beta, 0.0)


def tnet_kernel(x_ref, w_ref, p_ref, out_ref,
                acc1, acc2, acc3, ss, ext, run, *, inv_count):
    p = pl.program_id(0)          # phase
    b = pl.program_id(1)          # batch element
    t = pl.program_id(2)          # point tile
    nb = pl.num_programs(1)
    nt = pl.num_programs(2)
    first = (b == 0) & (t == 0)
    last = (b == nb - 1) & (t == nt - 1)

    # ---- one-time init of cross-step accumulators -------------------------
    @pl.when((p == PH_STAT1) & first)
    def _():
        acc1[...] = jnp.zeros(acc1.shape, acc1.dtype)
        acc2[...] = jnp.zeros(acc2.shape, acc2.dtype)
        acc3[...] = jnp.zeros(acc3.shape, acc3.dtype)
        ext[...] = jnp.zeros(ext.shape, ext.dtype)

    # ---- hoist BN1 / BN2 scale+shift (and sign(gamma3)) to once-per-phase --
    @pl.when((p == PH_STAT2) & first)
    def _():
        s1, sh1 = _bn_scale_shift(acc1, p_ref[0:C1, G1_C:G1_C + 1],
                                  p_ref[0:C1, B1_C:B1_C + 1], inv_count)
        ss[0:C1, SS_S1:SS_S1 + 1] = s1
        ss[0:C1, SS_SH1:SS_SH1 + 1] = sh1

    @pl.when((p == PH_STAT3) & first)
    def _():
        s2, sh2 = _bn_scale_shift(acc2, p_ref[0:C2, G2_C:G2_C + 1],
                                  p_ref[0:C2, B2_C:B2_C + 1], inv_count)
        ss[0:C2, SS_S2:SS_S2 + 1] = s2
        ss[0:C2, SS_SH2:SS_SH2 + 1] = sh2
        ss[0:C3, SS_SGN3:SS_SGN3 + 1] = jnp.where(
            p_ref[0:C3, G3_C:G3_C + 1] >= 0.0, 1.0, -1.0)

    # ---- per-tile streamed compute -----------------------------------------
    x = x_ref[...]                                            # (K, TILE_N)
    ones = jnp.ones((x.shape[-1], 1), jnp.float32)
    y1 = jnp.dot(w_ref[W1_R0:W1_R1, 0:K], x,
                 preferred_element_type=jnp.float32)          # (16, TILE_N)

    @pl.when(p == PH_STAT1)
    def _():
        _accumulate(acc1, y1, ones)

    @pl.when(p >= PH_STAT2)
    def _():
        h1 = jnp.maximum(y1 * ss[0:C1, SS_S1:SS_S1 + 1]
                         + ss[0:C1, SS_SH1:SS_SH1 + 1], 0.0)
        y2 = jnp.dot(w_ref[W2_R0:W2_R1, 0:C1], h1,
                     preferred_element_type=jnp.float32)      # (32, TILE_N)

        @pl.when(p == PH_STAT2)
        def _():
            _accumulate(acc2, y2, ones)

        @pl.when(p == PH_STAT3)
        def _():
            h2 = jnp.maximum(y2 * ss[0:C2, SS_S2:SS_S2 + 1]
                             + ss[0:C2, SS_SH2:SS_SH2 + 1], 0.0)
            y3 = jnp.dot(w_ref[W3_R0:W3_R1, 0:C2], h2,
                         preferred_element_type=jnp.float32)  # (64, TILE_N)
            _accumulate(acc3, y3, ones)

            # Per-batch running "signed max" of y3.  Since
            #   max_p relu(s3*y + sh3) = relu(|s3| * max_p(sign(gamma3)*y) + sh3),
            # this one extremum lets the final step apply BN3+ReLU+max-pool exactly,
            # eliminating the old 4th streaming pass.
            tile_ext = jnp.max(y3 * ss[0:C3, SS_SGN3:SS_SGN3 + 1],
                               axis=-1, keepdims=True)        # (64, 1)

            @pl.when(t == 0)
            def _():
                run[...] = tile_ext

            @pl.when(t > 0)
            def _():
                run[...] = jnp.maximum(run[...], tile_ext)

            @pl.when(t == nt - 1)          # merge once per batch, not per tile
            def _():
                cols = lax.broadcasted_iota(jnp.int32, ext.shape, 1)
                ext[...] = jnp.where(cols == b, run[...], ext[...])

    # ---- fused BN3 + ReLU + max-pool + fc head: once, at the last grid step --
    @pl.when((p == PH_STAT3) & last)
    def _():
        s3, sh3 = _bn_scale_shift(acc3, p_ref[0:C3, G3_C:G3_C + 1],
                                  p_ref[0:C3, B3_C:B3_C + 1], inv_count)
        pooled = jnp.maximum(jnp.abs(s3) * ext[...] + sh3, 0.0)      # (64, B)
        z = jnp.dot(w_ref[F1_R0:F1_R1, 0:C3], pooled,
                    preferred_element_type=jnp.float32)              # (32, B)
        z = _bn_relu_over_lanes(z, p_ref[0:C4, G4_C:G4_C + 1],
                                p_ref[0:C4, B4_C:B4_C + 1])
        z = jnp.dot(w_ref[F2_R0:F2_R1, 0:C4], z,
                    preferred_element_type=jnp.float32)              # (16, B)
        z = _bn_relu_over_lanes(z, p_ref[0:C5, G5_C:G5_C + 1],
                                p_ref[0:C5, B5_C:B5_C + 1])
        z = jnp.dot(w_ref[F3_R0:F3_R1, 0:C5], z,
                    preferred_element_type=jnp.float32)              # (25, B)
        z = z + p_ref[0:KK, FB3_C:FB3_C + 1]
        # identity in flattened (k*k)-row-major order: 1 where i % (k+1) == 0
        eye = (lax.broadcasted_iota(jnp.int32, z.shape, 0) % (K + 1) == 0)
        out_ref[...] = z + eye.astype(z.dtype)


def _pick_tile_n(n):
    # Largest lane-aligned point tile (<= 2048) that exactly divides N; else fall back
    # to a single whole-N tile (last dim == full array dim is always legal).  Per-tile
    # live set is ~(5+16+32+64)*TILE_N*4 B, so 2048 is well under 1 MB even buffered.
    for tile in (2048, 1024, 512, 256, 128):
        if n % tile == 0:
            return tile
    return n


def pack_weights(w1, w2, w3, fw1, fw2, fw3):
    W = jnp.zeros(W_PACK_SHAPE, jnp.float32)
    W = W.at[W1_R0:W1_R1, 0:K].set(w1)
    W = W.at[W2_R0:W2_R1, 0:C1].set(w2)
    W = W.at[W3_R0:W3_R1, 0:C2].set(w3)
    W = W.at[F1_R0:F1_R1, 0:C3].set(fw1)
    W = W.at[F2_R0:F2_R1, 0:C4].set(fw2)
    W = W.at[F3_R0:F3_R1, 0:C5].set(fw3)
    return W


def pack_bn(g1, b1, g2, b2, g3, b3, g4, b4, g5, b5, fb3):
    P = jnp.zeros(P_PACK_SHAPE, jnp.float32)
    for col, v in ((G1_C, g1), (B1_C, b1), (G2_C, g2), (B2_C, b2),
                   (G3_C, g3), (B3_C, b3), (G4_C, g4), (B4_C, b4),
                   (G5_C, g5), (B5_C, b5), (FB3_C, fb3)):
        P = P.at[0:v.shape[0], col].set(v)
    return P


def tnet_forward(x, params):
    """x: (B, k, N) float32 -- native PyTorch Conv1d layout (no transpose needed)."""
    (w1, b1c, w2, b2c, w3, b3c, fw1, fb1, fw2, fb2, fw3, fb3,
     g1, be1, g2, be2, g3, be3, g4, be4, g5, be5) = params
    B, k, N = x.shape
    assert k == K
    del b1c, b2c, b3c, fb1, fb2   # pre-BN biases cancel under training-mode BN

    tile_n = _pick_tile_n(N)
    n_tiles = N // tile_n
    wpack = pack_weights(w1, w2, w3, fw1, fw2, fw3)
    ppack = pack_bn(g1, be1, g2, be2, g3, be3, g4, be4, g5, be5, fb3)

    kernel = functools.partial(tnet_kernel, inv_count=1.0 / (B * N))
    out_2d = pl.pallas_call(
        kernel,
        out_shape=jax.ShapeDtypeStruct((KK, B), jnp.float32),
        grid_spec=pltpu.PrefetchScalarGridSpec(
            num_scalar_prefetch=0,
            grid=(3, B, n_tiles),
            in_specs=[
                pl.BlockSpec((None, K, tile_n), lambda p, b, t: (b, 0, t)),
                pl.BlockSpec(W_PACK_SHAPE, lambda p, b, t: (0, 0)),   # resident
                pl.BlockSpec(P_PACK_SHAPE, lambda p, b, t: (0, 0)),   # resident
            ],
            out_specs=pl.BlockSpec((KK, B), lambda p, b, t: (0, 0)),
            scratch_shapes=[
                pltpu.VMEM((C1, 2), jnp.float32),        # BN1 sum / sumsq
                pltpu.VMEM((C2, 2), jnp.float32),        # BN2 sum / sumsq
                pltpu.VMEM((C3, 2), jnp.float32),        # BN3 sum / sumsq
                pltpu.VMEM((C3, SS_COLS), jnp.float32),  # hoisted scale/shift/sign
                pltpu.VMEM((C3, B), jnp.float32),        # per-batch signed max of y3
                pltpu.VMEM((C3, 1), jnp.float32),        # running max within a batch
            ],
        ),
        compiler_params=pltpu.CompilerParams(
            # Sequential phases + cross-step accumulators => all "arbitrary".
            dimension_semantics=("arbitrary", "arbitrary", "arbitrary"),
            # Safe on v5e/v6e (128 MiB) and v7x (64 MiB); actual use is < 1 MiB.
            vmem_limit_bytes=32 * 1024 * 1024,
        ),
    )(x.astype(jnp.float32), wpack, ppack)
    # tiny epilogue (layout plumbing only): (k*k, B) -> (B, k, k)
    return jnp.transpose(out_2d).reshape(B, K, K)


# ------------------------- reference & demo ---------------------------------

def init_params(key):
    it = iter(jax.random.split(key, 22))

    def nrm(shape, s):
        return s * jax.random.normal(next(it), shape, jnp.float32)

    w1, b1 = nrm((C1, K), 0.3), nrm((C1,), 0.1)
    w2, b2 = nrm((C2, C1), 0.2), nrm((C2,), 0.1)
    w3, b3 = nrm((C3, C2), 0.15), nrm((C3,), 0.1)
    fw1, fb1 = nrm((C4, C3), 0.15), nrm((C4,), 0.1)
    fw2, fb2 = nrm((C5, C4), 0.2), nrm((C5,), 0.1)
    fw3, fb3 = nrm((KK, C5), 0.2), nrm((KK,), 0.1)
    g1, be1 = 1.0 + nrm((C1,), 0.1), nrm((C1,), 0.05)
    g2, be2 = 1.0 + nrm((C2,), 0.1), nrm((C2,), 0.05)
    g3, be3 = 1.0 + nrm((C3,), 0.1), nrm((C3,), 0.05)
    g4, be4 = 1.0 + nrm((C4,), 0.1), nrm((C4,), 0.05)
    g5, be5 = 1.0 + nrm((C5,), 0.1), nrm((C5,), 0.05)
    return (w1, b1, w2, b2, w3, b3, fw1, fb1, fw2, fb2, fw3, fb3,
            g1, be1, g2, be2, g3, be3, g4, be4, g5, be5)


def ref_forward(x, params):
    """Pure-JAX mirror of the PyTorch TNet forward (training-mode BatchNorm)."""
    (w1, b1, w2, b2, w3, b3, fw1, fb1, fw2, fb2, fw3, fb3,
     g1, be1, g2, be2, g3, be3, g4, be4, g5, be5) = params
    B = x.shape[0]

    def conv1x1(h, w, b):                         # h: (B, Cin, N), w: (Cout, Cin)
        return jnp.einsum('oc,bcn->bon', w, h) + b[None, :, None]

    def bn3d(h, g, b):                            # biased batch stats over (B, N)
        m = jnp.mean(h, axis=(0, 2), keepdims=True)
        v = jnp.mean((h - m) ** 2, axis=(0, 2), keepdims=True)
        return (h - m) / jnp.sqrt(v + EPS) * g[None, :, None] + b[None, :, None]

    def bn2d(h, g, b):                            # biased batch stats over B
        m = jnp.mean(h, axis=0, keepdims=True)
        v = jnp.mean((h - m) ** 2, axis=0, keepdims=True)
        return (h - m) / jnp.sqrt(v + EPS) * g[None, :] + b[None, :]

    h = jax.nn.relu(bn3d(conv1x1(x, w1, b1), g1, be1))
    h = jax.nn.relu(bn3d(conv1x1(h, w2, b2), g2, be2))
    h = jax.nn.relu(bn3d(conv1x1(h, w3, b3), g3, be3))
    h = jnp.max(h, axis=2)                                   # (B, 64)
    h = jax.nn.relu(bn2d(h @ fw1.T + fb1, g4, be4))
    h = jax.nn.relu(bn2d(h @ fw2.T + fb2, g5, be5))
    h = h @ fw3.T + fb3                                      # (B, 25)
    return h.reshape(B, K, K) + jnp.eye(K, dtype=h.dtype)[None]


if __name__ == "__main__":
    B, N = 4, 512                       # small demo: TILE_N = 512, grid = (3, 4, 1)
    key = jax.random.PRNGKey(0)
    kx, kp = jax.random.split(key)
    x = jax.random.normal(kx, (B, K, N), jnp.float32)   # PyTorch layout (B, k, N)
    params = init_params(kp)

    out = jax.block_until_ready(tnet_forward(x, params))
    ref = ref_forward(x, params)

    assert out.shape == (B, K, K), out.shape
    err = float(jnp.max(jnp.abs(out - ref)))
    assert jnp.allclose(out, ref, atol=5e-4, rtol=5e-4), f"max abs err {err}"
    print("KERNEL_OK")
</pallas_src>

<mosaic_0001>
module attributes {stable_mosaic.version = 11 : i64} {
  func.func @tnet_kernel(%arg0: i32, %arg1: i32, %arg2: i32, %arg3: memref<1x5x512xf32, #tpu.memory_space<vmem>>, %arg4: memref<192x64xf32, #tpu.memory_space<vmem>>, %arg5: memref<64x12xf32, #tpu.memory_space<vmem>>, %arg6: memref<25x4xf32, #tpu.memory_space<vmem>>, %arg7: memref<16x2xf32, #tpu.memory_space<vmem>>, %arg8: memref<32x2xf32, #tpu.memory_space<vmem>>, %arg9: memref<64x2xf32, #tpu.memory_space<vmem>>, %arg10: memref<64x8xf32, #tpu.memory_space<vmem>>, %arg11: memref<64x4xf32, #tpu.memory_space<vmem>>, %arg12: memref<64x1xf32, #tpu.memory_space<vmem>>) attributes {dimension_semantics = [#tpu.dimension_semantics<arbitrary>, #tpu.dimension_semantics<arbitrary>, #tpu.dimension_semantics<arbitrary>], iteration_bounds = array<i64: 3, 4, 1>, scalar_prefetch = 0 : i64, scratch_operands = 6 : i64, tpu.core_type = #tpu.core_type<tc>, window_params = [{transform_indices = @transform_0, window_bounds = array<i64: 1, 5, 512>}, {pipeline_mode = #tpu.pipeline_mode<synchronous>, transform_indices = @transform_1, window_bounds = array<i64: 192, 64>}, {pipeline_mode = #tpu.pipeline_mode<synchronous>, transform_indices = @transform_2, window_bounds = array<i64: 64, 12>}, {pipeline_mode = #tpu.pipeline_mode<synchronous>, transform_indices = @transform_3, window_bounds = array<i64: 25, 4>}]} {
    %c0_i32 = arith.constant 0 : i32
    %0 = arith.cmpi eq, %arg1, %c0_i32 : i32
    %c0_i32_0 = arith.constant 0 : i32
    %1 = arith.cmpi eq, %arg2, %c0_i32_0 : i32
    %2 = arith.andi %0, %1 : i1
    %c3_i32 = arith.constant 3 : i32
    %3 = arith.cmpi eq, %arg1, %c3_i32 : i32
    %c0_i32_1 = arith.constant 0 : i32
    %4 = arith.cmpi eq, %arg2, %c0_i32_1 : i32
    %5 = arith.andi %3, %4 : i1
    %c0_i32_2 = arith.constant 0 : i32
    %6 = arith.cmpi eq, %arg0, %c0_i32_2 : i32
    %7 = arith.andi %6, %2 : i1
    %8 = arith.extui %7 : i1 to i32
    %c0_i32_3 = arith.constant 0 : i32
    %9 = arith.cmpi ne, %8, %c0_i32_3 : i32
    scf.if %9 {
      %cst_17 = arith.constant 0.000000e+00 : f32
      %33 = vector.broadcast %cst_17 : f32 to vector<16x2xf32>
      %c0_18 = arith.constant 0 : index
      %c0_19 = arith.constant 0 : index
      %34 = vector.load %arg7[%c0_18, %c0_19] : memref<16x2xf32, #tpu.memory_space<vmem>>, vector<16x2xf32>
      tpu.vector_store %arg7[%c0_18, %c0_19], %33 {strides = array<i32>} : memref<16x2xf32, #tpu.memory_space<vmem>>, vector<16x2xf32>,
      %cst_20 = arith.constant 0.000000e+00 : f32
      %35 = vector.broadcast %cst_20 : f32 to vector<32x2xf32>
      %c0_21 = arith.constant 0 : index
      %c0_22 = arith.constant 0 : index
      %36 = vector.load %arg8[%c0_21, %c0_22] : memref<32x2xf32, #tpu.memory_space<vmem>>, vector<32x2xf32>
      tpu.vector_store %arg8[%c0_21, %c0_22], %35 {strides = array<i32>} : memref<32x2xf32, #tpu.memory_space<vmem>>, vector<32x2xf32>,
      %cst_23 = arith.constant 0.000000e+00 : f32
      %37 = vector.broadcast %cst_23 : f32 to vector<64x2xf32>
      %c0_24 = arith.constant 0 : index
      %c0_25 = arith.constant 0 : index
      %38 = vector.load %arg9[%c0_24, %c0_25] : memref<64x2xf32, #tpu.memory_space<vmem>>, vector<64x2xf32>
      tpu.vector_store %arg9[%c0_24, %c0_25], %37 {strides = array<i32>} : memref<64x2xf32, #tpu.memory_space<vmem>>, vector<64x2xf32>,
      %cst_26 = arith.constant 0.000000e+00 : f32
      %39 = vector.broadcast %cst_26 : f32 to vector<64x4xf32>
      %c0_27 = arith.constant 0 : index
      %c0_28 = arith.constant 0 : index
      %40 = vector.load %arg11[%c0_27, %c0_28] : memref<64x4xf32, #tpu.memory_space<vmem>>, vector<64x4xf32>
      tpu.vector_store %arg11[%c0_27, %c0_28], %39 {strides = array<i32>} : memref<64x4xf32, #tpu.memory_space<vmem>>, vector<64x4xf32>,
    } else {
    }
    %c1_i32 = arith.constant 1 : i32
    %10 = arith.cmpi eq, %arg0, %c1_i32 : i32
    %11 = arith.andi %10, %2 : i1
    %12 = arith.extui %11 : i1 to i32
    %c0_i32_4 = arith.constant 0 : i32
    %13 = arith.cmpi ne, %12, %c0_i32_4 : i32
    scf.if %13 {
      %c0_17 = arith.constant 0 : index
      %c0_18 = arith.constant 0 : index
      %33 = vector.load %arg5[%c0_17, %c0_18] : memref<64x12xf32, #tpu.memory_space<vmem>>, vector<16x1xf32>
      %c0_19 = arith.constant 0 : index
      %c1 = arith.constant 1 : index
      %34 = vector.load %arg5[%c0_19, %c1] : memref<64x12xf32, #tpu.memory_space<vmem>>, vector<16x1xf32>
      %c0_20 = arith.constant 0 : index
      %c0_21 = arith.constant 0 : index
      %35 = vector.load %arg7[%c0_20, %c0_21] : memref<16x2xf32, #tpu.memory_space<vmem>>, vector<16x1xf32>
      %cst_22 = arith.constant 4.8828125E-4 : f32
      %36 = vector.broadcast %cst_22 : f32 to vector<16x1xf32>
      %37 = arith.mulf %35, %36 : vector<16x1xf32>
      %c0_23 = arith.constant 0 : index
      %c1_24 = arith.constant 1 : index
      %38 = vector.load %arg7[%c0_23, %c1_24] : memref<16x2xf32, #tpu.memory_space<vmem>>, vector<16x1xf32>
      %cst_25 = arith.constant 4.8828125E-4 : f32
      %39 = vector.broadcast %cst_25 : f32 to vector<16x1xf32>
      %40 = arith.mulf %38, %39 : vector<16x1xf32>
      %41 = arith.mulf %37, %37 : vector<16x1xf32>
      %42 = arith.subf %40, %41 : vector<16x1xf32>
      %cst_26 = arith.constant 0.000000e+00 : f32
      %43 = vector.broadcast %cst_26 : f32 to vector<16x1xf32>
      %44 = arith.maximumf %42, %43 : vector<16x1xf32>
      %cst_27 = arith.constant 9.99999974E-6 : f32
      %45 = vector.broadcast %cst_27 : f32 to vector<16x1xf32>
      %46 = arith.addf %44, %45 : vector<16x1xf32>
      %47 = math.rsqrt %46 : vector<16x1xf32>
      %48 = arith.mulf %33, %47 : vector<16x1xf32>
      %49 = arith.mulf %37, %48 : vector<16x1xf32>
      %50 = arith.subf %34, %49 : vector<16x1xf32>
      %c0_28 = arith.constant 0 : index
      %c0_29 = arith.constant 0 : index
      %51 = vector.load %arg10[%c0_28, %c0_29] : memref<64x8xf32, #tpu.memory_space<vmem>>, vector<16x1xf32>
      tpu.vector_store %arg10[%c0_28, %c0_29], %48 {strides = array<i32>} : memref<64x8xf32, #tpu.memory_space<vmem>>, vector<16x1xf32>,
      %c0_30 = arith.constant 0 : index
      %c1_31 = arith.constant 1 : index
      %52 = vector.load %arg10[%c0_30, %c1_31] : memref<64x8xf32, #tpu.memory_space<vmem>>, vector<16x1xf32>
      tpu.vector_store %arg10[%c0_30, %c1_31], %50 {strides = array<i32>} : memref<64x8xf32, #tpu.memory_space<vmem>>, vector<16x1xf32>,
    } else {
    }
    %c2_i32 = arith.constant 2 : i32
    %14 = arith.cmpi eq, %arg0, %c2_i32 : i32
    %15 = arith.andi %14, %2 : i1
    %16 = arith.extui %15 : i1 to i32
    %c0_i32_5 = arith.constant 0 : i32
    %17 = arith.cmpi ne, %16, %c0_i32_5 : i32
    scf.if %17 {
      %c0_17 = arith.constant 0 : index
      %c2 = arith.constant 2 : index
      %33 = vector.load %arg5[%c0_17, %c2] : memref<64x12xf32, #tpu.memory_space<vmem>>, vector<32x1xf32>
      %c0_18 = arith.constant 0 : index
      %c3 = arith.constant 3 : index
      %34 = vector.load %arg5[%c0_18, %c3] : memref<64x12xf32, #tpu.memory_space<vmem>>, vector<32x1xf32>
      %c0_19 = arith.constant 0 : index
      %c0_20 = arith.constant 0 : index
      %35 = vector.load %arg8[%c0_19, %c0_20] : memref<32x2xf32, #tpu.memory_space<vmem>>, vector<32x1xf32>
      %cst_21 = arith.constant 4.8828125E-4 : f32
      %36 = vector.broadcast %cst_21 : f32 to vector<32x1xf32>
      %37 = arith.mulf %35, %36 : vector<32x1xf32>
      %c0_22 = arith.constant 0 : index
      %c1 = arith.constant 1 : index
      %38 = vector.load %arg8[%c0_22, %c1] : memref<32x2xf32, #tpu.memory_space<vmem>>, vector<32x1xf32>
      %cst_23 = arith.constant 4.8828125E-4 : f32
      %39 = vector.broadcast %cst_23 : f32 to vector<32x1xf32>
      %40 = arith.mulf %38, %39 : vector<32x1xf32>
      %41 = arith.mulf %37, %37 : vector<32x1xf32>
      %42 = arith.subf %40, %41 : vector<32x1xf32>
      %cst_24 = arith.constant 0.000000e+00 : f32
      %43 = vector.broadcast %cst_24 : f32 to vector<32x1xf32>
      %44 = arith.maximumf %42, %43 : vector<32x1xf32>
      %cst_25 = arith.constant 9.99999974E-6 : f32
      %45 = vector.broadcast %cst_25 : f32 to vector<32x1xf32>
      %46 = arith.addf %44, %45 : vector<32x1xf32>
      %47 = math.rsqrt %46 : vector<32x1xf32>
      %48 = arith.mulf %33, %47 : vector<32x1xf32>
      %49 = arith.mulf %37, %48 : vector<32x1xf32>
      %50 = arith.subf %34, %49 : vector<32x1xf32>
      %c0_26 = arith.constant 0 : index
      %c2_27 = arith.constant 2 : index
      %51 = vector.load %arg10[%c0_26, %c2_27] : memref<64x8xf32, #tpu.memory_space<vmem>>, vector<32x1xf32>
      tpu.vector_store %arg10[%c0_26, %c2_27], %48 {strides = array<i32>} : memref<64x8xf32, #tpu.memory_space<vmem>>, vector<32x1xf32>,
      %c0_28 = arith.constant 0 : index
      %c3_29 = arith.constant 3 : index
      %52 = vector.load %arg10[%c0_28, %c3_29] : memref<64x8xf32, #tpu.memory_space<vmem>>, vector<32x1xf32>
      tpu.vector_store %arg10[%c0_28, %c3_29], %50 {strides = array<i32>} : memref<64x8xf32, #tpu.memory_space<vmem>>, vector<32x1xf32>,
      %c0_30 = arith.constant 0 : index
      %c4 = arith.constant 4 : index
      %53 = vector.load %arg5[%c0_30, %c4] : memref<64x12xf32, #tpu.memory_space<vmem>>, vector<64x1xf32>
      %cst_31 = arith.constant 0.000000e+00 : f32
      %54 = vector.broadcast %cst_31 : f32 to vector<64x1xf32>
      %55 = arith.cmpf oge, %53, %54 : vector<64x1xf32>
      %cst_32 = arith.constant 1.000000e+00 : f32
      %cst_33 = arith.constant -1.000000e+00 : f32
      %56 = vector.broadcast %cst_32 : f32 to vector<64x1xf32>
      %57 = vector.broadcast %cst_33 : f32 to vector<64x1xf32>
      %58 = arith.select %55, %56, %57 : vector<64x1xi1>, vector<64x1xf32>
      %c0_34 = arith.constant 0 : index
      %c4_35 = arith.constant 4 : index
      %59 = vector.load %arg10[%c0_34, %c4_35] : memref<64x8xf32, #tpu.memory_space<vmem>>, vector<64x1xf32>
      tpu.vector_store %arg10[%c0_34, %c4_35], %58 {strides = array<i32>} : memref<64x8xf32, #tpu.memory_space<vmem>>, vector<64x1xf32>,
    } else {
    }
    %c0 = arith.constant 0 : index
    %c0_6 = arith.constant 0 : index
    %c0_7 = arith.constant 0 : index
    %18 = vector.load %arg3[%c0, %c0_6, %c0_7] : memref<1x5x512xf32, #tpu.memory_space<vmem>>, vector<1x5x512xf32>
    %19 = vector.shape_cast %18 : vector<1x5x512xf32> to vector<5x512xf32>
    %cst = arith.constant 1.000000e+00 : f32
    %20 = vector.broadcast %cst : f32 to vector<512x1xf32>
    %c0_8 = arith.constant 0 : index
    %c0_9 = arith.constant 0 : index
    %21 = vector.load %arg4[%c0_8, %c0_9] : memref<192x64xf32, #tpu.memory_space<vmem>>, vector<16x5xf32>
    %cst_10 = arith.constant dense<0.000000e+00> : vector<16x512xf32>
    %22 = tpu.matmul %21, %19, %cst_10 {dimension_numbers = #tpu.dot_dimension_numbers<[1], [0], [0], [1], [0, 0, 1, 1], [], []>} : vector<16x5xf32>, vector<5x512xf32>, vector<16x512xf32> -> vector<16x512xf32>
    %c0_i32_11 = arith.constant 0 : i32
    %23 = arith.cmpi eq, %arg0, %c0_i32_11 : i32
    %24 = arith.extui %23 : i1 to i32
    %c0_i32_12 = arith.constant 0 : i32
    %25 = arith.cmpi ne, %24, %c0_i32_12 : i32
    scf.if %25 {
      %c0_17 = arith.constant 0 : index
      %c0_18 = arith.constant 0 : index
      %33 = vector.load %arg7[%c0_17, %c0_18] : memref<16x2xf32, #tpu.memory_space<vmem>>, vector<16x1xf32>
      %cst_19 = arith.constant dense<0.000000e+00> : vector<16x1xf32>
      %34 = tpu.matmul %22, %20, %cst_19 {dimension_numbers = #tpu.dot_dimension_numbers<[1], [0], [0], [1], [0, 0, 1, 1], [], []>} : vector<16x512xf32>, vector<512x1xf32>, vector<16x1xf32> -> vector<16x1xf32>
      %35 = arith.addf %33, %34 : vector<16x1xf32>
      %c0_20 = arith.constant 0 : index
      %c0_21 = arith.constant 0 : index
      %36 = vector.load %arg7[%c0_20, %c0_21] : memref<16x2xf32, #tpu.memory_space<vmem>>, vector<16x1xf32>
      tpu.vector_store %arg7[%c0_20, %c0_21], %35 {strides = array<i32>} : memref<16x2xf32, #tpu.memory_space<vmem>>, vector<16x1xf32>,
      %c0_22 = arith.constant 0 : index
      %c1 = arith.constant 1 : index
      %37 = vector.load %arg7[%c0_22, %c1] : memref<16x2xf32, #tpu.memory_space<vmem>>, vector<16x1xf32>
      %38 = arith.mulf %22, %22 : vector<16x512xf32>
      %cst_23 = arith.constant dense<0.000000e+00> : vector<16x1xf32>
      %39 = tpu.matmul %38, %20, %cst_23 {dimension_numbers = #tpu.dot_dimension_numbers<[1], [0], [0], [1], [0, 0, 1, 1], [], []>} : vector<16x512xf32>, vector<512x1xf32>, vector<16x1xf32> -> vector<16x1xf32>
      %40 = arith.addf %37, %39 : vector<16x1xf32>
      %c0_24 = arith.constant 0 : index
      %c1_25 = arith.constant 1 : index
      %41 = vector.load %arg7[%c0_24, %c1_25] : memref<16x2xf32, #tpu.memory_space<vmem>>, vector<16x1xf32>
      tpu.vector_store %arg7[%c0_24, %c1_25], %40 {strides = array<i32>} : memref<16x2xf32, #tpu.memory_space<vmem>>, vector<16x1xf32>,
    } else {
    }
    %c1_i32_13 = arith.constant 1 : i32
    %26 = arith.cmpi sge, %arg0, %c1_i32_13 : i32
    %27 = arith.extui %26 : i1 to i32
    %c0_i32_14 = arith.constant 0 : i32
    %28 = arith.cmpi ne, %27, %c0_i32_14 : i32
    scf.if %28 {
      %c0_17 = arith.constant 0 : index
      %c0_18 = arith.constant 0 : index
      %33 = vector.load %arg10[%c0_17, %c0_18] : memref<64x8xf32, #tpu.memory_space<vmem>>, vector<16x1xf32>
      %34 = vector.broadcast %33 : vector<16x1xf32> to vector<16x512xf32>
      %35 = arith.mulf %22, %34 : vector<16x512xf32>
      %c0_19 = arith.constant 0 : index
      %c1 = arith.constant 1 : index
      %36 = vector.load %arg10[%c0_19, %c1] : memref<64x8xf32, #tpu.memory_space<vmem>>, vector<16x1xf32>
      %37 = vector.broadcast %36 : vector<16x1xf32> to vector<16x512xf32>
      %38 = arith.addf %35, %37 : vector<16x512xf32>
      %cst_20 = arith.constant 0.000000e+00 : f32
      %39 = vector.broadcast %cst_20 : f32 to vector<16x512xf32>
      %40 = arith.maximumf %38, %39 : vector<16x512xf32>
      %c16 = arith.constant 16 : index
      %c0_21 = arith.constant 0 : index
      %41 = vector.load %arg4[%c16, %c0_21] : memref<192x64xf32, #tpu.memory_space<vmem>>, vector<32x16xf32>
      %cst_22 = arith.constant dense<0.000000e+00> : vector<32x512xf32>
      %42 = tpu.matmul %41, %40, %cst_22 {dimension_numbers = #tpu.dot_dimension_numbers<[1], [0], [0], [1], [0, 0, 1, 1], [], []>} : vector<32x16xf32>, vector<16x512xf32>, vector<32x512xf32> -> vector<32x512xf32>
      %c1_i32_23 = arith.constant 1 : i32
      %43 = arith.cmpi eq, %arg0, %c1_i32_23 : i32
      %44 = arith.extui %43 : i1 to i32
      %c0_i32_24 = arith.constant 0 : i32
      %45 = arith.cmpi ne, %44, %c0_i32_24 : i32
      scf.if %45 {
        %c0_27 = arith.constant 0 : index
        %c0_28 = arith.constant 0 : index
        %49 = vector.load %arg8[%c0_27, %c0_28] : memref<32x2xf32, #tpu.memory_space<vmem>>, vector<32x1xf32>
        %cst_29 = arith.constant dense<0.000000e+00> : vector<32x1xf32>
        %50 = tpu.matmul %42, %20, %cst_29 {dimension_numbers = #tpu.dot_dimension_numbers<[1], [0], [0], [1], [0, 0, 1, 1], [], []>} : vector<32x512xf32>, vector<512x1xf32>, vector<32x1xf32> -> vector<32x1xf32>
        %51 = arith.addf %49, %50 : vector<32x1xf32>
        %c0_30 = arith.constant 0 : index
        %c0_31 = arith.constant 0 : index
        %52 = vector.load %arg8[%c0_30, %c0_31] : memref<32x2xf32, #tpu.memory_space<vmem>>, vector<32x1xf32>
        tpu.vector_store %arg8[%c0_30, %c0_31], %51 {strides = array<i32>} : memref<32x2xf32, #tpu.memory_space<vmem>>, vector<32x1xf32>,
        %c0_32 = arith.constant 0 : index
        %c1_33 = arith.constant 1 : index
        %53 = vector.load %arg8[%c0_32, %c1_33] : memref<32x2xf32, #tpu.memory_space<vmem>>, vector<32x1xf32>
        %54 = arith.mulf %42, %42 : vector<32x512xf32>
        %cst_34 = arith.constant dense<0.000000e+00> : vector<32x1xf32>
        %55 = tpu.matmul %54, %20, %cst_34 {dimension_numbers = #tpu.dot_dimension_numbers<[1], [0], [0], [1], [0, 0, 1, 1], [], []>} : vector<32x512xf32>, vector<512x1xf32>, vector<32x1xf32> -> vector<32x1xf32>
        %56 = arith.addf %53, %55 : vector<32x1xf32>
        %c0_35 = arith.constant 0 : index
        %c1_36 = arith.constant 1 : index
        %57 = vector.load %arg8[%c0_35, %c1_36] : memref<32x2xf32, #tpu.memory_space<vmem>>, vector<32x1xf32>
        tpu.vector_store %arg8[%c0_35, %c1_36], %56 {strides = array<i32>} : memref<32x2xf32, #tpu.memory_space<vmem>>, vector<32x1xf32>,
      } else {
      }
      %c2_i32_25 = arith.constant 2 : i32
      %46 = arith.cmpi eq, %arg0, %c2_i32_25 : i32
      %47 = arith.extui %46 : i1 to i32
      %c0_i32_26 = arith.constant 0 : i32
      %48 = arith.cmpi ne, %47, %c0_i32_26 : i32
      scf.if %48 {
        %c0_27 = arith.constant 0 : index
        %c2 = arith.constant 2 : index
        %49 = vector.load %arg10[%c0_27, %c2] : memref<64x8xf32, #tpu.memory_space<vmem>>, vector<32x1xf32>
        %50 = vector.broadcast %49 : vector<32x1xf32> to vector<32x512xf32>
        %51 = arith.mulf %42, %50 : vector<32x512xf32>
        %c0_28 = arith.constant 0 : index
        %c3 = arith.constant 3 : index
        %52 = vector.load %arg10[%c0_28, %c3] : memref<64x8xf32, #tpu.memory_space<vmem>>, vector<32x1xf32>
        %53 = vector.broadcast %52 : vector<32x1xf32> to vector<32x512xf32>
        %54 = arith.addf %51, %53 : vector<32x512xf32>
        %cst_29 = arith.constant 0.000000e+00 : f32
        %55 = vector.broadcast %cst_29 : f32 to vector<32x512xf32>
        %56 = arith.maximumf %54, %55 : vector<32x512xf32>
        %c48 = arith.constant 48 : index
        %c0_30 = arith.constant 0 : index
        %57 = vector.load %arg4[%c48, %c0_30] : memref<192x64xf32, #tpu.memory_space<vmem>>, vector<64x32xf32>
        %cst_31 = arith.constant dense<0.000000e+00> : vector<64x512xf32>
        %58 = tpu.matmul %57, %56, %cst_31 {dimension_numbers = #tpu.dot_dimension_numbers<[1], [0], [0], [1], [0, 0, 1, 1], [], []>} : vector<64x32xf32>, vector<32x512xf32>, vector<64x512xf32> -> vector<64x512xf32>
        %c0_32 = arith.constant 0 : index
        %c0_33 = arith.constant 0 : index
        %59 = vector.load %arg9[%c0_32, %c0_33] : memref<64x2xf32, #tpu.memory_space<vmem>>, vector<64x1xf32>
        %cst_34 = arith.constant dense<0.000000e+00> : vector<64x1xf32>
        %60 = tpu.matmul %58, %20, %cst_34 {dimension_numbers = #tpu.dot_dimension_numbers<[1], [0], [0], [1], [0, 0, 1, 1], [], []>} : vector<64x512xf32>, vector<512x1xf32>, vector<64x1xf32> -> vector<64x1xf32>
        %61 = arith.addf %59, %60 : vector<64x1xf32>
        %c0_35 = arith.constant 0 : index
        %c0_36 = arith.constant 0 : index
        %62 = vector.load %arg9[%c0_35, %c0_36] : memref<64x2xf32, #tpu.memory_space<vmem>>, vector<64x1xf32>
        tpu.vector_store %arg9[%c0_35, %c0_36], %61 {strides = array<i32>} : memref<64x2xf32, #tpu.memory_space<vmem>>, vector<64x1xf32>,
        %c0_37 = arith.constant 0 : index
        %c1_38 = arith.constant 1 : index
        %63 = vector.load %arg9[%c0_37, %c1_38] : memref<64x2xf32, #tpu.memory_space<vmem>>, vector<64x1xf32>
        %64 = arith.mulf %58, %58 : vector<64x512xf32>
        %cst_39 = arith.constant dense<0.000000e+00> : vector<64x1xf32>
        %65 = tpu.matmul %64, %20, %cst_39 {dimension_numbers = #tpu.dot_dimension_numbers<[1], [0], [0], [1], [0, 0, 1, 1], [], []>} : vector<64x512xf32>, vector<512x1xf32>, vector<64x1xf32> -> vector<64x1xf32>
        %66 = arith.addf %63, %65 : vector<64x1xf32>
        %c0_40 = arith.constant 0 : index
        %c1_41 = arith.constant 1 : index
        %67 = vector.load %arg9[%c0_40, %c1_41] : memref<64x2xf32, #tpu.memory_space<vmem>>, vector<64x1xf32>
        tpu.vector_store %arg9[%c0_40, %c1_41], %66 {strides = array<i32>} : memref<64x2xf32, #tpu.memory_space<vmem>>, vector<64x1xf32>,
        %c0_42 = arith.constant 0 : index
        %c4 = arith.constant 4 : index
        %68 = vector.load %arg10[%c0_42, %c4] : memref<64x8xf32, #tpu.memory_space<vmem>>, vector<64x1xf32>
        %69 = vector.broadcast %68 : vector<64x1xf32> to vector<64x512xf32>
        %70 = arith.mulf %58, %69 : vector<64x512xf32>
        %cst_43 = arith.constant dense<0xFF800000> : vector<64xf32>
        %71 = vector.multi_reduction <maximumf>, %70, %cst_43 [1] : vector<64x512xf32> to vector<64xf32>
        %72 = vector.shape_cast %71 : vector<64xf32> to vector<64x1xf32>
        %c0_i32_44 = arith.constant 0 : i32
        %73 = arith.cmpi eq, %arg2, %c0_i32_44 : i32
        %74 = arith.extui %73 : i1 to i32
        %c0_i32_45 = arith.constant 0 : i32
        %75 = arith.cmpi ne, %74, %c0_i32_45 : i32
        scf.if %75 {
          %c0_50 = arith.constant 0 : index
          %c0_51 = arith.constant 0 : index
          %82 = vector.load %arg12[%c0_50, %c0_51] : memref<64x1xf32, #tpu.memory_space<vmem>>, vector<64x1xf32>
          tpu.vector_store %arg12[%c0_50, %c0_51], %72 {strides = array<i32>} : memref<64x1xf32, #tpu.memory_space<vmem>>, vector<64x1xf32>,
        } else {
        }
        %c0_i32_46 = arith.constant 0 : i32
        %76 = arith.cmpi sgt, %arg2, %c0_i32_46 : i32
        %77 = arith.extui %76 : i1 to i32
        %c0_i32_47 = arith.constant 0 : i32
        %78 = arith.cmpi ne, %77, %c0_i32_47 : i32
        scf.if %78 {
          %c0_50 = arith.constant 0 : index
          %c0_51 = arith.constant 0 : index
          %82 = vector.load %arg12[%c0_50, %c0_51] : memref<64x1xf32, #tpu.memory_space<vmem>>, vector<64x1xf32>
          %83 = arith.maximumf %82, %72 : vector<64x1xf32>
          %c0_52 = arith.constant 0 : index
          %c0_53 = arith.constant 0 : index
          %84 = vector.load %arg12[%c0_52, %c0_53] : memref<64x1xf32, #tpu.memory_space<vmem>>, vector<64x1xf32>
          tpu.vector_store %arg12[%c0_52, %c0_53], %83 {strides = array<i32>} : memref<64x1xf32, #tpu.memory_space<vmem>>, vector<64x1xf32>,
        } else {
        }
        %c0_i32_48 = arith.constant 0 : i32
        %79 = arith.cmpi eq, %arg2, %c0_i32_48 : i32
        %80 = arith.extui %79 : i1 to i32
        %c0_i32_49 = arith.constant 0 : i32
        %81 = arith.cmpi ne, %80, %c0_i32_49 : i32
        scf.if %81 {
          %82 = tpu.iota {dimensions = array<i32: 1>} : vector<64x4xi32>
          %83 = vector.broadcast %arg1 : i32 to vector<64x4xi32>
          %84 = arith.cmpi eq, %82, %83 : vector<64x4xi32>
          %c0_50 = arith.constant 0 : index
          %c0_51 = arith.constant 0 : index
          %85 = vector.load %arg12[%c0_50, %c0_51] : memref<64x1xf32, #tpu.memory_space<vmem>>, vector<64x1xf32>
          %c0_52 = arith.constant 0 : index
          %c0_53 = arith.constant 0 : index
          %86 = vector.load %arg11[%c0_52, %c0_53] : memref<64x4xf32, #tpu.memory_space<vmem>>, vector<64x4xf32>
          %87 = vector.shape_cast %85 : vector<64x1xf32> to vector<64x1xf32>
          %88 = vector.broadcast %87 : vector<64x1xf32> to vector<64x4xf32>
          %89 = arith.select %84, %88, %86 : vector<64x4xi1>, vector<64x4xf32>
          %c0_54 = arith.constant 0 : index
          %c0_55 = arith.constant 0 : index
          %90 = vector.load %arg11[%c0_54, %c0_55] : memref<64x4xf32, #tpu.memory_space<vmem>>, vector<64x4xf32>
          tpu.vector_store %arg11[%c0_54, %c0_55], %89 {strides = array<i32>} : memref<64x4xf32, #tpu.memory_space<vmem>>, vector<64x4xf32>,
        } else {
        }
      } else {
      }
    } else {
    }
    %c2_i32_15 = arith.constant 2 : i32
    %29 = arith.cmpi eq, %arg0, %c2_i32_15 : i32
    %30 = arith.andi %29, %5 : i1
    %31 = arith.extui %30 : i1 to i32
    %c0_i32_16 = arith.constant 0 : i32
    %32 = arith.cmpi ne, %31, %c0_i32_16 : i32
    scf.if %32 {
      %c0_17 = arith.constant 0 : index
      %c4 = arith.constant 4 : index
      %33 = vector.load %arg5[%c0_17, %c4] : memref<64x12xf32, #tpu.memory_space<vmem>>, vector<64x1xf32>
      %c0_18 = arith.constant 0 : index
      %c5 = arith.constant 5 : index
      %34 = vector.load %arg5[%c0_18, %c5] : memref<64x12xf32, #tpu.memory_space<vmem>>, vector<64x1xf32>
      %c0_19 = arith.constant 0 : index
      %c0_20 = arith.constant 0 : index
      %35 = vector.load %arg9[%c0_19, %c0_20] : memref<64x2xf32, #tpu.memory_space<vmem>>, vector<64x1xf32>
      %cst_21 = arith.constant 4.8828125E-4 : f32
      %36 = vector.broadcast %cst_21 : f32 to vector<64x1xf32>
      %37 = arith.mulf %35, %36 : vector<64x1xf32>
      %c0_22 = arith.constant 0 : index
      %c1 = arith.constant 1 : index
      %38 = vector.load %arg9[%c0_22, %c1] : memref<64x2xf32, #tpu.memory_space<vmem>>, vector<64x1xf32>
      %cst_23 = arith.constant 4.8828125E-4 : f32
      %39 = vector.broadcast %cst_23 : f32 to vector<64x1xf32>
      %40 = arith.mulf %38, %39 : vector<64x1xf32>
      %41 = arith.mulf %37, %37 : vector<64x1xf32>
      %42 = arith.subf %40, %41 : vector<64x1xf32>
      %cst_24 = arith.constant 0.000000e+00 : f32
      %43 = vector.broadcast %cst_24 : f32 to vector<64x1xf32>
      %44 = arith.maximumf %42, %43 : vector<64x1xf32>
      %cst_25 = arith.constant 9.99999974E-6 : f32
      %45 = vector.broadcast %cst_25 : f32 to vector<64x1xf32>
      %46 = arith.addf %44, %45 : vector<64x1xf32>
      %47 = math.rsqrt %46 : vector<64x1xf32>
      %48 = arith.mulf %33, %47 : vector<64x1xf32>
      %49 = arith.mulf %37, %48 : vector<64x1xf32>
      %50 = arith.subf %34, %49 : vector<64x1xf32>
      %51 = math.absf %48 : vector<64x1xf32>
      %c0_26 = arith.constant 0 : index
      %c0_27 = arith.constant 0 : index
      %52 = vector.load %arg11[%c0_26, %c0_27] : memref<64x4xf32, #tpu.memory_space<vmem>>, vector<64x4xf32>
      %53 = vector.broadcast %51 : vector<64x1xf32> to vector<64x4xf32>
      %54 = arith.mulf %53, %52 : vector<64x4xf32>
      %55 = vector.broadcast %50 : vector<64x1xf32> to vector<64x4xf32>
      %56 = arith.addf %54, %55 : vector<64x4xf32>
      %cst_28 = arith.constant 0.000000e+00 : f32
      %57 = vector.broadcast %cst_28 : f32 to vector<64x4xf32>
      %58 = arith.maximumf %56, %57 : vector<64x4xf32>
      %c112 = arith.constant 112 : index
      %c0_29 = arith.constant 0 : index
      %59 = vector.load %arg4[%c112, %c0_29] : memref<192x64xf32, #tpu.memory_space<vmem>>, vector<32x64xf32>
      %cst_30 = arith.constant dense<0.000000e+00> : vector<32x4xf32>
      %60 = tpu.matmul %59, %58, %cst_30 {dimension_numbers = #tpu.dot_dimension_numbers<[1], [0], [0], [1], [0, 0, 1, 1], [], []>} : vector<32x64xf32>, vector<64x4xf32>, vector<32x4xf32> -> vector<32x4xf32>
      %c0_31 = arith.constant 0 : index
      %c6 = arith.constant 6 : index
      %61 = vector.load %arg5[%c0_31, %c6] : memref<64x12xf32, #tpu.memory_space<vmem>>, vector<32x1xf32>
      %c0_32 = arith.constant 0 : index
      %c7 = arith.constant 7 : index
      %62 = vector.load %arg5[%c0_32, %c7] : memref<64x12xf32, #tpu.memory_space<vmem>>, vector<32x1xf32>
      %cst_33 = arith.constant dense<0.000000e+00> : vector<32xf32>
      %63 = vector.multi_reduction <add>, %60, %cst_33 [1] : vector<32x4xf32> to vector<32xf32>
      %64 = vector.shape_cast %63 : vector<32xf32> to vector<32x1xf32>
      %cst_34 = arith.constant 4.000000e+00 : f32
      %65 = vector.broadcast %cst_34 : f32 to vector<32x1xf32>
      %66 = arith.divf %64, %65 : vector<32x1xf32>
      %67 = vector.broadcast %66 : vector<32x1xf32> to vector<32x4xf32>
      %68 = arith.subf %60, %67 : vector<32x4xf32>
      %69 = arith.mulf %68, %68 : vector<32x4xf32>
      %cst_35 = arith.constant dense<0.000000e+00> : vector<32xf32>
      %70 = vector.multi_reduction <add>, %69, %cst_35 [1] : vector<32x4xf32> to vector<32xf32>
      %71 = vector.shape_cast %70 : vector<32xf32> to vector<32x1xf32>
      %cst_36 = arith.constant 4.000000e+00 : f32
      %72 = vector.broadcast %cst_36 : f32 to vector<32x1xf32>
      %73 = arith.divf %71, %72 : vector<32x1xf32>
      %74 = vector.broadcast %66 : vector<32x1xf32> to vector<32x4xf32>
      %75 = arith.subf %60, %74 : vector<32x4xf32>
      %cst_37 = arith.constant 9.99999974E-6 : f32
      %76 = vector.broadcast %cst_37 : f32 to vector<32x1xf32>
      %77 = arith.addf %73, %76 : vector<32x1xf32>
      %78 = math.rsqrt %77 : vector<32x1xf32>
      %79 = vector.broadcast %78 : vector<32x1xf32> to vector<32x4xf32>
      %80 = arith.mulf %75, %79 : vector<32x4xf32>
      %81 = vector.broadcast %61 : vector<32x1xf32> to vector<32x4xf32>
      %82 = arith.mulf %80, %81 : vector<32x4xf32>
      %83 = vector.broadcast %62 : vector<32x1xf32> to vector<32x4xf32>
      %84 = arith.addf %82, %83 : vector<32x4xf32>
      %cst_38 = arith.constant 0.000000e+00 : f32
      %85 = vector.broadcast %cst_38 : f32 to vector<32x4xf32>
      %86 = arith.maximumf %84, %85 : vector<32x4xf32>
      %c144 = arith.constant 144 : index
      %c0_39 = arith.constant 0 : index
      %87 = vector.load %arg4[%c144, %c0_39] : memref<192x64xf32, #tpu.memory_space<vmem>>, vector<16x32xf32>
      %cst_40 = arith.constant dense<0.000000e+00> : vector<16x4xf32>
      %88 = tpu.matmul %87, %86, %cst_40 {dimension_numbers = #tpu.dot_dimension_numbers<[1], [0], [0], [1], [0, 0, 1, 1], [], []>} : vector<16x32xf32>, vector<32x4xf32>, vector<16x4xf32> -> vector<16x4xf32>
      %c0_41 = arith.constant 0 : index
      %c8 = arith.constant 8 : index
      %89 = vector.load %arg5[%c0_41, %c8] : memref<64x12xf32, #tpu.memory_space<vmem>>, vector<16x1xf32>
      %c0_42 = arith.constant 0 : index
      %c9 = arith.constant 9 : index
      %90 = vector.load %arg5[%c0_42, %c9] : memref<64x12xf32, #tpu.memory_space<vmem>>, vector<16x1xf32>
      %cst_43 = arith.constant dense<0.000000e+00> : vector<16xf32>
      %91 = vector.multi_reduction <add>, %88, %cst_43 [1] : vector<16x4xf32> to vector<16xf32>
      %92 = vector.shape_cast %91 : vector<16xf32> to vector<16x1xf32>
      %cst_44 = arith.constant 4.000000e+00 : f32
      %93 = vector.broadcast %cst_44 : f32 to vector<16x1xf32>
      %94 = arith.divf %92, %93 : vector<16x1xf32>
      %95 = vector.broadcast %94 : vector<16x1xf32> to vector<16x4xf32>
      %96 = arith.subf %88, %95 : vector<16x4xf32>
      %97 = arith.mulf %96, %96 : vector<16x4xf32>
      %cst_45 = arith.constant dense<0.000000e+00> : vector<16xf32>
      %98 = vector.multi_reduction <add>, %97, %cst_45 [1] : vector<16x4xf32> to vector<16xf32>
      %99 = vector.shape_cast %98 : vector<16xf32> to vector<16x1xf32>
      %cst_46 = arith.constant 4.000000e+00 : f32
      %100 = vector.broadcast %cst_46 : f32 to vector<16x1xf32>
      %101 = arith.divf %99, %100 : vector<16x1xf32>
      %102 = vector.broadcast %94 : vector<16x1xf32> to vector<16x4xf32>
      %103 = arith.subf %88, %102 : vector<16x4xf32>
      %cst_47 = arith.constant 9.99999974E-6 : f32
      %104 = vector.broadcast %cst_47 : f32 to vector<16x1xf32>
      %105 = arith.addf %101, %104 : vector<16x1xf32>
      %106 = math.rsqrt %105 : vector<16x1xf32>
      %107 = vector.broadcast %106 : vector<16x1xf32> to vector<16x4xf32>
      %108 = arith.mulf %103, %107 : vector<16x4xf32>
      %109 = vector.broadcast %89 : vector<16x1xf32> to vector<16x4xf32>
      %110 = arith.mulf %108, %109 : vector<16x4xf32>
      %111 = vector.broadcast %90 : vector<16x1xf32> to vector<16x4xf32>
      %112 = arith.addf %110, %111 : vector<16x4xf32>
      %cst_48 = arith.constant 0.000000e+00 : f32
      %113 = vector.broadcast %cst_48 : f32 to vector<16x4xf32>
      %114 = arith.maximumf %112, %113 : vector<16x4xf32>
      %c160 = arith.constant 160 : index
      %c0_49 = arith.constant 0 : index
      %115 = vector.load %arg4[%c160, %c0_49] : memref<192x64xf32, #tpu.memory_space<vmem>>, vector<25x16xf32>
      %cst_50 = arith.constant dense<0.000000e+00> : vector<25x4xf32>
      %116 = tpu.matmul %115, %114, %cst_50 {dimension_numbers = #tpu.dot_dimension_numbers<[1], [0], [0], [1], [0, 0, 1, 1], [], []>} : vector<25x16xf32>, vector<16x4xf32>, vector<25x4xf32> -> vector<25x4xf32>
      %c0_51 = arith.constant 0 : index
      %c10 = arith.constant 10 : index
      %117 = vector.load %arg5[%c0_51, %c10] : memref<64x12xf32, #tpu.memory_space<vmem>>, vector<25x1xf32>
      %118 = vector.broadcast %117 : vector<25x1xf32> to vector<25x4xf32>
      %119 = arith.addf %116, %118 : vector<25x4xf32>
      %120 = tpu.iota {dimensions = array<i32: 0>} : vector<25x4xi32>
      %c6_i32 = arith.constant 6 : i32
      %c0_i32_52 = arith.constant 0 : i32
      %121 = arith.cmpi eq, %c6_i32, %c0_i32_52 : i32
      %c1_i32_53 = arith.constant 1 : i32
      %122 = arith.select %121, %c1_i32_53, %c6_i32 : i32
      %123 = vector.broadcast %122 : i32 to vector<25x4xi32>
      %124 = arith.remsi %120, %123 : vector<25x4xi32>
      %c0_i32_54 = arith.constant 0 : i32
      %125 = vector.broadcast %c0_i32_54 : i32 to vector<25x4xi32>
      %126 = arith.cmpi ne, %124, %125 : vector<25x4xi32>
      %c0_i32_55 = arith.constant 0 : i32
      %127 = vector.broadcast %c0_i32_55 : i32 to vector<25x4xi32>
      %128 = arith.cmpi slt, %124, %127 : vector<25x4xi32>
      %c0_i32_56 = arith.constant 0 : i32
      %129 = arith.cmpi slt, %122, %c0_i32_56 : i32
      %130 = vector.broadcast %129 : i1 to vector<25x4xi1>
      %131 = vector.broadcast %130 : vector<25x4xi1> to vector<25x4xi1>
      %132 = arith.xori %128, %131 : vector<25x4xi1>
      %133 = arith.andi %132, %126 : vector<25x4xi1>
      %134 = vector.broadcast %122 : i32 to vector<25x4xi32>
      %135 = arith.addi %124, %134 : vector<25x4xi32>
      %136 = arith.select %133, %135, %124 : vector<25x4xi1>, vector<25x4xi32>
      %c0_i32_57 = arith.constant 0 : i32
      %137 = vector.broadcast %c0_i32_57 : i32 to vector<25x4xi32>
      %138 = arith.cmpi eq, %136, %137 : vector<25x4xi32>
      %139 = arith.extui %138 : vector<25x4xi1> to vector<25x4xi32>
      %140 = arith.sitofp %139 : vector<25x4xi32> to vector<25x4xf32>
      %141 = arith.addf %119, %140 : vector<25x4xf32>
      %c0_58 = arith.constant 0 : index
      %c0_59 = arith.constant 0 : index
      %142 = vector.load %arg6[%c0_58, %c0_59] : memref<25x4xf32, #tpu.memory_space<vmem>>, vector<25x4xf32>
      tpu.vector_store %arg6[%c0_58, %c0_59], %141 {strides = array<i32>} : memref<25x4xf32, #tpu.memory_space<vmem>>, vector<25x4xf32>,
    } else {
    }
    return
  }
  func.func @transform_0(%arg0: i32, %arg1: i32, %arg2: i32) -> (i32, i32, i32) {
    %c0_i32 = arith.constant 0 : i32
    %c0_i32_0 = arith.constant 0 : i32
    return %arg1, %c0_i32, %arg2 : i32, i32, i32
  }
  func.func @transform_1(%arg0: i32, %arg1: i32, %arg2: i32) -> (i32, i32) {
    %c0_i32 = arith.constant 0 : i32
    %c0_i32_0 = arith.constant 0 : i32
    %c0_i32_1 = arith.constant 0 : i32
    return %c0_i32, %c0_i32_0 : i32, i32
  }
  func.func @transform_2(%arg0: i32, %arg1: i32, %arg2: i32) -> (i32, i32) {
    %c0_i32 = arith.constant 0 : i32
    %c0_i32_0 = arith.constant 0 : i32
    %c0_i32_1 = arith.constant 0 : i32
    return %c0_i32, %c0_i32_0 : i32, i32
  }
  func.func @transform_3(%arg0: i32, %arg1: i32, %arg2: i32) -> (i32, i32) {
    %c0_i32 = arith.constant 0 : i32
    %c0_i32_0 = arith.constant 0 : i32
    %c0_i32_1 = arith.constant 0 : i32
    return %c0_i32, %c0_i32_0 : i32, i32
  }
}

</mosaic_0001>

<llo_original>
// kernel: tpu_custom_call.1
$region0: #{tpu_custom_call.1}
  #allocation0 [shape = 'u32[]', space=smem, size = 0x4, offset = 0x4, fixed_abs, tag = 'smem constant byte address 0x4 - core index']
  #allocation1 [shape = 'u32[72,128]{1,0:T(1,128)}', space=vmem, size = 0x9000, scoped, tag = 'internal scratch']
  #allocation2 [shape = 'f32[16,2]{1,0:T(8,128)}', space=vmem, size = 0x2000, scoped, tag = 'scratch operand']
  #allocation3 [shape = 'f32[32,2]{1,0:T(8,128)}', space=vmem, size = 0x4000, scoped, tag = 'scratch operand']
  #allocation4 [shape = 'f32[64,2]{1,0:T(8,128)}', space=vmem, size = 0x8000, scoped, tag = 'scratch operand']
  #allocation5 [shape = 'f32[64,8]{1,0:T(8,128)}', space=vmem, size = 0x8000, scoped, tag = 'scratch operand']
  #allocation6 [shape = 'f32[64,4]{1,0:T(8,128)}', space=vmem, size = 0x8000, scoped, tag = 'scratch operand']
  #allocation7 [shape = 'f32[64,1]{1,0:T(8,128)}', space=vmem, size = 0x8000, scoped, tag = 'scratch operand']
  %s0 = inlined_call_operand.vmem [shape: f32[4,5,512], index: 0, kind: input, shape index: {}]
  %s1 = inlined_call_operand.vmem [shape: f32[192,64], index: 1, kind: input, shape index: {}]
  %s2 = inlined_call_operand.vmem [shape: f32[64,12], index: 2, kind: input, shape index: {}]
  %s3 = inlined_call_operand.vmem [shape: f32[25,4], index: 3, kind: output, shape index: {}]
  %s4 = sld [smem:[#allocation0]]
  $region89: #{tpu_custom_call.1} parent=0
    _
  %s6 = ssub.s32 1, %s4
  %s7 = scalar_select 0, %s6, %s4
  loop: start=0, step=1, limit=14
  $region2: #{tpu_custom_call.1} parent=0 // loop_pre_header
    _
  $region3: #{tpu_custom_call.1} parent=0 // loop_header
    %s9 = sphi 0, %s13
    %p10 = scmp.ge.s32.totalorder %s9, 14
    %s16 = sphi 0, %s35
    %s17 = sphi 0, %s31
    %s18 = sphi 0, %s27
    %s19 = sphi 0, %s16
    %s20 = sphi 0, %s17
    %s21 = sphi 0, %s18
    %s22 = sphi 0, %s19
    %s23 = sphi 0, %s20
    %s24 = sphi 0, %s21
    %s40 = sphi 0, %s42
    %s43 = sphi 0, %s40
    %s44 = sphi 0, %s43
    %s60 = sphi 0, %s44
    %s64 = sphi 0, %s64
    %s66 = sphi 0, %s64
    %s67 = sphi 0, %s66
    %s81 = sphi 0, %s67
    %s85 = sphi 0, %s85
    %s87 = sphi 0, %s85
    %s88 = sphi 0, %s87
    %s102 = sphi 0, %s88
    %s106 = sphi 0, %s106
    %s108 = sphi 0, %s106
    %s109 = sphi 0, %s108
    %s123 = sphi 0, %s109
  $region4: #{tpu_custom_call.1} parent=0 // loop_header_branch
    %12 = sbr.rel (%p10) target = $region8
  $region5: #{tpu_custom_call.1} parent=0 // loop_body
    %s14 = ssub.s32 %s9, 1
    %s15 = ssub.s32 %s9, 2
    %s25 = sadd.s32 1, %s18
    %p26 = scmp.ge.s32.totalorder %s25, 1
    %s27 = scalar_select %p26, 0, %s25
    %s28 = sadd.s32 1, %s17
    %s29 = scalar_select %p26, %s28, %s17
    %p30 = scmp.ge.s32.totalorder %s29, 4
    %s31 = scalar_select %p30, 0, %s29
    %s32 = sadd.s32 1, %s16
    %s33 = scalar_select %p30, %s32, %s16
    %p34 = scmp.ge.s32.totalorder %s33, 3
    %s35 = scalar_select %p34, 0, %s33
    %s36 = ssub.s32 %s17, %s31
    %s37 = ssub.s32 %s18, %s27
    %s38 = sor.u32 %s36, %s37
    %p39 = scmp.eq.s32.totalorder %s38, 0
    %s41 = sadd.s32 %s40, 1
    %s42 = scalar_select %p39, %s40, %s41
    %p45 = pneg %p39
    %p46 = scmp.eq.s32.totalorder %s9, 11
    %p47 = por %p45, %p46
    %p48 = scmp.ne.s32.totalorder %s40, %s43
    %p49 = scmp.eq.s32.totalorder %s9, 0
    %p50 = por %p48, %p49
    %p51 = scmp.ne.s32.totalorder %s40, %s43
    %p52 = scmp.eq.s32.totalorder %s14, 11
    %p53 = por %p51, %p52
    %p54 = scmp.ne.s32.totalorder %s43, %s44
    %p55 = scmp.eq.s32.totalorder %s14, 0
    %p56 = por %p54, %p55
    %p57 = scmp.ne.s32.totalorder %s43, %s44
    %p58 = scmp.eq.s32.totalorder %s15, 11
    %p59 = por %p57, %p58
    %p61 = scmp.ne.s32.totalorder %s44, %s60
    %p62 = scmp.eq.s32.totalorder %s15, 0
    %p63 = por %p61, %p62
    %s65 = sadd.s32 %s64, 1
    %p68 = scmp.eq.s32.totalorder %s9, 11
    %p69 = scmp.ne.s32.totalorder %s64, %s66
    %p70 = scmp.eq.s32.totalorder %s9, 0
    %p71 = por %p69, %p70
    %p72 = scmp.ne.s32.totalorder %s64, %s66
    %p73 = scmp.eq.s32.totalorder %s14, 11
    %p74 = por %p72, %p73
    %p75 = scmp.ne.s32.totalorder %s66, %s67
    %p76 = scmp.eq.s32.totalorder %s14, 0
    %p77 = por %p75, %p76
    %p78 = scmp.ne.s32.totalorder %s66, %s67
    %p79 = scmp.eq.s32.totalorder %s15, 11
    %p80 = por %p78, %p79
    %p82 = scmp.ne.s32.totalorder %s67, %s81
    %p83 = scmp.eq.s32.totalorder %s15, 0
    %p84 = por %p82, %p83
    %s86 = sadd.s32 %s85, 1
    %p89 = scmp.eq.s32.totalorder %s9, 11
    %p90 = scmp.ne.s32.totalorder %s85, %s87
    %p91 = scmp.eq.s32.totalorder %s9, 0
    %p92 = por %p90, %p91
    %p93 = scmp.ne.s32.totalorder %s85, %s87
    %p94 = scmp.eq.s32.totalorder %s14, 11
    %p95 = por %p93, %p94
    %p96 = scmp.ne.s32.totalorder %s87, %s88
    %p97 = scmp.eq.s32.totalorder %s14, 0
    %p98 = por %p96, %p97
    %p99 = scmp.ne.s32.totalorder %s87, %s88
    %p100 = scmp.eq.s32.totalorder %s15, 11
    %p101 = por %p99, %p100
    %p103 = scmp.ne.s32.totalorder %s88, %s102
    %p104 = scmp.eq.s32.totalorder %s15, 0
    %p105 = por %p103, %p104
    %s107 = sadd.s32 %s106, 1
    %p110 = scmp.eq.s32.totalorder %s9, 11
    %p111 = scmp.ne.s32.totalorder %s106, %s108
    %p112 = scmp.eq.s32.totalorder %s9, 0
    %p113 = por %p111, %p112
    %p114 = scmp.ne.s32.totalorder %s106, %s108
    %p115 = scmp.eq.s32.totalorder %s14, 11
    %p116 = por %p114, %p115
    %p117 = scmp.ne.s32.totalorder %s108, %s109
    %p118 = scmp.eq.s32.totalorder %s14, 0
    %p119 = por %p117, %p118
    %p120 = scmp.ne.s32.totalorder %s108, %s109
    %p121 = scmp.eq.s32.totalorder %s15, 11
    %p122 = por %p120, %p121
    %p124 = scmp.ne.s32.totalorder %s109, %s123
    %p125 = scmp.eq.s32.totalorder %s15, 0
    %p126 = por %p124, %p125
    %p127 = scmp.le.s32.totalorder 1, %s9
    %p128 = scmp.lt.s32.totalorder %s9, 13
    %p129 = pnand %p127, %p128
    %p130 = pneg %p129
    // Predicated region
    $region9: #{tpu_custom_call.1} parent=5 // pred_check
      _
    $region10: #{tpu_custom_call.1} parent=5 // pred_check_branch
      %132 = sbr.rel (%p129) target = $region12
    $region11: #{tpu_custom_call.1} parent=5 // pred_region
      %s133 = ssub.s32 %s9, 1
      // Predicated region
      $region13: #{tpu_custom_call.1} parent=11 // pred_check
        %p134 = pneg %p77
      $region14: #{tpu_custom_call.1} parent=11 // pred_check_branch
        %136 = sbr.rel (%p134) target = $region16
      $region15: #{tpu_custom_call.1} parent=11 // pred_region
        _
      $region16: #{tpu_custom_call.1} parent=11 // pred_fallthru
        _
      // Predicated region
      $region17: #{tpu_custom_call.1} parent=11 // pred_check
        %p137 = pneg %p98
      $region18: #{tpu_custom_call.1} parent=11 // pred_check_branch
        %139 = sbr.rel (%p137) target = $region20
      $region19: #{tpu_custom_call.1} parent=11 // pred_region
        _
      $region20: #{tpu_custom_call.1} parent=11 // pred_fallthru
        _
    $region12: #{tpu_custom_call.1} parent=5 // pred_fallthru
      _
    %p140 = scmp.lt.s32.totalorder %s9, 12
    // Predicated region
    $region21: #{tpu_custom_call.1} parent=5 // pred_check
      %p141 = pneg %p140
    $region22: #{tpu_custom_call.1} parent=5 // pred_check_branch
      %143 = sbr.rel (%p141) target = $region24
    $region23: #{tpu_custom_call.1} parent=5 // pred_region
      // Predicated region
      $region25: #{tpu_custom_call.1} parent=23 // pred_check
        %p144 = pneg %p50
      $region26: #{tpu_custom_call.1} parent=23 // pred_check_branch
        %146 = sbr.rel (%p144) target = $region28
      $region27: #{tpu_custom_call.1} parent=23 // pred_region
        %s147 = smul.u32 4, %s18
        %p148 = scmp.lt.s32.totalorder %s17, 3
        %s149 = scalar_select %p148, %s17, 3
        %p150 = scmp.lt.s32.totalorder %s147, 3
        %s151 = scalar_select %p150, %s147, 3
        %s152 = smul.addr %s149, 4
        %s153 = sadd.s32 %s151, %s152
        %s154 = smul.addr %s153, 8
        %s155 = scalar_lea.vmem %s0, %s154
        %s156 = smul.u32 4, %s18
      $region28: #{tpu_custom_call.1} parent=23 // pred_fallthru
        _
    $region24: #{tpu_custom_call.1} parent=5 // pred_fallthru
      _
    %p157 = scmp.le.s32.totalorder 1, %s9
    %p158 = scmp.lt.s32.totalorder %s9, 13
    %p159 = pnand %p157, %p158
    %p160 = pneg %p159
    // Predicated region
    $region29: #{tpu_custom_call.1} parent=5 // pred_check
      _
    $region30: #{tpu_custom_call.1} parent=5 // pred_check_branch
      %162 = sbr.rel (%p159) target = $region32
    $region31: #{tpu_custom_call.1} parent=5 // pred_region
      %s163 = ssub.s32 %s9, 1
      %s164 = smul.u32 4, %s21
      %p165 = scmp.lt.s32.totalorder %s20, 3
      %s166 = scalar_select %p165, %s20, 3
      %p167 = scmp.lt.s32.totalorder %s164, 3
      %s168 = scalar_select %p167, %s164, 3
      %s169 = smul.addr %s166, 4
      %s170 = sadd.s32 %s168, %s169
      %s171 = smul.addr %s170, 8
      %s172 = scalar_lea.vmem %s0, %s171
      %p173 = pneg %p56
      %p174 = pneg %p53
      %p175 = pneg %p77
      %p176 = pneg %p74
      %p177 = pneg %p98
      %p178 = pneg %p95
      %p179 = pneg %p119
      %p180 = pneg %p116
      %s181 = smul.u32 4, %s21
      %p182 = scmp.lt.s32.totalorder %s20, 3
      %s183 = scalar_select %p182, %s20, 3
      %p184 = scmp.lt.s32.totalorder %s181, 3
      %s185 = scalar_select %p184, %s181, 3
      %s186 = smul.addr %s183, 4
      %s187 = sadd.s32 %s185, %s186
      %s188 = smul.addr %s187, 8
      %s189 = scalar_lea.vmem %s0, %s188
      %s190 = smul.u32 4, %s21
      %p191 = scmp.eq.s32.totalorder %s20, 0
      %p192 = scmp.eq.s32.totalorder %s21, 0
      %p193 = pnand %p191, %p192
      %p194 = pneg %p193
      %p195 = scmp.eq.s32.totalorder %s20, 3
      %p196 = pnand %p195, %p192
      %p197 = pneg %p196
      %p198 = scmp.eq.s32.totalorder %s19, 0
      %p199 = pnand %p198, %p194
      %p200 = pneg %p199
      // Predicated region
      $region33: #{tpu_custom_call.1} parent=31 // pred_check
        _
      $region34: #{tpu_custom_call.1} parent=31 // pred_check_branch
        %202 = sbr.rel (%p199) target = $region36
      $region35: #{tpu_custom_call.1} parent=31 // pred_region
        %vm203 = vcmask 15360
        %204 = vst.msk [vmem:[#allocation2] sm:$0xff] %vm203, 0.0
        %205 = vst.msk [vmem:[#allocation2 + $0x8] sm:$0xff] %vm203, 0.0
        %206 = vst.msk [vmem:[#allocation3] sm:$0xff] %vm203, 0.0
        %207 = vst.msk [vmem:[#allocation3 + $0x8] sm:$0xff] %vm203, 0.0
        %208 = vst.msk [vmem:[#allocation3 + $0x10] sm:$0xff] %vm203, 0.0
        %209 = vst.msk [vmem:[#allocation3 + $0x18] sm:$0xff] %vm203, 0.0
        %210 = vst.msk [vmem:[#allocation4] sm:$0xff] %vm203, 0.0
        %211 = vst.msk [vmem:[#allocation4 + $0x8] sm:$0xff] %vm203, 0.0
        %212 = vst.msk [vmem:[#allocation4 + $0x10] sm:$0xff] %vm203, 0.0
        %213 = vst.msk [vmem:[#allocation4 + $0x18] sm:$0xff] %vm203, 0.0
        %214 = vst.msk [vmem:[#allocation4 + $0x20] sm:$0xff] %vm203, 0.0
        %215 = vst.msk [vmem:[#allocation4 + $0x28] sm:$0xff] %vm203, 0.0
        %216 = vst.msk [vmem:[#allocation4 + $0x30] sm:$0xff] %vm203, 0.0
        %217 = vst.msk [vmem:[#allocation4 + $0x38] sm:$0xff] %vm203, 0.0
        %vm218 = vcmask 31744
        %219 = vst.msk [vmem:[#allocation6] sm:$0xff] %vm218, 0.0
        %220 = vst.msk [vmem:[#allocation6 + $0x8] sm:$0xff] %vm218, 0.0
        %221 = vst.msk [vmem:[#allocation6 + $0x10] sm:$0xff] %vm218, 0.0
        %222 = vst.msk [vmem:[#allocation6 + $0x18] sm:$0xff] %vm218, 0.0
        %223 = vst.msk [vmem:[#allocation6 + $0x20] sm:$0xff] %vm218, 0.0
        %224 = vst.msk [vmem:[#allocation6 + $0x28] sm:$0xff] %vm218, 0.0
        %225 = vst.msk [vmem:[#allocation6 + $0x30] sm:$0xff] %vm218, 0.0
        %226 = vst.msk [vmem:[#allocation6 + $0x38] sm:$0xff] %vm218, 0.0
      $region36: #{tpu_custom_call.1} parent=31 // pred_fallthru
        _
      %p227 = scmp.eq.s32.totalorder %s19, 1
      %p228 = pnand %p227, %p194
      %p229 = pneg %p228
      // Predicated region
      $region37: #{tpu_custom_call.1} parent=31 // pred_check
        _
      $region38: #{tpu_custom_call.1} parent=31 // pred_check_branch
        %231 = sbr.rel (%p228) target = $region40
      $region39: #{tpu_custom_call.1} parent=31 // pred_region
        %v232 = vld [vmem:[%s2] sm:$0xff]
        %v233 = vld [vmem:[%s2 + $0x8] sm:$0xff]
        %v234 = vld [vmem:[#allocation2] sm:$0xff]
        %v235 = vld [vmem:[#allocation2 + $0x8] sm:$0xff]
        %v236 = vmul.f32 %v234, 0.00048828125
        %v237 = vmul.f32 %v235, 0.00048828125
        %v238 = vmul.f32 %v236, %v236
        %v239 = vmul.f32 %v237, %v237
        %242 = vrot.lane.b32.xlu0 %v238, 1
        %v243 = vpop.permute.xlu0 %242
        %244 = vrot.lane.b32.xlu0 %v239, 1
        %v245 = vpop.permute.xlu0 %244
        %v248 = vsub.f32 %v236, %v243
        %v249 = vsub.f32 %v237, %v245
        %v250 = vmax.f32 %v248, 0.0
        %v251 = vmax.f32 %v249, 0.0
        %v252 = vadd.f32 %v250, 1e-05
        %v253 = vadd.f32 %v251, 1e-05
        %v254 = vrsqrt.pop %v252
        %v255 = vmul.f32 %v254, %v252
        %v256 = vmul.f32 %v255, %v254
        %v257 = vmul.f32 0.5, %v256
        %v258 = vsub.f32 1.5, %v257
        %v259 = vmul.f32 %v254, %v258
        %vm260 = vweird.f32 %v252
        %vm261 = vweird.f32 %v254
        %vm262 = vmor %vm260, %vm261
        %v263 = vsel %vm262, %v254, %v259
        %v264 = vrsqrt.pop %v253
        %v265 = vmul.f32 %v264, %v253
        %v266 = vmul.f32 %v265, %v264
        %v267 = vmul.f32 0.5, %v266
        %v268 = vsub.f32 1.5, %v267
        %v269 = vmul.f32 %v264, %v268
        %vm270 = vweird.f32 %v253
        %vm271 = vweird.f32 %v264
        %vm272 = vmor %vm270, %vm271
        %v273 = vsel %vm272, %v264, %v269
        %276 = vrot.lane.b32.xlu0 %v263, 127
        %v277 = vpop.permute.xlu0 %276
        %278 = vrot.lane.b32.xlu0 %v273, 127
        %v279 = vpop.permute.xlu0 %278
        %v282 = vmul.f32 %v232, %v277
        %v283 = vmul.f32 %v233, %v279
        %v284 = vmul.f32 %v236, %v282
        %v285 = vmul.f32 %v237, %v283
        %288 = vrot.lane.b32.xlu0 %v284, 1
        %v289 = vpop.permute.xlu0 %288
        %290 = vrot.lane.b32.xlu0 %v285, 1
        %v291 = vpop.permute.xlu0 %290
        %v294 = vsub.f32 %v232, %v289
        %v295 = vsub.f32 %v233, %v291
        %vm296 = vcmask 7168
        %297 = vst.msk [vmem:[#allocation5] sm:$0xff] %vm296, %v282
        %298 = vst.msk [vmem:[#allocation5 + $0x8] sm:$0xff] %vm296, %v283
        %vm299 = vcmask 15368
        %300 = vst.msk [vmem:[#allocation5] sm:$0xff] %vm299, %v294
        %301 = vst.msk [vmem:[#allocation5 + $0x8] sm:$0xff] %vm299, %v295
      $region40: #{tpu_custom_call.1} parent=31 // pred_fallthru
        _
      %p302 = scmp.eq.s32.totalorder %s19, 2
      %p303 = pnand %p302, %p194
      %p304 = pneg %p303
      // Predicated region
      $region41: #{tpu_custom_call.1} parent=31 // pred_check
        _
      $region42: #{tpu_custom_call.1} parent=31 // pred_check_branch
        %306 = sbr.rel (%p303) target = $region44
      $region43: #{tpu_custom_call.1} parent=31 // pred_region
        %v307 = vld [vmem:[%s2] sm:$0xff]
        %v308 = vld [vmem:[%s2 + $0x8] sm:$0xff]
        %v309 = vld [vmem:[%s2 + $0x10] sm:$0xff]
        %v310 = vld [vmem:[%s2 + $0x18] sm:$0xff]
        %v311 = vld [vmem:[#allocation3] sm:$0xff]
        %v312 = vld [vmem:[#allocation3 + $0x8] sm:$0xff]
        %v313 = vld [vmem:[#allocation3 + $0x10] sm:$0xff]
        %v314 = vld [vmem:[#allocation3 + $0x18] sm:$0xff]
        %v315 = vmul.f32 %v311, 0.00048828125
        %v316 = vmul.f32 %v312, 0.00048828125
        %v317 = vmul.f32 %v313, 0.00048828125
        %v318 = vmul.f32 %v314, 0.00048828125
        %v319 = vmul.f32 %v315, %v315
        %v320 = vmul.f32 %v316, %v316
        %v321 = vmul.f32 %v317, %v317
        %v322 = vmul.f32 %v318, %v318
        %327 = vrot.lane.b32.xlu0 %v319, 1
        %v328 = vpop.permute.xlu0 %327
        %329 = vrot.lane.b32.xlu0 %v320, 1
        %v330 = vpop.permute.xlu0 %329
        %331 = vrot.lane.b32.xlu0 %v321, 1
        %v332 = vpop.permute.xlu0 %331
        %333 = vrot.lane.b32.xlu0 %v322, 1
        %v334 = vpop.permute.xlu0 %333
        %v339 = vsub.f32 %v315, %v328
        %v340 = vsub.f32 %v316, %v330
        %v341 = vsub.f32 %v317, %v332
        %v342 = vsub.f32 %v318, %v334
        %v343 = vmax.f32 %v339, 0.0
        %v344 = vmax.f32 %v340, 0.0
        %v345 = vmax.f32 %v341, 0.0
        %v346 = vmax.f32 %v342, 0.0
        %v347 = vadd.f32 %v343, 1e-05
        %v348 = vadd.f32 %v344, 1e-05
        %v349 = vadd.f32 %v345, 1e-05
        %v350 = vadd.f32 %v346, 1e-05
        %v351 = vrsqrt.pop %v347
        %v352 = vmul.f32 %v351, %v347
        %v353 = vmul.f32 %v352, %v351
        %v354 = vmul.f32 0.5, %v353
        %v355 = vsub.f32 1.5, %v354
        %v356 = vmul.f32 %v351, %v355
        %vm357 = vweird.f32 %v347
        %vm358 = vweird.f32 %v351
        %vm359 = vmor %vm357, %vm358
        %v360 = vsel %vm359, %v351, %v356
        %v361 = vrsqrt.pop %v348
        %v362 = vmul.f32 %v361, %v348
        %v363 = vmul.f32 %v362, %v361
        %v364 = vmul.f32 0.5, %v363
        %v365 = vsub.f32 1.5, %v364
        %v366 = vmul.f32 %v361, %v365
        %vm367 = vweird.f32 %v348
        %vm368 = vweird.f32 %v361
        %vm369 = vmor %vm367, %vm368
        %v370 = vsel %vm369, %v361, %v366
        %v371 = vrsqrt.pop %v349
        %v372 = vmul.f32 %v371, %v349
        %v373 = vmul.f32 %v372, %v371
        %v374 = vmul.f32 0.5, %v373
        %v375 = vsub.f32 1.5, %v374
        %v376 = vmul.f32 %v371, %v375
        %vm377 = vweird.f32 %v349
        %vm378 = vweird.f32 %v371
        %vm379 = vmor %vm377, %vm378
        %v380 = vsel %vm379, %v371, %v376
        %v381 = vrsqrt.pop %v350
        %v382 = vmul.f32 %v381, %v350
        %v383 = vmul.f32 %v382, %v381
        %v384 = vmul.f32 0.5, %v383
        %v385 = vsub.f32 1.5, %v384
        %v386 = vmul.f32 %v381, %v385
        %vm387 = vweird.f32 %v350
        %vm388 = vweird.f32 %v381
        %vm389 = vmor %vm387, %vm388
        %v390 = vsel %vm389, %v381, %v386
        %395 = vrot.lane.b32.xlu0 %v360, 1
        %v396 = vpop.permute.xlu0 %395
        %397 = vrot.lane.b32.xlu0 %v370, 1
        %v398 = vpop.permute.xlu0 %397
        %399 = vrot.lane.b32.xlu0 %v380, 1
        %v400 = vpop.permute.xlu0 %399
        %401 = vrot.lane.b32.xlu0 %v390, 1
        %v402 = vpop.permute.xlu0 %401
        %v407 = vmul.f32 %v307, %v396
        %v408 = vmul.f32 %v308, %v398
        %v409 = vmul.f32 %v309, %v400
        %v410 = vmul.f32 %v310, %v402
        %415 = vrot.lane.b32.xlu0 %v407, 126
        %v416 = vpop.permute.xlu0 %415
        %417 = vrot.lane.b32.xlu0 %v408, 126
        %v418 = vpop.permute.xlu0 %417
        %419 = vrot.lane.b32.xlu0 %v409, 126
        %v420 = vpop.permute.xlu0 %419
        %421 = vrot.lane.b32.xlu0 %v410, 126
        %v422 = vpop.permute.xlu0 %421
        %v427 = vmul.f32 %v315, %v416
        %v428 = vmul.f32 %v316, %v418
        %v429 = vmul.f32 %v317, %v420
        %v430 = vmul.f32 %v318, %v422
        %435 = vrot.lane.b32.xlu0 %v427, 3
        %v436 = vpop.permute.xlu0 %435
        %437 = vrot.lane.b32.xlu0 %v428, 3
        %v438 = vpop.permute.xlu0 %437
        %439 = vrot.lane.b32.xlu0 %v429, 3
        %v440 = vpop.permute.xlu0 %439
        %441 = vrot.lane.b32.xlu0 %v430, 3
        %v442 = vpop.permute.xlu0 %441
        %v447 = vsub.f32 %v307, %v436
        %v448 = vsub.f32 %v308, %v438
        %v449 = vsub.f32 %v309, %v440
        %v450 = vsub.f32 %v310, %v442
        %vm451 = vcmask 23568
        %452 = vst.msk [vmem:[#allocation5] sm:$0xff] %vm451, %v407
        %453 = vst.msk [vmem:[#allocation5 + $0x8] sm:$0xff] %vm451, %v408
        %454 = vst.msk [vmem:[#allocation5 + $0x10] sm:$0xff] %vm451, %v409
        %455 = vst.msk [vmem:[#allocation5 + $0x18] sm:$0xff] %vm451, %v410
        %vm456 = vcmask 31768
        %457 = vst.msk [vmem:[#allocation5] sm:$0xff] %vm456, %v447
        %458 = vst.msk [vmem:[#allocation5 + $0x8] sm:$0xff] %vm456, %v448
        %459 = vst.msk [vmem:[#allocation5 + $0x10] sm:$0xff] %vm456, %v449
        %460 = vst.msk [vmem:[#allocation5 + $0x18] sm:$0xff] %vm456, %v450
        %v461 = vld [vmem:[%s2] sm:$0xff]
        %v462 = vld [vmem:[%s2 + $0x8] sm:$0xff]
        %v463 = vld [vmem:[%s2 + $0x10] sm:$0xff]
        %v464 = vld [vmem:[%s2 + $0x18] sm:$0xff]
        %v465 = vld [vmem:[%s2 + $0x20] sm:$0xff]
        %v466 = vld [vmem:[%s2 + $0x28] sm:$0xff]
        %v467 = vld [vmem:[%s2 + $0x30] sm:$0xff]
        %v468 = vld [vmem:[%s2 + $0x38] sm:$0xff]
        %vm469 = vcmp.ge.f32.partialorder %v461, 0.0
        %vm470 = vcmp.ge.f32.partialorder %v462, 0.0
        %vm471 = vcmp.ge.f32.partialorder %v463, 0.0
        %vm472 = vcmp.ge.f32.partialorder %v464, 0.0
        %vm473 = vcmp.ge.f32.partialorder %v465, 0.0
        %vm474 = vcmp.ge.f32.partialorder %v466, 0.0
        %vm475 = vcmp.ge.f32.partialorder %v467, 0.0
        %vm476 = vcmp.ge.f32.partialorder %v468, 0.0
        %v477 = vsel %vm469, 1.0, -1.0
        %v478 = vsel %vm470, 1.0, -1.0
        %v479 = vsel %vm471, 1.0, -1.0
        %v480 = vsel %vm472, 1.0, -1.0
        %v481 = vsel %vm473, 1.0, -1.0
        %v482 = vsel %vm474, 1.0, -1.0
        %v483 = vsel %vm475, 1.0, -1.0
        %v484 = vsel %vm476, 1.0, -1.0
        %vm485 = vcmask 39968
        %486 = vst.msk [vmem:[#allocation5] sm:$0xff] %vm485, %v477
        %487 = vst.msk [vmem:[#allocation5 + $0x8] sm:$0xff] %vm485, %v478
        %488 = vst.msk [vmem:[#allocation5 + $0x10] sm:$0xff] %vm485, %v479
        %489 = vst.msk [vmem:[#allocation5 + $0x18] sm:$0xff] %vm485, %v480
        %490 = vst.msk [vmem:[#allocation5 + $0x20] sm:$0xff] %vm485, %v481
        %491 = vst.msk [vmem:[#allocation5 + $0x28] sm:$0xff] %vm485, %v482
        %492 = vst.msk [vmem:[#allocation5 + $0x30] sm:$0xff] %vm485, %v483
        %493 = vst.msk [vmem:[#allocation5 + $0x38] sm:$0xff] %vm485, %v484
      $region44: #{tpu_custom_call.1} parent=31 // pred_fallthru
        _
      %v494 = vld [vmem:[%s189] sm:$0x1f]
      %v495 = vld [vmem:[%s189 + $0x8] sm:$0x1f]
      %v496 = vld [vmem:[%s189 + $0x10] sm:$0x1f]
      %v497 = vld [vmem:[%s189 + $0x18] sm:$0x1f]
      %v498 = vld [vmem:[%s1] sm:$0xff]
      %v499 = vld [vmem:[%s1 + $0x8] sm:$0xff]
      %vm500 = vcmask 39936
      %v502 = vsel %vm500, %v498, 0
      %v505 = vsel %vm500, %v499, 0
      %vm507 = vcmask 1044480
      %v509 = vsel %vm507, %v494, 0
      %v512 = vsel %vm507, %v495, 0
      %v515 = vsel %vm507, %v496, 0
      %v518 = vsel %vm507, %v497, 0
      %520 = vmatpush.msra.mxu0 0.0
      %521 = vmatpush.msra.mxu0 0.0
      %522 = vmatpush.msra.mxu0 0.0
      %523 = vmatpush.msra.mxu0 0.0
      %524 = vmatpush.msra.mxu0 0.0
      %525 = vmatpush.msra.mxu0 0.0
      %526 = vmatpush.msra.mxu0 0.0
      %527 = vmatpush.msra.mxu0 0.0
      %528 = vmatpush.msra.mxu0 0.0
      %529 = vmatpush.msra.mxu0 0.0
      %530 = vmatpush.msra.mxu0 0.0
      %531 = vmatpush.msra.mxu0 0.0
      %532 = vmatpush.msra.mxu0 0.0
      %533 = vmatpush.msra.mxu0 0.0
      %534 = vmatpush.msra.mxu0 0.0
      %535 = vmatpush.msra.mxu0 %v509
      %536 = vmatmul.f32.gmra.mxu0 %v502
      %v537 = vpop.f32.mrf.mxu0
      %v538 = vadd.f32 0.0, %v537
      %539 = vmatmul.f32.gmra.mxu0 %v505
      %v540 = vpop.f32.mrf.mxu0
      %v541 = vadd.f32 0.0, %v540
      %542 = vdwg.mxu0
      %543 = vmatpush.msra.mxu0 0.0
      %544 = vmatpush.msra.mxu0 0.0
      %545 = vmatpush.msra.mxu0 0.0
      %546 = vmatpush.msra.mxu0 0.0
      %547 = vmatpush.msra.mxu0 0.0
      %548 = vmatpush.msra.mxu0 0.0
      %549 = vmatpush.msra.mxu0 0.0
      %550 = vmatpush.msra.mxu0 0.0
      %551 = vmatpush.msra.mxu0 0.0
      %552 = vmatpush.msra.mxu0 0.0
      %553 = vmatpush.msra.mxu0 0.0
      %554 = vmatpush.msra.mxu0 0.0
      %555 = vmatpush.msra.mxu0 0.0
      %556 = vmatpush.msra.mxu0 0.0
      %557 = vmatpush.msra.mxu0 0.0
      %558 = vmatpush.msra.mxu0 %v512
      %559 = vmatmul.f32.gmra.mxu0 %v502
      %v560 = vpop.f32.mrf.mxu0
      %v561 = vadd.f32 0.0, %v560
      %562 = vmatmul.f32.gmra.mxu0 %v505
      %v563 = vpop.f32.mrf.mxu0
      %v564 = vadd.f32 0.0, %v563
      %565 = vdwg.mxu0
      %566 = vmatpush.msra.mxu0 0.0
      %567 = vmatpush.msra.mxu0 0.0
      %568 = vmatpush.msra.mxu0 0.0
      %569 = vmatpush.msra.mxu0 0.0
      %570 = vmatpush.msra.mxu0 0.0
      %571 = vmatpush.msra.mxu0 0.0
      %572 = vmatpush.msra.mxu0 0.0
      %573 = vmatpush.msra.mxu0 0.0
      %574 = vmatpush.msra.mxu0 0.0
      %575 = vmatpush.msra.mxu0 0.0
      %576 = vmatpush.msra.mxu0 0.0
      %577 = vmatpush.msra.mxu0 0.0
      %578 = vmatpush.msra.mxu0 0.0
      %579 = vmatpush.msra.mxu0 0.0
      %580 = vmatpush.msra.mxu0 0.0
      %581 = vmatpush.msra.mxu0 %v515
      %582 = vmatmul.f32.gmra.mxu0 %v502
      %v583 = vpop.f32.mrf.mxu0
      %v584 = vadd.f32 0.0, %v583
      %585 = vmatmul.f32.gmra.mxu0 %v505
      %v586 = vpop.f32.mrf.mxu0
      %v587 = vadd.f32 0.0, %v586
      %588 = vdwg.mxu0
      %589 = vmatpush.msra.mxu0 0.0
      %590 = vmatpush.msra.mxu0 0.0
      %591 = vmatpush.msra.mxu0 0.0
      %592 = vmatpush.msra.mxu0 0.0
      %593 = vmatpush.msra.mxu0 0.0
      %594 = vmatpush.msra.mxu0 0.0
      %595 = vmatpush.msra.mxu0 0.0
      %596 = vmatpush.msra.mxu0 0.0
      %597 = vmatpush.msra.mxu0 0.0
      %598 = vmatpush.msra.mxu0 0.0
      %599 = vmatpush.msra.mxu0 0.0
      %600 = vmatpush.msra.mxu0 0.0
      %601 = vmatpush.msra.mxu0 0.0
      %602 = vmatpush.msra.mxu0 0.0
      %603 = vmatpush.msra.mxu0 0.0
      %604 = vmatpush.msra.mxu0 %v518
      %605 = vmatmul.f32.gmra.mxu0 %v502
      %v606 = vpop.f32.mrf.mxu0
      %v607 = vadd.f32 0.0, %v606
      %608 = vmatmul.f32.gmra.mxu0 %v505
      %v609 = vpop.f32.mrf.mxu0
      %v610 = vadd.f32 0.0, %v609
      %611 = vdwg.mxu0
      // Predicated region
      $region45: #{tpu_custom_call.1} parent=31 // pred_check
        %p612 = pneg %p198
      $region46: #{tpu_custom_call.1} parent=31 // pred_check_branch
        %614 = sbr.rel (%p612) target = $region48
      $region47: #{tpu_custom_call.1} parent=31 // pred_region
        %v615 = vld [vmem:[#allocation2] sm:$0xff]
        %v616 = vld [vmem:[#allocation2 + $0x8] sm:$0xff]
        %617 = vmatpush.msra.mxu0 1.0
        %618 = vmatpush.msra.mxu0 1.0
        %619 = vmatpush.msra.mxu0 1.0
        %620 = vmatpush.msra.mxu0 1.0
        %621 = vmatpush.msra.mxu0 1.0
        %622 = vmatpush.msra.mxu0 1.0
        %623 = vmatpush.msra.mxu0 1.0
        %624 = vmatpush.msra.mxu0 1.0
        %625 = vmatpush.msra.mxu0 1.0
        %626 = vmatpush.msra.mxu0 1.0
        %627 = vmatpush.msra.mxu0 1.0
        %628 = vmatpush.msra.mxu0 1.0
        %629 = vmatpush.msra.mxu0 1.0
        %630 = vmatpush.msra.mxu0 1.0
        %631 = vmatpush.msra.mxu0 1.0
        %632 = vmatpush.msra.mxu0 1.0
        %633 = vmatmul.f32.gmra.mxu0 %v538
        %v634 = vpop.f32.mrf.mxu0
        %v635 = vadd.f32 0.0, %v634
        %636 = vmatmul.f32.gmra.mxu0 %v541
        %v637 = vpop.f32.mrf.mxu0
        %v638 = vadd.f32 0.0, %v637
        %639 = vdwg.mxu0
        %640 = vmatpush.msra.mxu0 1.0
        %641 = vmatpush.msra.mxu0 1.0
        %642 = vmatpush.msra.mxu0 1.0
        %643 = vmatpush.msra.mxu0 1.0
        %644 = vmatpush.msra.mxu0 1.0
        %645 = vmatpush.msra.mxu0 1.0
        %646 = vmatpush.msra.mxu0 1.0
        %647 = vmatpush.msra.mxu0 1.0
        %648 = vmatpush.msra.mxu0 1.0
        %649 = vmatpush.msra.mxu0 1.0
        %650 = vmatpush.msra.mxu0 1.0
        %651 = vmatpush.msra.mxu0 1.0
        %652 = vmatpush.msra.mxu0 1.0
        %653 = vmatpush.msra.mxu0 1.0
        %654 = vmatpush.msra.mxu0 1.0
        %655 = vmatpush.msra.mxu0 1.0
        %656 = vmatmul.f32.gmra.mxu0 %v561
        %v657 = vpop.f32.mrf.mxu0
        %v658 = vadd.f32 %v635, %v657
        %659 = vmatmul.f32.gmra.mxu0 %v564
        %v660 = vpop.f32.mrf.mxu0
        %v661 = vadd.f32 %v638, %v660
        %662 = vdwg.mxu0
        %663 = vmatpush.msra.mxu0 1.0
        %664 = vmatpush.msra.mxu0 1.0
        %665 = vmatpush.msra.mxu0 1.0
        %666 = vmatpush.msra.mxu0 1.0
        %667 = vmatpush.msra.mxu0 1.0
        %668 = vmatpush.msra.mxu0 1.0
        %669 = vmatpush.msra.mxu0 1.0
        %670 = vmatpush.msra.mxu0 1.0
        %671 = vmatpush.msra.mxu0 1.0
        %672 = vmatpush.msra.mxu0 1.0
        %673 = vmatpush.msra.mxu0 1.0
        %674 = vmatpush.msra.mxu0 1.0
        %675 = vmatpush.msra.mxu0 1.0
        %676 = vmatpush.msra.mxu0 1.0
        %677 = vmatpush.msra.mxu0 1.0
        %678 = vmatpush.msra.mxu0 1.0
        %679 = vmatmul.f32.gmra.mxu0 %v584
        %v680 = vpop.f32.mrf.mxu0
        %v681 = vadd.f32 %v658, %v680
        %682 = vmatmul.f32.gmra.mxu0 %v587
        %v683 = vpop.f32.mrf.mxu0
        %v684 = vadd.f32 %v661, %v683
        %685 = vdwg.mxu0
        %686 = vmatpush.msra.mxu0 1.0
        %687 = vmatpush.msra.mxu0 1.0
        %688 = vmatpush.msra.mxu0 1.0
        %689 = vmatpush.msra.mxu0 1.0
        %690 = vmatpush.msra.mxu0 1.0
        %691 = vmatpush.msra.mxu0 1.0
        %692 = vmatpush.msra.mxu0 1.0
        %693 = vmatpush.msra.mxu0 1.0
        %694 = vmatpush.msra.mxu0 1.0
        %695 = vmatpush.msra.mxu0 1.0
        %696 = vmatpush.msra.mxu0 1.0
        %697 = vmatpush.msra.mxu0 1.0
        %698 = vmatpush.msra.mxu0 1.0
        %699 = vmatpush.msra.mxu0 1.0
        %700 = vmatpush.msra.mxu0 1.0
        %701 = vmatpush.msra.mxu0 1.0
        %702 = vmatmul.f32.gmra.mxu0 %v607
        %v703 = vpop.f32.mrf.mxu0
        %v704 = vadd.f32 %v681, %v703
        %705 = vmatmul.f32.gmra.mxu0 %v610
        %v706 = vpop.f32.mrf.mxu0
        %v707 = vadd.f32 %v684, %v706
        %708 = vdwg.mxu0
        %v709 = vadd.f32 %v615, %v704
        %v710 = vadd.f32 %v616, %v707
        %vm711 = vcmask 7168
        %712 = vst.msk [vmem:[#allocation2] sm:$0xff] %vm711, %v709
        %713 = vst.msk [vmem:[#allocation2 + $0x8] sm:$0xff] %vm711, %v710
        %v714 = vld [vmem:[#allocation2] sm:$0xff]
        %v715 = vld [vmem:[#allocation2 + $0x8] sm:$0xff]
        %v716 = vmul.f32 %v538, %v538
        %v717 = vmul.f32 %v561, %v561
        %v718 = vmul.f32 %v584, %v584
        %v719 = vmul.f32 %v607, %v607
        %v720 = vmul.f32 %v541, %v541
        %v721 = vmul.f32 %v564, %v564
        %v722 = vmul.f32 %v587, %v587
        %v723 = vmul.f32 %v610, %v610
        %724 = vmatpush.msra.mxu0 1.0
        %725 = vmatpush.msra.mxu0 1.0
        %726 = vmatpush.msra.mxu0 1.0
        %727 = vmatpush.msra.mxu0 1.0
        %728 = vmatpush.msra.mxu0 1.0
        %729 = vmatpush.msra.mxu0 1.0
        %730 = vmatpush.msra.mxu0 1.0
        %731 = vmatpush.msra.mxu0 1.0
        %732 = vmatpush.msra.mxu0 1.0
        %733 = vmatpush.msra.mxu0 1.0
        %734 = vmatpush.msra.mxu0 1.0
        %735 = vmatpush.msra.mxu0 1.0
        %736 = vmatpush.msra.mxu0 1.0
        %737 = vmatpush.msra.mxu0 1.0
        %738 = vmatpush.msra.mxu0 1.0
        %739 = vmatpush.msra.mxu0 1.0
        %740 = vmatmul.f32.gmra.mxu0 %v716
        %v741 = vpop.f32.mrf.mxu0
        %v742 = vadd.f32 0.0, %v741
        %743 = vmatmul.f32.gmra.mxu0 %v720
        %v744 = vpop.f32.mrf.mxu0
        %v745 = vadd.f32 0.0, %v744
        %746 = vdwg.mxu0
        %747 = vmatpush.msra.mxu0 1.0
        %748 = vmatpush.msra.mxu0 1.0
        %749 = vmatpush.msra.mxu0 1.0
        %750 = vmatpush.msra.mxu0 1.0
        %751 = vmatpush.msra.mxu0 1.0
        %752 = vmatpush.msra.mxu0 1.0
        %753 = vmatpush.msra.mxu0 1.0
        %754 = vmatpush.msra.mxu0 1.0
        %755 = vmatpush.msra.mxu0 1.0
        %756 = vmatpush.msra.mxu0 1.0
        %757 = vmatpush.msra.mxu0 1.0
        %758 = vmatpush.msra.mxu0 1.0
        %759 = vmatpush.msra.mxu0 1.0
        %760 = vmatpush.msra.mxu0 1.0
        %761 = vmatpush.msra.mxu0 1.0
        %762 = vmatpush.msra.mxu0 1.0
        %763 = vmatmul.f32.gmra.mxu0 %v717
        %v764 = vpop.f32.mrf.mxu0
        %v765 = vadd.f32 %v742, %v764
        %766 = vmatmul.f32.gmra.mxu0 %v721
        %v767 = vpop.f32.mrf.mxu0
        %v768 = vadd.f32 %v745, %v767
        %769 = vdwg.mxu0
        %770 = vmatpush.msra.mxu0 1.0
        %771 = vmatpush.msra.mxu0 1.0
        %772 = vmatpush.msra.mxu0 1.0
        %773 = vmatpush.msra.mxu0 1.0
        %774 = vmatpush.msra.mxu0 1.0
        %775 = vmatpush.msra.mxu0 1.0
        %776 = vmatpush.msra.mxu0 1.0
        %777 = vmatpush.msra.mxu0 1.0
        %778 = vmatpush.msra.mxu0 1.0
        %779 = vmatpush.msra.mxu0 1.0
        %780 = vmatpush.msra.mxu0 1.0
        %781 = vmatpush.msra.mxu0 1.0
        %782 = vmatpush.msra.mxu0 1.0
        %783 = vmatpush.msra.mxu0 1.0
        %784 = vmatpush.msra.mxu0 1.0
        %785 = vmatpush.msra.mxu0 1.0
        %786 = vmatmul.f32.gmra.mxu0 %v718
        %v787 = vpop.f32.mrf.mxu0
        %v788 = vadd.f32 %v765, %v787
        %789 = vmatmul.f32.gmra.mxu0 %v722
        %v790 = vpop.f32.mrf.mxu0
        %v791 = vadd.f32 %v768, %v790
        %792 = vdwg.mxu0
        %793 = vmatpush.msra.mxu0 1.0
        %794 = vmatpush.msra.mxu0 1.0
        %795 = vmatpush.msra.mxu0 1.0
        %796 = vmatpush.msra.mxu0 1.0
        %797 = vmatpush.msra.mxu0 1.0
        %798 = vmatpush.msra.mxu0 1.0
        %799 = vmatpush.msra.mxu0 1.0
        %800 = vmatpush.msra.mxu0 1.0
        %801 = vmatpush.msra.mxu0 1.0
        %802 = vmatpush.msra.mxu0 1.0
        %803 = vmatpush.msra.mxu0 1.0
        %804 = vmatpush.msra.mxu0 1.0
        %805 = vmatpush.msra.mxu0 1.0
        %806 = vmatpush.msra.mxu0 1.0
        %807 = vmatpush.msra.mxu0 1.0
        %808 = vmatpush.msra.mxu0 1.0
        %809 = vmatmul.f32.gmra.mxu0 %v719
        %v810 = vpop.f32.mrf.mxu0
        %v811 = vadd.f32 %v788, %v810
        %812 = vmatmul.f32.gmra.mxu0 %v723
        %v813 = vpop.f32.mrf.mxu0
        %v814 = vadd.f32 %v791, %v813
        %815 = vdwg.mxu0
        %818 = vrot.lane.b32.xlu0 %v811, 1
        %v819 = vpop.permute.xlu0 %818
        %820 = vrot.lane.b32.xlu0 %v814, 1
        %v821 = vpop.permute.xlu0 %820
        %v824 = vadd.f32 %v714, %v819
        %v825 = vadd.f32 %v715, %v821
        %vm826 = vcmask 15368
        %827 = vst.msk [vmem:[#allocation2] sm:$0xff] %vm826, %v824
        %828 = vst.msk [vmem:[#allocation2 + $0x8] sm:$0xff] %vm826, %v825
      $region48: #{tpu_custom_call.1} parent=31 // pred_fallthru
        _
      %p829 = scmp.ge.s32.totalorder %s19, 1
      // Predicated region
      $region49: #{tpu_custom_call.1} parent=31 // pred_check
        %p830 = pneg %p829
      $region50: #{tpu_custom_call.1} parent=31 // pred_check_branch
        %832 = sbr.rel (%p830) target = $region52
      $region51: #{tpu_custom_call.1} parent=31 // pred_region
        %v833 = vld [vmem:[#allocation5] sm:$0xff]
        %v834 = vld [vmem:[#allocation5 + $0x8] sm:$0xff]
        %836 = vset.pattern.permute.xlu0 0
        %837 = vperm.xlu0 %836, %v833
        %v838 = vpop.permute.xlu0 %837
        %841 = vset.pattern.permute.xlu0 0
        %842 = vperm.xlu0 %841, %v834
        %v843 = vpop.permute.xlu0 %842
        %v845 = vmul.f32 %v538, %v838
        %v846 = vmul.f32 %v561, %v838
        %v847 = vmul.f32 %v584, %v838
        %v848 = vmul.f32 %v607, %v838
        %v849 = vmul.f32 %v541, %v843
        %v850 = vmul.f32 %v564, %v843
        %v851 = vmul.f32 %v587, %v843
        %v852 = vmul.f32 %v610, %v843
        %853 = vset.pattern.permute.xlu0 1
        %854 = vperm.xlu0 %853, %v833
        %v855 = vpop.permute.xlu0 %854
        %857 = vset.pattern.permute.xlu0 1
        %858 = vperm.xlu0 %857, %v834
        %v859 = vpop.permute.xlu0 %858
        %v861 = vadd.f32 %v845, %v855
        %v862 = vadd.f32 %v846, %v855
        %v863 = vadd.f32 %v847, %v855
        %v864 = vadd.f32 %v848, %v855
        %v865 = vadd.f32 %v849, %v859
        %v866 = vadd.f32 %v850, %v859
        %v867 = vadd.f32 %v851, %v859
        %v868 = vadd.f32 %v852, %v859
        %v869 = vmax.f32 %v861, 0.0
        %v870 = vmax.f32 %v862, 0.0
        %v871 = vmax.f32 %v863, 0.0
        %v872 = vmax.f32 %v864, 0.0
        %v873 = vmax.f32 %v865, 0.0
        %v874 = vmax.f32 %v866, 0.0
        %v875 = vmax.f32 %v867, 0.0
        %v876 = vmax.f32 %v868, 0.0
        %v877 = vld [vmem:[%s1 + $0x10] sm:$0xff]
        %v878 = vld [vmem:[%s1 + $0x18] sm:$0xff]
        %v879 = vld [vmem:[%s1 + $0x20] sm:$0xff]
        %v880 = vld [vmem:[%s1 + $0x28] sm:$0xff]
        %vm881 = vcmask 130048
        %v883 = vsel %vm881, %v877, 0
        %v886 = vsel %vm881, %v878, 0
        %v889 = vsel %vm881, %v879, 0
        %v892 = vsel %vm881, %v880, 0
        %894 = vmatpush.msra.mxu0 0.0
        %895 = vmatpush.msra.mxu0 0.0
        %896 = vmatpush.msra.mxu0 0.0
        %897 = vmatpush.msra.mxu0 0.0
        %898 = vmatpush.msra.mxu0 0.0
        %899 = vmatpush.msra.mxu0 0.0
        %900 = vmatpush.msra.mxu0 0.0
        %901 = vmatpush.msra.mxu0 0.0
        %902 = vmatpush.msra.mxu0 0.0
        %903 = vmatpush.msra.mxu0 0.0
        %904 = vmatpush.msra.mxu0 0.0
        %905 = vmatpush.msra.mxu0 0.0
        %906 = vmatpush.msra.mxu0 0.0
        %907 = vmatpush.msra.mxu0 0.0
        %908 = vmatpush.msra.mxu0 %v873
        %909 = vmatpush.msra.mxu0 %v869
        %910 = vmatmul.f32.gmra.mxu0 %v883
        %v911 = vpop.f32.mrf.mxu0
        %v912 = vadd.f32 0.0, %v911
        %913 = vmatmul.f32.gmra.mxu0 %v886
        %v914 = vpop.f32.mrf.mxu0
        %v915 = vadd.f32 0.0, %v914
        %916 = vmatmul.f32.gmra.mxu0 %v889
        %v917 = vpop.f32.mrf.mxu0
        %v918 = vadd.f32 0.0, %v917
        %919 = vmatmul.f32.gmra.mxu0 %v892
        %v920 = vpop.f32.mrf.mxu0
        %v921 = vadd.f32 0.0, %v920
        %922 = vdwg.mxu0
        %923 = vmatpush.msra.mxu0 0.0
        %924 = vmatpush.msra.mxu0 0.0
        %925 = vmatpush.msra.mxu0 0.0
        %926 = vmatpush.msra.mxu0 0.0
        %927 = vmatpush.msra.mxu0 0.0
        %928 = vmatpush.msra.mxu0 0.0
        %929 = vmatpush.msra.mxu0 0.0
        %930 = vmatpush.msra.mxu0 0.0
        %931 = vmatpush.msra.mxu0 0.0
        %932 = vmatpush.msra.mxu0 0.0
        %933 = vmatpush.msra.mxu0 0.0
        %934 = vmatpush.msra.mxu0 0.0
        %935 = vmatpush.msra.mxu0 0.0
        %936 = vmatpush.msra.mxu0 0.0
        %937 = vmatpush.msra.mxu0 %v874
        %938 = vmatpush.msra.mxu0 %v870
        %939 = vmatmul.f32.gmra.mxu0 %v883
        %v940 = vpop.f32.mrf.mxu0
        %v941 = vadd.f32 0.0, %v940
        %942 = vmatmul.f32.gmra.mxu0 %v886
        %v943 = vpop.f32.mrf.mxu0
        %v944 = vadd.f32 0.0, %v943
        %945 = vmatmul.f32.gmra.mxu0 %v889
        %v946 = vpop.f32.mrf.mxu0
        %v947 = vadd.f32 0.0, %v946
        %948 = vmatmul.f32.gmra.mxu0 %v892
        %v949 = vpop.f32.mrf.mxu0
        %v950 = vadd.f32 0.0, %v949
        %951 = vdwg.mxu0
        %952 = vmatpush.msra.mxu0 0.0
        %953 = vmatpush.msra.mxu0 0.0
        %954 = vmatpush.msra.mxu0 0.0
        %955 = vmatpush.msra.mxu0 0.0
        %956 = vmatpush.msra.mxu0 0.0
        %957 = vmatpush.msra.mxu0 0.0
        %958 = vmatpush.msra.mxu0 0.0
        %959 = vmatpush.msra.mxu0 0.0
        %960 = vmatpush.msra.mxu0 0.0
        %961 = vmatpush.msra.mxu0 0.0
        %962 = vmatpush.msra.mxu0 0.0
        %963 = vmatpush.msra.mxu0 0.0
        %964 = vmatpush.msra.mxu0 0.0
        %965 = vmatpush.msra.mxu0 0.0
        %966 = vmatpush.msra.mxu0 %v875
        %967 = vmatpush.msra.mxu0 %v871
        %968 = vmatmul.f32.gmra.mxu0 %v883
        %v969 = vpop.f32.mrf.mxu0
        %v970 = vadd.f32 0.0, %v969
        %971 = vmatmul.f32.gmra.mxu0 %v886
        %v972 = vpop.f32.mrf.mxu0
        %v973 = vadd.f32 0.0, %v972
        %974 = vmatmul.f32.gmra.mxu0 %v889
        %v975 = vpop.f32.mrf.mxu0
        %v976 = vadd.f32 0.0, %v975
        %977 = vmatmul.f32.gmra.mxu0 %v892
        %v978 = vpop.f32.mrf.mxu0
        %v979 = vadd.f32 0.0, %v978
        %980 = vdwg.mxu0
        %981 = vmatpush.msra.mxu0 0.0
        %982 = vmatpush.msra.mxu0 0.0
        %983 = vmatpush.msra.mxu0 0.0
        %984 = vmatpush.msra.mxu0 0.0
        %985 = vmatpush.msra.mxu0 0.0
        %986 = vmatpush.msra.mxu0 0.0
        %987 = vmatpush.msra.mxu0 0.0
        %988 = vmatpush.msra.mxu0 0.0
        %989 = vmatpush.msra.mxu0 0.0
        %990 = vmatpush.msra.mxu0 0.0
        %991 = vmatpush.msra.mxu0 0.0
        %992 = vmatpush.msra.mxu0 0.0
        %993 = vmatpush.msra.mxu0 0.0
        %994 = vmatpush.msra.mxu0 0.0
        %995 = vmatpush.msra.mxu0 %v876
        %996 = vmatpush.msra.mxu0 %v872
        %997 = vmatmul.f32.gmra.mxu0 %v883
        %v998 = vpop.f32.mrf.mxu0
        %v999 = vadd.f32 0.0, %v998
        %1000 = vmatmul.f32.gmra.mxu0 %v886
        %v1001 = vpop.f32.mrf.mxu0
        %v1002 = vadd.f32 0.0, %v1001
        %1003 = vmatmul.f32.gmra.mxu0 %v889
        %v1004 = vpop.f32.mrf.mxu0
        %v1005 = vadd.f32 0.0, %v1004
        %1006 = vmatmul.f32.gmra.mxu0 %v892
        %v1007 = vpop.f32.mrf.mxu0
        %v1008 = vadd.f32 0.0, %v1007
        %1009 = vdwg.mxu0
        // Predicated region
        $region53: #{tpu_custom_call.1} parent=51 // pred_check
          %p1010 = pneg %p227
        $region54: #{tpu_custom_call.1} parent=51 // pred_check_branch
          %1012 = sbr.rel (%p1010) target = $region56
        $region55: #{tpu_custom_call.1} parent=51 // pred_region
          %v1013 = vld [vmem:[#allocation3] sm:$0xff]
          %v1014 = vld [vmem:[#allocation3 + $0x8] sm:$0xff]
          %v1015 = vld [vmem:[#allocation3 + $0x10] sm:$0xff]
          %v1016 = vld [vmem:[#allocation3 + $0x18] sm:$0xff]
          %1017 = vmatpush.msra.mxu0 1.0
          %1018 = vmatpush.msra.mxu0 1.0
          %1019 = vmatpush.msra.mxu0 1.0
          %1020 = vmatpush.msra.mxu0 1.0
          %1021 = vmatpush.msra.mxu0 1.0
          %1022 = vmatpush.msra.mxu0 1.0
          %1023 = vmatpush.msra.mxu0 1.0
          %1024 = vmatpush.msra.mxu0 1.0
          %1025 = vmatpush.msra.mxu0 1.0
          %1026 = vmatpush.msra.mxu0 1.0
          %1027 = vmatpush.msra.mxu0 1.0
          %1028 = vmatpush.msra.mxu0 1.0
          %1029 = vmatpush.msra.mxu0 1.0
          %1030 = vmatpush.msra.mxu0 1.0
          %1031 = vmatpush.msra.mxu0 1.0
          %1032 = vmatpush.msra.mxu0 1.0
          %1033 = vmatmul.f32.gmra.mxu0 %v912
          %v1034 = vpop.f32.mrf.mxu0
          %v1035 = vadd.f32 0.0, %v1034
          %1036 = vmatmul.f32.gmra.mxu0 %v915
          %v1037 = vpop.f32.mrf.mxu0
          %v1038 = vadd.f32 0.0, %v1037
          %1039 = vmatmul.f32.gmra.mxu0 %v918
          %v1040 = vpop.f32.mrf.mxu0
          %v1041 = vadd.f32 0.0, %v1040
          %1042 = vmatmul.f32.gmra.mxu0 %v921
          %v1043 = vpop.f32.mrf.mxu0
          %v1044 = vadd.f32 0.0, %v1043
          %1045 = vdwg.mxu0
          %1046 = vmatpush.msra.mxu0 1.0
          %1047 = vmatpush.msra.mxu0 1.0
          %1048 = vmatpush.msra.mxu0 1.0
          %1049 = vmatpush.msra.mxu0 1.0
          %1050 = vmatpush.msra.mxu0 1.0
          %1051 = vmatpush.msra.mxu0 1.0
          %1052 = vmatpush.msra.mxu0 1.0
          %1053 = vmatpush.msra.mxu0 1.0
          %1054 = vmatpush.msra.mxu0 1.0
          %1055 = vmatpush.msra.mxu0 1.0
          %1056 = vmatpush.msra.mxu0 1.0
          %1057 = vmatpush.msra.mxu0 1.0
          %1058 = vmatpush.msra.mxu0 1.0
          %1059 = vmatpush.msra.mxu0 1.0
          %1060 = vmatpush.msra.mxu0 1.0
          %1061 = vmatpush.msra.mxu0 1.0
          %1062 = vmatmul.f32.gmra.mxu0 %v941
          %v1063 = vpop.f32.mrf.mxu0
          %v1064 = vadd.f32 %v1035, %v1063
          %1065 = vmatmul.f32.gmra.mxu0 %v944
          %v1066 = vpop.f32.mrf.mxu0
          %v1067 = vadd.f32 %v1038, %v1066
          %1068 = vmatmul.f32.gmra.mxu0 %v947
          %v1069 = vpop.f32.mrf.mxu0
          %v1070 = vadd.f32 %v1041, %v1069
          %1071 = vmatmul.f32.gmra.mxu0 %v950
          %v1072 = vpop.f32.mrf.mxu0
          %v1073 = vadd.f32 %v1044, %v1072
          %1074 = vdwg.mxu0
          %1075 = vmatpush.msra.mxu0 1.0
          %1076 = vmatpush.msra.mxu0 1.0
          %1077 = vmatpush.msra.mxu0 1.0
          %1078 = vmatpush.msra.mxu0 1.0
          %1079 = vmatpush.msra.mxu0 1.0
          %1080 = vmatpush.msra.mxu0 1.0
          %1081 = vmatpush.msra.mxu0 1.0
          %1082 = vmatpush.msra.mxu0 1.0
          %1083 = vmatpush.msra.mxu0 1.0
          %1084 = vmatpush.msra.mxu0 1.0
          %1085 = vmatpush.msra.mxu0 1.0
          %1086 = vmatpush.msra.mxu0 1.0
          %1087 = vmatpush.msra.mxu0 1.0
          %1088 = vmatpush.msra.mxu0 1.0
          %1089 = vmatpush.msra.mxu0 1.0
          %1090 = vmatpush.msra.mxu0 1.0
          %1091 = vmatmul.f32.gmra.mxu0 %v970
          %v1092 = vpop.f32.mrf.mxu0
          %v1093 = vadd.f32 %v1064, %v1092
          %1094 = vmatmul.f32.gmra.mxu0 %v973
          %v1095 = vpop.f32.mrf.mxu0
          %v1096 = vadd.f32 %v1067, %v1095
          %1097 = vmatmul.f32.gmra.mxu0 %v976
          %v1098 = vpop.f32.mrf.mxu0
          %v1099 = vadd.f32 %v1070, %v1098
          %1100 = vmatmul.f32.gmra.mxu0 %v979
          %v1101 = vpop.f32.mrf.mxu0
          %v1102 = vadd.f32 %v1073, %v1101
          %1103 = vdwg.mxu0
          %1104 = vmatpush.msra.mxu0 1.0
          %1105 = vmatpush.msra.mxu0 1.0
          %1106 = vmatpush.msra.mxu0 1.0
          %1107 = vmatpush.msra.mxu0 1.0
          %1108 = vmatpush.msra.mxu0 1.0
          %1109 = vmatpush.msra.mxu0 1.0
          %1110 = vmatpush.msra.mxu0 1.0
          %1111 = vmatpush.msra.mxu0 1.0
          %1112 = vmatpush.msra.mxu0 1.0
          %1113 = vmatpush.msra.mxu0 1.0
          %1114 = vmatpush.msra.mxu0 1.0
          %1115 = vmatpush.msra.mxu0 1.0
          %1116 = vmatpush.msra.mxu0 1.0
          %1117 = vmatpush.msra.mxu0 1.0
          %1118 = vmatpush.msra.mxu0 1.0
          %1119 = vmatpush.msra.mxu0 1.0
          %1120 = vmatmul.f32.gmra.mxu0 %v999
          %v1121 = vpop.f32.mrf.mxu0
          %v1122 = vadd.f32 %v1093, %v1121
          %1123 = vmatmul.f32.gmra.mxu0 %v1002
          %v1124 = vpop.f32.mrf.mxu0
          %v1125 = vadd.f32 %v1096, %v1124
          %1126 = vmatmul.f32.gmra.mxu0 %v1005
          %v1127 = vpop.f32.mrf.mxu0
          %v1128 = vadd.f32 %v1099, %v1127
          %1129 = vmatmul.f32.gmra.mxu0 %v1008
          %v1130 = vpop.f32.mrf.mxu0
          %v1131 = vadd.f32 %v1102, %v1130
          %1132 = vdwg.mxu0
          %v1133 = vadd.f32 %v1013, %v1122
          %v1134 = vadd.f32 %v1014, %v1125
          %v1135 = vadd.f32 %v1015, %v1128
          %v1136 = vadd.f32 %v1016, %v1131
          %vm1137 = vcmask 7168
          %1138 = vst.msk [vmem:[#allocation3] sm:$0xff] %vm1137, %v1133
          %1139 = vst.msk [vmem:[#allocation3 + $0x8] sm:$0xff] %vm1137, %v1134
          %1140 = vst.msk [vmem:[#allocation3 + $0x10] sm:$0xff] %vm1137, %v1135
          %1141 = vst.msk [vmem:[#allocation3 + $0x18] sm:$0xff] %vm1137, %v1136
          %v1142 = vld [vmem:[#allocation3] sm:$0xff]
          %v1143 = vld [vmem:[#allocation3 + $0x8] sm:$0xff]
          %v1144 = vld [vmem:[#allocation3 + $0x10] sm:$0xff]
          %v1145 = vld [vmem:[#allocation3 + $0x18] sm:$0xff]
          %v1146 = vmul.f32 %v912, %v912
          %v1147 = vmul.f32 %v941, %v941
          %v1148 = vmul.f32 %v970, %v970
          %v1149 = vmul.f32 %v999, %v999
          %v1150 = vmul.f32 %v915, %v915
          %v1151 = vmul.f32 %v944, %v944
          %v1152 = vmul.f32 %v973, %v973
          %v1153 = vmul.f32 %v1002, %v1002
          %v1154 = vmul.f32 %v918, %v918
          %v1155 = vmul.f32 %v947, %v947
          %v1156 = vmul.f32 %v976, %v976
          %v1157 = vmul.f32 %v1005, %v1005
          %v1158 = vmul.f32 %v921, %v921
          %v1159 = vmul.f32 %v950, %v950
          %v1160 = vmul.f32 %v979, %v979
          %v1161 = vmul.f32 %v1008, %v1008
          %1162 = vmatpush.msra.mxu0 1.0
          %1163 = vmatpush.msra.mxu0 1.0
          %1164 = vmatpush.msra.mxu0 1.0
          %1165 = vmatpush.msra.mxu0 1.0
          %1166 = vmatpush.msra.mxu0 1.0
          %1167 = vmatpush.msra.mxu0 1.0
          %1168 = vmatpush.msra.mxu0 1.0
          %1169 = vmatpush.msra.mxu0 1.0
          %1170 = vmatpush.msra.mxu0 1.0
          %1171 = vmatpush.msra.mxu0 1.0
          %1172 = vmatpush.msra.mxu0 1.0
          %1173 = vmatpush.msra.mxu0 1.0
          %1174 = vmatpush.msra.mxu0 1.0
          %1175 = vmatpush.msra.mxu0 1.0
          %1176 = vmatpush.msra.mxu0 1.0
          %1177 = vmatpush.msra.mxu0 1.0
          %1178 = vmatmul.f32.gmra.mxu0 %v1146
          %v1179 = vpop.f32.mrf.mxu0
          %v1180 = vadd.f32 0.0, %v1179
          %1181 = vmatmul.f32.gmra.mxu0 %v1150
          %v1182 = vpop.f32.mrf.mxu0
          %v1183 = vadd.f32 0.0, %v1182
          %1184 = vmatmul.f32.gmra.mxu0 %v1154
          %v1185 = vpop.f32.mrf.mxu0
          %v1186 = vadd.f32 0.0, %v1185
          %1187 = vmatmul.f32.gmra.mxu0 %v1158
          %v1188 = vpop.f32.mrf.mxu0
          %v1189 = vadd.f32 0.0, %v1188
          %1190 = vdwg.mxu0
          %1191 = vmatpush.msra.mxu0 1.0
          %1192 = vmatpush.msra.mxu0 1.0
          %1193 = vmatpush.msra.mxu0 1.0
          %1194 = vmatpush.msra.mxu0 1.0
          %1195 = vmatpush.msra.mxu0 1.0
          %1196 = vmatpush.msra.mxu0 1.0
          %1197 = vmatpush.msra.mxu0 1.0
          %1198 = vmatpush.msra.mxu0 1.0
          %1199 = vmatpush.msra.mxu0 1.0
          %1200 = vmatpush.msra.mxu0 1.0
          %1201 = vmatpush.msra.mxu0 1.0
          %1202 = vmatpush.msra.mxu0 1.0
          %1203 = vmatpush.msra.mxu0 1.0
          %1204 = vmatpush.msra.mxu0 1.0
          %1205 = vmatpush.msra.mxu0 1.0
          %1206 = vmatpush.msra.mxu0 1.0
          %1207 = vmatmul.f32.gmra.mxu0 %v1147
          %v1208 = vpop.f32.mrf.mxu0
          %v1209 = vadd.f32 %v1180, %v1208
          %1210 = vmatmul.f32.gmra.mxu0 %v1151
          %v1211 = vpop.f32.mrf.mxu0
          %v1212 = vadd.f32 %v1183, %v1211
          %1213 = vmatmul.f32.gmra.mxu0 %v1155
          %v1214 = vpop.f32.mrf.mxu0
          %v1215 = vadd.f32 %v1186, %v1214
          %1216 = vmatmul.f32.gmra.mxu0 %v1159
          %v1217 = vpop.f32.mrf.mxu0
          %v1218 = vadd.f32 %v1189, %v1217
          %1219 = vdwg.mxu0
          %1220 = vmatpush.msra.mxu0 1.0
          %1221 = vmatpush.msra.mxu0 1.0
          %1222 = vmatpush.msra.mxu0 1.0
          %1223 = vmatpush.msra.mxu0 1.0
          %1224 = vmatpush.msra.mxu0 1.0
          %1225 = vmatpush.msra.mxu0 1.0
          %1226 = vmatpush.msra.mxu0 1.0
          %1227 = vmatpush.msra.mxu0 1.0
          %1228 = vmatpush.msra.mxu0 1.0
          %1229 = vmatpush.msra.mxu0 1.0
          %1230 = vmatpush.msra.mxu0 1.0
          %1231 = vmatpush.msra.mxu0 1.0
          %1232 = vmatpush.msra.mxu0 1.0
          %1233 = vmatpush.msra.mxu0 1.0
          %1234 = vmatpush.msra.mxu0 1.0
          %1235 = vmatpush.msra.mxu0 1.0
          %1236 = vmatmul.f32.gmra.mxu0 %v1148
          %v1237 = vpop.f32.mrf.mxu0
          %v1238 = vadd.f32 %v1209, %v1237
          %1239 = vmatmul.f32.gmra.mxu0 %v1152
          %v1240 = vpop.f32.mrf.mxu0
          %v1241 = vadd.f32 %v1212, %v1240
          %1242 = vmatmul.f32.gmra.mxu0 %v1156
          %v1243 = vpop.f32.mrf.mxu0
          %v1244 = vadd.f32 %v1215, %v1243
          %1245 = vmatmul.f32.gmra.mxu0 %v1160
          %v1246 = vpop.f32.mrf.mxu0
          %v1247 = vadd.f32 %v1218, %v1246
          %1248 = vdwg.mxu0
          %1249 = vmatpush.msra.mxu0 1.0
          %1250 = vmatpush.msra.mxu0 1.0
          %1251 = vmatpush.msra.mxu0 1.0
          %1252 = vmatpush.msra.mxu0 1.0
          %1253 = vmatpush.msra.mxu0 1.0
          %1254 = vmatpush.msra.mxu0 1.0
          %1255 = vmatpush.msra.mxu0 1.0
          %1256 = vmatpush.msra.mxu0 1.0
          %1257 = vmatpush.msra.mxu0 1.0
          %1258 = vmatpush.msra.mxu0 1.0
          %1259 = vmatpush.msra.mxu0 1.0
          %1260 = vmatpush.msra.mxu0 1.0
          %1261 = vmatpush.msra.mxu0 1.0
          %1262 = vmatpush.msra.mxu0 1.0
          %1263 = vmatpush.msra.mxu0 1.0
          %1264 = vmatpush.msra.mxu0 1.0
          %1265 = vmatmul.f32.gmra.mxu0 %v1149
          %v1266 = vpop.f32.mrf.mxu0
          %v1267 = vadd.f32 %v1238, %v1266
          %1268 = vmatmul.f32.gmra.mxu0 %v1153
          %v1269 = vpop.f32.mrf.mxu0
          %v1270 = vadd.f32 %v1241, %v1269
          %1271 = vmatmul.f32.gmra.mxu0 %v1157
          %v1272 = vpop.f32.mrf.mxu0
          %v1273 = vadd.f32 %v1244, %v1272
          %1274 = vmatmul.f32.gmra.mxu0 %v1161
          %v1275 = vpop.f32.mrf.mxu0
          %v1276 = vadd.f32 %v1247, %v1275
          %1277 = vdwg.mxu0
          %1282 = vrot.lane.b32.xlu0 %v1267, 1
          %v1283 = vpop.permute.xlu0 %1282
          %1284 = vrot.lane.b32.xlu0 %v1270, 1
          %v1285 = vpop.permute.xlu0 %1284
          %1286 = vrot.lane.b32.xlu0 %v1273, 1
          %v1287 = vpop.permute.xlu0 %1286
          %1288 = vrot.lane.b32.xlu0 %v1276, 1
          %v1289 = vpop.permute.xlu0 %1288
          %v1294 = vadd.f32 %v1142, %v1283
          %v1295 = vadd.f32 %v1143, %v1285
          %v1296 = vadd.f32 %v1144, %v1287
          %v1297 = vadd.f32 %v1145, %v1289
          %vm1298 = vcmask 15368
          %1299 = vst.msk [vmem:[#allocation3] sm:$0xff] %vm1298, %v1294
          %1300 = vst.msk [vmem:[#allocation3 + $0x8] sm:$0xff] %vm1298, %v1295
          %1301 = vst.msk [vmem:[#allocation3 + $0x10] sm:$0xff] %vm1298, %v1296
          %1302 = vst.msk [vmem:[#allocation3 + $0x18] sm:$0xff] %vm1298, %v1297
        $region56: #{tpu_custom_call.1} parent=51 // pred_fallthru
          _
        // Predicated region
        $region57: #{tpu_custom_call.1} parent=51 // pred_check
          %p1303 = pneg %p302
        $region58: #{tpu_custom_call.1} parent=51 // pred_check_branch
          %1305 = sbr.rel (%p1303) target = $region60
        $region59: #{tpu_custom_call.1} parent=51 // pred_region
          %v1306 = vld [vmem:[#allocation5] sm:$0xff]
          %v1307 = vld [vmem:[#allocation5 + $0x8] sm:$0xff]
          %v1308 = vld [vmem:[#allocation5 + $0x10] sm:$0xff]
          %v1309 = vld [vmem:[#allocation5 + $0x18] sm:$0xff]
          %1311 = vset.pattern.permute.xlu0 2
          %1312 = vperm.xlu0 %1311, %v1306
          %v1313 = vpop.permute.xlu0 %1312
          %1316 = vset.pattern.permute.xlu0 2
          %1317 = vperm.xlu0 %1316, %v1307
          %v1318 = vpop.permute.xlu0 %1317
          %1321 = vset.pattern.permute.xlu0 2
          %1322 = vperm.xlu0 %1321, %v1308
          %v1323 = vpop.permute.xlu0 %1322
          %1326 = vset.pattern.permute.xlu0 2
          %1327 = vperm.xlu0 %1326, %v1309
          %v1328 = vpop.permute.xlu0 %1327
          %v1330 = vmul.f32 %v912, %v1313
          %v1331 = vmul.f32 %v941, %v1313
          %v1332 = vmul.f32 %v970, %v1313
          %v1333 = vmul.f32 %v999, %v1313
          %v1334 = vmul.f32 %v915, %v1318
          %v1335 = vmul.f32 %v944, %v1318
          %v1336 = vmul.f32 %v973, %v1318
          %v1337 = vmul.f32 %v1002, %v1318
          %v1338 = vmul.f32 %v918, %v1323
          %v1339 = vmul.f32 %v947, %v1323
          %v1340 = vmul.f32 %v976, %v1323
          %v1341 = vmul.f32 %v1005, %v1323
          %v1342 = vmul.f32 %v921, %v1328
          %v1343 = vmul.f32 %v950, %v1328
          %v1344 = vmul.f32 %v979, %v1328
          %v1345 = vmul.f32 %v1008, %v1328
          %1346 = vset.pattern.permute.xlu0 3
          %1347 = vperm.xlu0 %1346, %v1306
          %v1348 = vpop.permute.xlu0 %1347
          %1350 = vset.pattern.permute.xlu0 3
          %1351 = vperm.xlu0 %1350, %v1307
          %v1352 = vpop.permute.xlu0 %1351
          %1354 = vset.pattern.permute.xlu0 3
          %1355 = vperm.xlu0 %1354, %v1308
          %v1356 = vpop.permute.xlu0 %1355
          %1358 = vset.pattern.permute.xlu0 3
          %1359 = vperm.xlu0 %1358, %v1309
          %v1360 = vpop.permute.xlu0 %1359
          %v1362 = vadd.f32 %v1330, %v1348
          %v1363 = vadd.f32 %v1331, %v1348
          %v1364 = vadd.f32 %v1332, %v1348
          %v1365 = vadd.f32 %v1333, %v1348
          %v1366 = vadd.f32 %v1334, %v1352
          %v1367 = vadd.f32 %v1335, %v1352
          %v1368 = vadd.f32 %v1336, %v1352
          %v1369 = vadd.f32 %v1337, %v1352
          %v1370 = vadd.f32 %v1338, %v1356
          %v1371 = vadd.f32 %v1339, %v1356
          %v1372 = vadd.f32 %v1340, %v1356
          %v1373 = vadd.f32 %v1341, %v1356
          %v1374 = vadd.f32 %v1342, %v1360
          %v1375 = vadd.f32 %v1343, %v1360
          %v1376 = vadd.f32 %v1344, %v1360
          %v1377 = vadd.f32 %v1345, %v1360
          %v1378 = vmax.f32 %v1362, 0.0
          %v1379 = vmax.f32 %v1363, 0.0
          %v1380 = vmax.f32 %v1364, 0.0
          %v1381 = vmax.f32 %v1365, 0.0
          %v1382 = vmax.f32 %v1366, 0.0
          %v1383 = vmax.f32 %v1367, 0.0
          %v1384 = vmax.f32 %v1368, 0.0
          %v1385 = vmax.f32 %v1369, 0.0
          %v1386 = vmax.f32 %v1370, 0.0
          %v1387 = vmax.f32 %v1371, 0.0
          %v1388 = vmax.f32 %v1372, 0.0
          %v1389 = vmax.f32 %v1373, 0.0
          %v1390 = vmax.f32 %v1374, 0.0
          %v1391 = vmax.f32 %v1375, 0.0
          %v1392 = vmax.f32 %v1376, 0.0
          %v1393 = vmax.f32 %v1377, 0.0
          %v1394 = vld [vmem:[%s1 + $0x30] sm:$0xff]
          %v1395 = vld [vmem:[%s1 + $0x38] sm:$0xff]
          %v1396 = vld [vmem:[%s1 + $0x40] sm:$0xff]
          %v1397 = vld [vmem:[%s1 + $0x48] sm:$0xff]
          %v1398 = vld [vmem:[%s1 + $0x50] sm:$0xff]
          %v1399 = vld [vmem:[%s1 + $0x58] sm:$0xff]
          %v1400 = vld [vmem:[%s1 + $0x60] sm:$0xff]
          %v1401 = vld [vmem:[%s1 + $0x68] sm:$0xff]
          %vm1402 = vcmask 261120
          %v1404 = vsel %vm1402, %v1394, 0
          %v1407 = vsel %vm1402, %v1395, 0
          %v1410 = vsel %vm1402, %v1396, 0
          %v1413 = vsel %vm1402, %v1397, 0
          %v1416 = vsel %vm1402, %v1398, 0
          %v1419 = vsel %vm1402, %v1399, 0
          %v1422 = vsel %vm1402, %v1400, 0
          %v1425 = vsel %vm1402, %v1401, 0
          %1427 = vmatpush.msra.mxu0 0.0
          %1428 = vmatpush.msra.mxu0 0.0
          %1429 = vmatpush.msra.mxu0 0.0
          %1430 = vmatpush.msra.mxu0 0.0
          %1431 = vmatpush.msra.mxu0 0.0
          %1432 = vmatpush.msra.mxu0 0.0
          %1433 = vmatpush.msra.mxu0 0.0
          %1434 = vmatpush.msra.mxu0 0.0
          %1435 = vmatpush.msra.mxu0 0.0
          %1436 = vmatpush.msra.mxu0 0.0
          %1437 = vmatpush.msra.mxu0 0.0
          %1438 = vmatpush.msra.mxu0 0.0
          %1439 = vmatpush.msra.mxu0 %v1390
          %1440 = vmatpush.msra.mxu0 %v1386
          %1441 = vmatpush.msra.mxu0 %v1382
          %1442 = vmatpush.msra.mxu0 %v1378
          %1443 = vmatmul.f32.gmra.mxu0 %v1404
          %v1444 = vpop.f32.mrf.mxu0
          %v1445 = vadd.f32 0.0, %v1444
          %1446 = vmatmul.f32.gmra.mxu0 %v1407
          %v1447 = vpop.f32.mrf.mxu0
          %v1448 = vadd.f32 0.0, %v1447
          %1449 = vmatmul.f32.gmra.mxu0 %v1410
          %v1450 = vpop.f32.mrf.mxu0
          %v1451 = vadd.f32 0.0, %v1450
          %1452 = vmatmul.f32.gmra.mxu0 %v1413
          %v1453 = vpop.f32.mrf.mxu0
          %v1454 = vadd.f32 0.0, %v1453
          %1455 = vmatmul.f32.gmra.mxu0 %v1416
          %v1456 = vpop.f32.mrf.mxu0
          %v1457 = vadd.f32 0.0, %v1456
          %1458 = vmatmul.f32.gmra.mxu0 %v1419
          %v1459 = vpop.f32.mrf.mxu0
          %v1460 = vadd.f32 0.0, %v1459
          %1461 = vmatmul.f32.gmra.mxu0 %v1422
          %v1462 = vpop.f32.mrf.mxu0
          %v1463 = vadd.f32 0.0, %v1462
          %1464 = vmatmul.f32.gmra.mxu0 %v1425
          %v1465 = vpop.f32.mrf.mxu0
          %v1466 = vadd.f32 0.0, %v1465
          %1467 = vdwg.mxu0
          %1468 = vmatpush.msra.mxu0 0.0
          %1469 = vmatpush.msra.mxu0 0.0
          %1470 = vmatpush.msra.mxu0 0.0
          %1471 = vmatpush.msra.mxu0 0.0
          %1472 = vmatpush.msra.mxu0 0.0
          %1473 = vmatpush.msra.mxu0 0.0
          %1474 = vmatpush.msra.mxu0 0.0
          %1475 = vmatpush.msra.mxu0 0.0
          %1476 = vmatpush.msra.mxu0 0.0
          %1477 = vmatpush.msra.mxu0 0.0
          %1478 = vmatpush.msra.mxu0 0.0
          %1479 = vmatpush.msra.mxu0 0.0
          %1480 = vmatpush.msra.mxu0 %v1391
          %1481 = vmatpush.msra.mxu0 %v1387
          %1482 = vmatpush.msra.mxu0 %v1383
          %1483 = vmatpush.msra.mxu0 %v1379
          %1484 = vmatmul.f32.gmra.mxu0 %v1404
          %v1485 = vpop.f32.mrf.mxu0
          %v1486 = vadd.f32 0.0, %v1485
          %1487 = vmatmul.f32.gmra.mxu0 %v1407
          %v1488 = vpop.f32.mrf.mxu0
          %v1489 = vadd.f32 0.0, %v1488
          %1490 = vmatmul.f32.gmra.mxu0 %v1410
          %v1491 = vpop.f32.mrf.mxu0
          %v1492 = vadd.f32 0.0, %v1491
          %1493 = vmatmul.f32.gmra.mxu0 %v1413
          %v1494 = vpop.f32.mrf.mxu0
          %v1495 = vadd.f32 0.0, %v1494
          %1496 = vmatmul.f32.gmra.mxu0 %v1416
          %v1497 = vpop.f32.mrf.mxu0
          %v1498 = vadd.f32 0.0, %v1497
          %1499 = vmatmul.f32.gmra.mxu0 %v1419
          %v1500 = vpop.f32.mrf.mxu0
          %v1501 = vadd.f32 0.0, %v1500
          %1502 = vmatmul.f32.gmra.mxu0 %v1422
          %v1503 = vpop.f32.mrf.mxu0
          %v1504 = vadd.f32 0.0, %v1503
          %1505 = vmatmul.f32.gmra.mxu0 %v1425
          %v1506 = vpop.f32.mrf.mxu0
          %v1507 = vadd.f32 0.0, %v1506
          %1508 = vdwg.mxu0
          %1509 = vmatpush.msra.mxu0 0.0
          %1510 = vmatpush.msra.mxu0 0.0
          %1511 = vmatpush.msra.mxu0 0.0
          %1512 = vmatpush.msra.mxu0 0.0
          %1513 = vmatpush.msra.mxu0 0.0
          %1514 = vmatpush.msra.mxu0 0.0
          %1515 = vmatpush.msra.mxu0 0.0
          %1516 = vmatpush.msra.mxu0 0.0
          %1517 = vmatpush.msra.mxu0 0.0
          %1518 = vmatpush.msra.mxu0 0.0
          %1519 = vmatpush.msra.mxu0 0.0
          %1520 = vmatpush.msra.mxu0 0.0
          %1521 = vmatpush.msra.mxu0 %v1392
          %1522 = vmatpush.msra.mxu0 %v1388
          %1523 = vmatpush.msra.mxu0 %v1384
          %1524 = vmatpush.msra.mxu0 %v1380
          %1525 = vmatmul.f32.gmra.mxu0 %v1404
          %v1526 = vpop.f32.mrf.mxu0
          %v1527 = vadd.f32 0.0, %v1526
          %1528 = vmatmul.f32.gmra.mxu0 %v1407
          %v1529 = vpop.f32.mrf.mxu0
          %v1530 = vadd.f32 0.0, %v1529
          %1531 = vmatmul.f32.gmra.mxu0 %v1410
          %v1532 = vpop.f32.mrf.mxu0
          %v1533 = vadd.f32 0.0, %v1532
          %1534 = vmatmul.f32.gmra.mxu0 %v1413
          %v1535 = vpop.f32.mrf.mxu0
          %v1536 = vadd.f32 0.0, %v1535
          %1537 = vmatmul.f32.gmra.mxu0 %v1416
          %v1538 = vpop.f32.mrf.mxu0
          %v1539 = vadd.f32 0.0, %v1538
          %1540 = vmatmul.f32.gmra.mxu0 %v1419
          %v1541 = vpop.f32.mrf.mxu0
          %v1542 = vadd.f32 0.0, %v1541
          %1543 = vmatmul.f32.gmra.mxu0 %v1422
          %v1544 = vpop.f32.mrf.mxu0
          %v1545 = vadd.f32 0.0, %v1544
          %1546 = vmatmul.f32.gmra.mxu0 %v1425
          %v1547 = vpop.f32.mrf.mxu0
          %v1548 = vadd.f32 0.0, %v1547
          %1549 = vdwg.mxu0
          %1550 = vmatpush.msra.mxu0 0.0
          %1551 = vmatpush.msra.mxu0 0.0
          %1552 = vmatpush.msra.mxu0 0.0
          %1553 = vmatpush.msra.mxu0 0.0
          %1554 = vmatpush.msra.mxu0 0.0
          %1555 = vmatpush.msra.mxu0 0.0
          %1556 = vmatpush.msra.mxu0 0.0
          %1557 = vmatpush.msra.mxu0 0.0
          %1558 = vmatpush.msra.mxu0 0.0
          %1559 = vmatpush.msra.mxu0 0.0
          %1560 = vmatpush.msra.mxu0 0.0
          %1561 = vmatpush.msra.mxu0 0.0
          %1562 = vmatpush.msra.mxu0 %v1393
          %1563 = vmatpush.msra.mxu0 %v1389
          %1564 = vmatpush.msra.mxu0 %v1385
          %1565 = vmatpush.msra.mxu0 %v1381
          %1566 = vmatmul.f32.gmra.mxu0 %v1404
          %v1567 = vpop.f32.mrf.mxu0
          %v1568 = vadd.f32 0.0, %v1567
          %1569 = vmatmul.f32.gmra.mxu0 %v1407
          %v1570 = vpop.f32.mrf.mxu0
          %v1571 = vadd.f32 0.0, %v1570
          %1572 = vmatmul.f32.gmra.mxu0 %v1410
          %v1573 = vpop.f32.mrf.mxu0
          %v1574 = vadd.f32 0.0, %v1573
          %1575 = vmatmul.f32.gmra.mxu0 %v1413
          %v1576 = vpop.f32.mrf.mxu0
          %v1577 = vadd.f32 0.0, %v1576
          %1578 = vmatmul.f32.gmra.mxu0 %v1416
          %v1579 = vpop.f32.mrf.mxu0
          %v1580 = vadd.f32 0.0, %v1579
          %1581 = vmatmul.f32.gmra.mxu0 %v1419
          %v1582 = vpop.f32.mrf.mxu0
          %v1583 = vadd.f32 0.0, %v1582
          %1584 = vmatmul.f32.gmra.mxu0 %v1422
          %v1585 = vpop.f32.mrf.mxu0
          %v1586 = vadd.f32 0.0, %v1585
          %1587 = vmatmul.f32.gmra.mxu0 %v1425
          %v1588 = vpop.f32.mrf.mxu0
          %v1589 = vadd.f32 0.0, %v1588
          %1590 = vdwg.mxu0
          %v1591 = vld [vmem:[#allocation4] sm:$0xff]
          %v1592 = vld [vmem:[#allocation4 + $0x8] sm:$0xff]
          %v1593 = vld [vmem:[#allocation4 + $0x10] sm:$0xff]
          %v1594 = vld [vmem:[#allocation4 + $0x18] sm:$0xff]
          %v1595 = vld [vmem:[#allocation4 + $0x20] sm:$0xff]
          %v1596 = vld [vmem:[#allocation4 + $0x28] sm:$0xff]
          %v1597 = vld [vmem:[#allocation4 + $0x30] sm:$0xff]
          %v1598 = vld [vmem:[#allocation4 + $0x38] sm:$0xff]
          %1599 = vmatpush.msra.mxu0 1.0
          %1600 = vmatpush.msra.mxu0 1.0
          %1601 = vmatpush.msra.mxu0 1.0
          %1602 = vmatpush.msra.mxu0 1.0
          %1603 = vmatpush.msra.mxu0 1.0
          %1604 = vmatpush.msra.mxu0 1.0
          %1605 = vmatpush.msra.mxu0 1.0
          %1606 = vmatpush.msra.mxu0 1.0
          %1607 = vmatpush.msra.mxu0 1.0
          %1608 = vmatpush.msra.mxu0 1.0
          %1609 = vmatpush.msra.mxu0 1.0
          %1610 = vmatpush.msra.mxu0 1.0
          %1611 = vmatpush.msra.mxu0 1.0
          %1612 = vmatpush.msra.mxu0 1.0
          %1613 = vmatpush.msra.mxu0 1.0
          %1614 = vmatpush.msra.mxu0 1.0
          %1615 = vmatmul.f32.gmra.mxu0 %v1445
          %v1616 = vpop.f32.mrf.mxu0
          %v1617 = vadd.f32 0.0, %v1616
          %1618 = vmatmul.f32.gmra.mxu0 %v1448
          %v1619 = vpop.f32.mrf.mxu0
          %v1620 = vadd.f32 0.0, %v1619
          %1621 = vmatmul.f32.gmra.mxu0 %v1451
          %v1622 = vpop.f32.mrf.mxu0
          %v1623 = vadd.f32 0.0, %v1622
          %1624 = vmatmul.f32.gmra.mxu0 %v1454
          %v1625 = vpop.f32.mrf.mxu0
          %v1626 = vadd.f32 0.0, %v1625
          %1627 = vmatmul.f32.gmra.mxu0 %v1457
          %v1628 = vpop.f32.mrf.mxu0
          %v1629 = vadd.f32 0.0, %v1628
          %1630 = vmatmul.f32.gmra.mxu0 %v1460
          %v1631 = vpop.f32.mrf.mxu0
          %v1632 = vadd.f32 0.0, %v1631
          %1633 = vmatmul.f32.gmra.mxu0 %v1463
          %v1634 = vpop.f32.mrf.mxu0
          %v1635 = vadd.f32 0.0, %v1634
          %1636 = vmatmul.f32.gmra.mxu0 %v1466
          %v1637 = vpop.f32.mrf.mxu0
          %v1638 = vadd.f32 0.0, %v1637
          %1639 = vdwg.mxu0
          %1640 = vmatpush.msra.mxu0 1.0
          %1641 = vmatpush.msra.mxu0 1.0
          %1642 = vmatpush.msra.mxu0 1.0
          %1643 = vmatpush.msra.mxu0 1.0
          %1644 = vmatpush.msra.mxu0 1.0
          %1645 = vmatpush.msra.mxu0 1.0
          %1646 = vmatpush.msra.mxu0 1.0
          %1647 = vmatpush.msra.mxu0 1.0
          %1648 = vmatpush.msra.mxu0 1.0
          %1649 = vmatpush.msra.mxu0 1.0
          %1650 = vmatpush.msra.mxu0 1.0
          %1651 = vmatpush.msra.mxu0 1.0
          %1652 = vmatpush.msra.mxu0 1.0
          %1653 = vmatpush.msra.mxu0 1.0
          %1654 = vmatpush.msra.mxu0 1.0
          %1655 = vmatpush.msra.mxu0 1.0
          %1656 = vmatmul.f32.gmra.mxu0 %v1486
          %v1657 = vpop.f32.mrf.mxu0
          %v1658 = vadd.f32 %v1617, %v1657
          %1659 = vmatmul.f32.gmra.mxu0 %v1489
          %v1660 = vpop.f32.mrf.mxu0
          %v1661 = vadd.f32 %v1620, %v1660
          %1662 = vmatmul.f32.gmra.mxu0 %v1492
          %v1663 = vpop.f32.mrf.mxu0
          %v1664 = vadd.f32 %v1623, %v1663
          %1665 = vmatmul.f32.gmra.mxu0 %v1495
          %v1666 = vpop.f32.mrf.mxu0
          %v1667 = vadd.f32 %v1626, %v1666
          %1668 = vmatmul.f32.gmra.mxu0 %v1498
          %v1669 = vpop.f32.mrf.mxu0
          %v1670 = vadd.f32 %v1629, %v1669
          %1671 = vmatmul.f32.gmra.mxu0 %v1501
          %v1672 = vpop.f32.mrf.mxu0
          %v1673 = vadd.f32 %v1632, %v1672
          %1674 = vmatmul.f32.gmra.mxu0 %v1504
          %v1675 = vpop.f32.mrf.mxu0
          %v1676 = vadd.f32 %v1635, %v1675
          %1677 = vmatmul.f32.gmra.mxu0 %v1507
          %v1678 = vpop.f32.mrf.mxu0
          %v1679 = vadd.f32 %v1638, %v1678
          %1680 = vdwg.mxu0
          %1681 = vmatpush.msra.mxu0 1.0
          %1682 = vmatpush.msra.mxu0 1.0
          %1683 = vmatpush.msra.mxu0 1.0
          %1684 = vmatpush.msra.mxu0 1.0
          %1685 = vmatpush.msra.mxu0 1.0
          %1686 = vmatpush.msra.mxu0 1.0
          %1687 = vmatpush.msra.mxu0 1.0
          %1688 = vmatpush.msra.mxu0 1.0
          %1689 = vmatpush.msra.mxu0 1.0
          %1690 = vmatpush.msra.mxu0 1.0
          %1691 = vmatpush.msra.mxu0 1.0
          %1692 = vmatpush.msra.mxu0 1.0
          %1693 = vmatpush.msra.mxu0 1.0
          %1694 = vmatpush.msra.mxu0 1.0
          %1695 = vmatpush.msra.mxu0 1.0
          %1696 = vmatpush.msra.mxu0 1.0
          %1697 = vmatmul.f32.gmra.mxu0 %v1527
          %v1698 = vpop.f32.mrf.mxu0
          %v1699 = vadd.f32 %v1658, %v1698
          %1700 = vmatmul.f32.gmra.mxu0 %v1530
          %v1701 = vpop.f32.mrf.mxu0
          %v1702 = vadd.f32 %v1661, %v1701
          %1703 = vmatmul.f32.gmra.mxu0 %v1533
          %v1704 = vpop.f32.mrf.mxu0
          %v1705 = vadd.f32 %v1664, %v1704
          %1706 = vmatmul.f32.gmra.mxu0 %v1536
          %v1707 = vpop.f32.mrf.mxu0
          %v1708 = vadd.f32 %v1667, %v1707
          %1709 = vmatmul.f32.gmra.mxu0 %v1539
          %v1710 = vpop.f32.mrf.mxu0
          %v1711 = vadd.f32 %v1670, %v1710
          %1712 = vmatmul.f32.gmra.mxu0 %v1542
          %v1713 = vpop.f32.mrf.mxu0
          %v1714 = vadd.f32 %v1673, %v1713
          %1715 = vmatmul.f32.gmra.mxu0 %v1545
          %v1716 = vpop.f32.mrf.mxu0
          %v1717 = vadd.f32 %v1676, %v1716
          %1718 = vmatmul.f32.gmra.mxu0 %v1548
          %v1719 = vpop.f32.mrf.mxu0
          %v1720 = vadd.f32 %v1679, %v1719
          %1721 = vdwg.mxu0
          %1722 = vmatpush.msra.mxu0 1.0
          %1723 = vmatpush.msra.mxu0 1.0
          %1724 = vmatpush.msra.mxu0 1.0
          %1725 = vmatpush.msra.mxu0 1.0
          %1726 = vmatpush.msra.mxu0 1.0
          %1727 = vmatpush.msra.mxu0 1.0
          %1728 = vmatpush.msra.mxu0 1.0
          %1729 = vmatpush.msra.mxu0 1.0
          %1730 = vmatpush.msra.mxu0 1.0
          %1731 = vmatpush.msra.mxu0 1.0
          %1732 = vmatpush.msra.mxu0 1.0
          %1733 = vmatpush.msra.mxu0 1.0
          %1734 = vmatpush.msra.mxu0 1.0
          %1735 = vmatpush.msra.mxu0 1.0
          %1736 = vmatpush.msra.mxu0 1.0
          %1737 = vmatpush.msra.mxu0 1.0
          %1738 = vmatmul.f32.gmra.mxu0 %v1568
          %v1739 = vpop.f32.mrf.mxu0
          %v1740 = vadd.f32 %v1699, %v1739
          %1741 = vmatmul.f32.gmra.mxu0 %v1571
          %v1742 = vpop.f32.mrf.mxu0
          %v1743 = vadd.f32 %v1702, %v1742
          %1744 = vmatmul.f32.gmra.mxu0 %v1574
          %v1745 = vpop.f32.mrf.mxu0
          %v1746 = vadd.f32 %v1705, %v1745
          %1747 = vmatmul.f32.gmra.mxu0 %v1577
          %v1748 = vpop.f32.mrf.mxu0
          %v1749 = vadd.f32 %v1708, %v1748
          %1750 = vmatmul.f32.gmra.mxu0 %v1580
          %v1751 = vpop.f32.mrf.mxu0
          %v1752 = vadd.f32 %v1711, %v1751
          %1753 = vmatmul.f32.gmra.mxu0 %v1583
          %v1754 = vpop.f32.mrf.mxu0
          %v1755 = vadd.f32 %v1714, %v1754
          %1756 = vmatmul.f32.gmra.mxu0 %v1586
          %v1757 = vpop.f32.mrf.mxu0
          %v1758 = vadd.f32 %v1717, %v1757
          %1759 = vmatmul.f32.gmra.mxu0 %v1589
          %v1760 = vpop.f32.mrf.mxu0
          %v1761 = vadd.f32 %v1720, %v1760
          %1762 = vdwg.mxu0
          %v1763 = vadd.f32 %v1591, %v1740
          %v1764 = vadd.f32 %v1592, %v1743
          %v1765 = vadd.f32 %v1593, %v1746
          %v1766 = vadd.f32 %v1594, %v1749
          %v1767 = vadd.f32 %v1595, %v1752
          %v1768 = vadd.f32 %v1596, %v1755
          %v1769 = vadd.f32 %v1597, %v1758
          %v1770 = vadd.f32 %v1598, %v1761
          %vm1771 = vcmask 7168
          %1772 = vst.msk [vmem:[#allocation4] sm:$0xff] %vm1771, %v1763
          %1773 = vst.msk [vmem:[#allocation4 + $0x8] sm:$0xff] %vm1771, %v1764
          %1774 = vst.msk [vmem:[#allocation4 + $0x10] sm:$0xff] %vm1771, %v1765
          %1775 = vst.msk [vmem:[#allocation4 + $0x18] sm:$0xff] %vm1771, %v1766
          %1776 = vst.msk [vmem:[#allocation4 + $0x20] sm:$0xff] %vm1771, %v1767
          %1777 = vst.msk [vmem:[#allocation4 + $0x28] sm:$0xff] %vm1771, %v1768
          %1778 = vst.msk [vmem:[#allocation4 + $0x30] sm:$0xff] %vm1771, %v1769
          %1779 = vst.msk [vmem:[#allocation4 + $0x38] sm:$0xff] %vm1771, %v1770
          %v1780 = vld [vmem:[#allocation4] sm:$0xff]
          %v1781 = vld [vmem:[#allocation4 + $0x8] sm:$0xff]
          %v1782 = vld [vmem:[#allocation4 + $0x10] sm:$0xff]
          %v1783 = vld [vmem:[#allocation4 + $0x18] sm:$0xff]
          %v1784 = vld [vmem:[#allocation4 + $0x20] sm:$0xff]
          %v1785 = vld [vmem:[#allocation4 + $0x28] sm:$0xff]
          %v1786 = vld [vmem:[#allocation4 + $0x30] sm:$0xff]
          %v1787 = vld [vmem:[#allocation4 + $0x38] sm:$0xff]
          %v1788 = vmul.f32 %v1445, %v1445
          %v1789 = vmul.f32 %v1486, %v1486
          %v1790 = vmul.f32 %v1527, %v1527
          %v1791 = vmul.f32 %v1568, %v1568
          %v1792 = vmul.f32 %v1448, %v1448
          %v1793 = vmul.f32 %v1489, %v1489
          %v1794 = vmul.f32 %v1530, %v1530
          %v1795 = vmul.f32 %v1571, %v1571
          %v1796 = vmul.f32 %v1451, %v1451
          %v1797 = vmul.f32 %v1492, %v1492
          %v1798 = vmul.f32 %v1533, %v1533
          %v1799 = vmul.f32 %v1574, %v1574
          %v1800 = vmul.f32 %v1454, %v1454
          %v1801 = vmul.f32 %v1495, %v1495
          %v1802 = vmul.f32 %v1536, %v1536
          %v1803 = vmul.f32 %v1577, %v1577
          %v1804 = vmul.f32 %v1457, %v1457
          %v1805 = vmul.f32 %v1498, %v1498
          %v1806 = vmul.f32 %v1539, %v1539
          %v1807 = vmul.f32 %v1580, %v1580
          %v1808 = vmul.f32 %v1460, %v1460
          %v1809 = vmul.f32 %v1501, %v1501
          %v1810 = vmul.f32 %v1542, %v1542
          %v1811 = vmul.f32 %v1583, %v1583
          %v1812 = vmul.f32 %v1463, %v1463
          %v1813 = vmul.f32 %v1504, %v1504
          %v1814 = vmul.f32 %v1545, %v1545
          %v1815 = vmul.f32 %v1586, %v1586
          %v1816 = vmul.f32 %v1466, %v1466
          %v1817 = vmul.f32 %v1507, %v1507
          %v1818 = vmul.f32 %v1548, %v1548
          %v1819 = vmul.f32 %v1589, %v1589
          %1820 = vmatpush.msra.mxu0 1.0
          %1821 = vmatpush.msra.mxu0 1.0
          %1822 = vmatpush.msra.mxu0 1.0
          %1823 = vmatpush.msra.mxu0 1.0
          %1824 = vmatpush.msra.mxu0 1.0
          %1825 = vmatpush.msra.mxu0 1.0
          %1826 = vmatpush.msra.mxu0 1.0
          %1827 = vmatpush.msra.mxu0 1.0
          %1828 = vmatpush.msra.mxu0 1.0
          %1829 = vmatpush.msra.mxu0 1.0
          %1830 = vmatpush.msra.mxu0 1.0
          %1831 = vmatpush.msra.mxu0 1.0
          %1832 = vmatpush.msra.mxu0 1.0
          %1833 = vmatpush.msra.mxu0 1.0
          %1834 = vmatpush.msra.mxu0 1.0
          %1835 = vmatpush.msra.mxu0 1.0
          %1836 = vmatmul.f32.gmra.mxu0 %v1788
          %v1837 = vpop.f32.mrf.mxu0
          %v1838 = vadd.f32 0.0, %v1837
          %1839 = vmatmul.f32.gmra.mxu0 %v1792
          %v1840 = vpop.f32.mrf.mxu0
          %v1841 = vadd.f32 0.0, %v1840
          %1842 = vmatmul.f32.gmra.mxu0 %v1796
          %v1843 = vpop.f32.mrf.mxu0
          %v1844 = vadd.f32 0.0, %v1843
          %1845 = vmatmul.f32.gmra.mxu0 %v1800
          %v1846 = vpop.f32.mrf.mxu0
          %v1847 = vadd.f32 0.0, %v1846
          %1848 = vmatmul.f32.gmra.mxu0 %v1804
          %v1849 = vpop.f32.mrf.mxu0
          %v1850 = vadd.f32 0.0, %v1849
          %1851 = vmatmul.f32.gmra.mxu0 %v1808
          %v1852 = vpop.f32.mrf.mxu0
          %v1853 = vadd.f32 0.0, %v1852
          %1854 = vmatmul.f32.gmra.mxu0 %v1812
          %v1855 = vpop.f32.mrf.mxu0
          %v1856 = vadd.f32 0.0, %v1855
          %1857 = vmatmul.f32.gmra.mxu0 %v1816
          %v1858 = vpop.f32.mrf.mxu0
          %v1859 = vadd.f32 0.0, %v1858
          %1860 = vdwg.mxu0
          %1861 = vmatpush.msra.mxu0 1.0
          %1862 = vmatpush.msra.mxu0 1.0
          %1863 = vmatpush.msra.mxu0 1.0
          %1864 = vmatpush.msra.mxu0 1.0
          %1865 = vmatpush.msra.mxu0 1.0
          %1866 = vmatpush.msra.mxu0 1.0
          %1867 = vmatpush.msra.mxu0 1.0
          %1868 = vmatpush.msra.mxu0 1.0
          %1869 = vmatpush.msra.mxu0 1.0
          %1870 = vmatpush.msra.mxu0 1.0
          %1871 = vmatpush.msra.mxu0 1.0
          %1872 = vmatpush.msra.mxu0 1.0
          %1873 = vmatpush.msra.mxu0 1.0
          %1874 = vmatpush.msra.mxu0 1.0
          %1875 = vmatpush.msra.mxu0 1.0
          %1876 = vmatpush.msra.mxu0 1.0
          %1877 = vmatmul.f32.gmra.mxu0 %v1789
          %v1878 = vpop.f32.mrf.mxu0
          %v1879 = vadd.f32 %v1838, %v1878
          %1880 = vmatmul.f32.gmra.mxu0 %v1793
          %v1881 = vpop.f32.mrf.mxu0
          %v1882 = vadd.f32 %v1841, %v1881
          %1883 = vmatmul.f32.gmra.mxu0 %v1797
          %v1884 = vpop.f32.mrf.mxu0
          %v1885 = vadd.f32 %v1844, %v1884
          %1886 = vmatmul.f32.gmra.mxu0 %v1801
          %v1887 = vpop.f32.mrf.mxu0
          %v1888 = vadd.f32 %v1847, %v1887
          %1889 = vmatmul.f32.gmra.mxu0 %v1805
          %v1890 = vpop.f32.mrf.mxu0
          %v1891 = vadd.f32 %v1850, %v1890
          %1892 = vmatmul.f32.gmra.mxu0 %v1809
          %v1893 = vpop.f32.mrf.mxu0
          %v1894 = vadd.f32 %v1853, %v1893
          %1895 = vmatmul.f32.gmra.mxu0 %v1813
          %v1896 = vpop.f32.mrf.mxu0
          %v1897 = vadd.f32 %v1856, %v1896
          %1898 = vmatmul.f32.gmra.mxu0 %v1817
          %v1899 = vpop.f32.mrf.mxu0
          %v1900 = vadd.f32 %v1859, %v1899
          %1901 = vdwg.mxu0
          %1902 = vmatpush.msra.mxu0 1.0
          %1903 = vmatpush.msra.mxu0 1.0
          %1904 = vmatpush.msra.mxu0 1.0
          %1905 = vmatpush.msra.mxu0 1.0
          %1906 = vmatpush.msra.mxu0 1.0
          %1907 = vmatpush.msra.mxu0 1.0
          %1908 = vmatpush.msra.mxu0 1.0
          %1909 = vmatpush.msra.mxu0 1.0
          %1910 = vmatpush.msra.mxu0 1.0
          %1911 = vmatpush.msra.mxu0 1.0
          %1912 = vmatpush.msra.mxu0 1.0
          %1913 = vmatpush.msra.mxu0 1.0
          %1914 = vmatpush.msra.mxu0 1.0
          %1915 = vmatpush.msra.mxu0 1.0
          %1916 = vmatpush.msra.mxu0 1.0
          %1917 = vmatpush.msra.mxu0 1.0
          %1918 = vmatmul.f32.gmra.mxu0 %v1790
          %v1919 = vpop.f32.mrf.mxu0
          %v1920 = vadd.f32 %v1879, %v1919
          %1921 = vmatmul.f32.gmra.mxu0 %v1794
          %v1922 = vpop.f32.mrf.mxu0
          %v1923 = vadd.f32 %v1882, %v1922
          %1924 = vmatmul.f32.gmra.mxu0 %v1798
          %v1925 = vpop.f32.mrf.mxu0
          %v1926 = vadd.f32 %v1885, %v1925
          %1927 = vmatmul.f32.gmra.mxu0 %v1802
          %v1928 = vpop.f32.mrf.mxu0
          %v1929 = vadd.f32 %v1888, %v1928
          %1930 = vmatmul.f32.gmra.mxu0 %v1806
          %v1931 = vpop.f32.mrf.mxu0
          %v1932 = vadd.f32 %v1891, %v1931
          %1933 = vmatmul.f32.gmra.mxu0 %v1810
          %v1934 = vpop.f32.mrf.mxu0
          %v1935 = vadd.f32 %v1894, %v1934
          %1936 = vmatmul.f32.gmra.mxu0 %v1814
          %v1937 = vpop.f32.mrf.mxu0
          %v1938 = vadd.f32 %v1897, %v1937
          %1939 = vmatmul.f32.gmra.mxu0 %v1818
          %v1940 = vpop.f32.mrf.mxu0
          %v1941 = vadd.f32 %v1900, %v1940
          %1942 = vdwg.mxu0
          %1943 = vmatpush.msra.mxu0 1.0
          %1944 = vmatpush.msra.mxu0 1.0
          %1945 = vmatpush.msra.mxu0 1.0
          %1946 = vmatpush.msra.mxu0 1.0
          %1947 = vmatpush.msra.mxu0 1.0
          %1948 = vmatpush.msra.mxu0 1.0
          %1949 = vmatpush.msra.mxu0 1.0
          %1950 = vmatpush.msra.mxu0 1.0
          %1951 = vmatpush.msra.mxu0 1.0
          %1952 = vmatpush.msra.mxu0 1.0
          %1953 = vmatpush.msra.mxu0 1.0
          %1954 = vmatpush.msra.mxu0 1.0
          %1955 = vmatpush.msra.mxu0 1.0
          %1956 = vmatpush.msra.mxu0 1.0
          %1957 = vmatpush.msra.mxu0 1.0
          %1958 = vmatpush.msra.mxu0 1.0
          %1959 = vmatmul.f32.gmra.mxu0 %v1791
          %v1960 = vpop.f32.mrf.mxu0
          %v1961 = vadd.f32 %v1920, %v1960
          %1962 = vmatmul.f32.gmra.mxu0 %v1795
          %v1963 = vpop.f32.mrf.mxu0
          %v1964 = vadd.f32 %v1923, %v1963
          %1965 = vmatmul.f32.gmra.mxu0 %v1799
          %v1966 = vpop.f32.mrf.mxu0
          %v1967 = vadd.f32 %v1926, %v1966
          %1968 = vmatmul.f32.gmra.mxu0 %v1803
          %v1969 = vpop.f32.mrf.mxu0
          %v1970 = vadd.f32 %v1929, %v1969
          %1971 = vmatmul.f32.gmra.mxu0 %v1807
          %v1972 = vpop.f32.mrf.mxu0
          %v1973 = vadd.f32 %v1932, %v1972
          %1974 = vmatmul.f32.gmra.mxu0 %v1811
          %v1975 = vpop.f32.mrf.mxu0
          %v1976 = vadd.f32 %v1935, %v1975
          %1977 = vmatmul.f32.gmra.mxu0 %v1815
          %v1978 = vpop.f32.mrf.mxu0
          %v1979 = vadd.f32 %v1938, %v1978
          %1980 = vmatmul.f32.gmra.mxu0 %v1819
          %v1981 = vpop.f32.mrf.mxu0
          %v1982 = vadd.f32 %v1941, %v1981
          %1983 = vdwg.mxu0
          %1992 = vrot.lane.b32.xlu0 %v1961, 1
          %v1993 = vpop.permute.xlu0 %1992
          %1994 = vrot.lane.b32.xlu0 %v1964, 1
          %v1995 = vpop.permute.xlu0 %1994
          %1996 = vrot.lane.b32.xlu0 %v1967, 1
          %v1997 = vpop.permute.xlu0 %1996
          %1998 = vrot.lane.b32.xlu0 %v1970, 1
          %v1999 = vpop.permute.xlu0 %1998
          %2000 = vrot.lane.b32.xlu0 %v1973, 1
          %v2001 = vpop.permute.xlu0 %2000
          %2002 = vrot.lane.b32.xlu0 %v1976, 1
          %v2003 = vpop.permute.xlu0 %2002
          %2004 = vrot.lane.b32.xlu0 %v1979, 1
          %v2005 = vpop.permute.xlu0 %2004
          %2006 = vrot.lane.b32.xlu0 %v1982, 1
          %v2007 = vpop.permute.xlu0 %2006
          %v2016 = vadd.f32 %v1780, %v1993
          %v2017 = vadd.f32 %v1781, %v1995
          %v2018 = vadd.f32 %v1782, %v1997
          %v2019 = vadd.f32 %v1783, %v1999
          %v2020 = vadd.f32 %v1784, %v2001
          %v2021 = vadd.f32 %v1785, %v2003
          %v2022 = vadd.f32 %v1786, %v2005
          %v2023 = vadd.f32 %v1787, %v2007
          %vm2024 = vcmask 15368
          %2025 = vst.msk [vmem:[#allocation4] sm:$0xff] %vm2024, %v2016
          %2026 = vst.msk [vmem:[#allocation4 + $0x8] sm:$0xff] %vm2024, %v2017
          %2027 = vst.msk [vmem:[#allocation4 + $0x10] sm:$0xff] %vm2024, %v2018
          %2028 = vst.msk [vmem:[#allocation4 + $0x18] sm:$0xff] %vm2024, %v2019
          %2029 = vst.msk [vmem:[#allocation4 + $0x20] sm:$0xff] %vm2024, %v2020
          %2030 = vst.msk [vmem:[#allocation4 + $0x28] sm:$0xff] %vm2024, %v2021
          %2031 = vst.msk [vmem:[#allocation4 + $0x30] sm:$0xff] %vm2024, %v2022
          %2032 = vst.msk [vmem:[#allocation4 + $0x38] sm:$0xff] %vm2024, %v2023
          %v2033 = vld [vmem:[#allocation5] sm:$0xff]
          %v2034 = vld [vmem:[#allocation5 + $0x8] sm:$0xff]
          %v2035 = vld [vmem:[#allocation5 + $0x10] sm:$0xff]
          %v2036 = vld [vmem:[#allocation5 + $0x18] sm:$0xff]
          %v2037 = vld [vmem:[#allocation5 + $0x20] sm:$0xff]
          %v2038 = vld [vmem:[#allocation5 + $0x28] sm:$0xff]
          %v2039 = vld [vmem:[#allocation5 + $0x30] sm:$0xff]
          %v2040 = vld [vmem:[#allocation5 + $0x38] sm:$0xff]
          %2042 = vset.pattern.permute.xlu0 4
          %2043 = vperm.xlu0 %2042, %v2033
          %v2044 = vpop.permute.xlu0 %2043
          %2047 = vset.pattern.permute.xlu0 4
          %2048 = vperm.xlu0 %2047, %v2034
          %v2049 = vpop.permute.xlu0 %2048
          %2052 = vset.pattern.permute.xlu0 4
          %2053 = vperm.xlu0 %2052, %v2035
          %v2054 = vpop.permute.xlu0 %2053
          %2057 = vset.pattern.permute.xlu0 4
          %2058 = vperm.xlu0 %2057, %v2036
          %v2059 = vpop.permute.xlu0 %2058
          %2062 = vset.pattern.permute.xlu0 4
          %2063 = vperm.xlu0 %2062, %v2037
          %v2064 = vpop.permute.xlu0 %2063
          %2067 = vset.pattern.permute.xlu0 4
          %2068 = vperm.xlu0 %2067, %v2038
          %v2069 = vpop.permute.xlu0 %2068
          %2072 = vset.pattern.permute.xlu0 4
          %2073 = vperm.xlu0 %2072, %v2039
          %v2074 = vpop.permute.xlu0 %2073
          %2077 = vset.pattern.permute.xlu0 4
          %2078 = vperm.xlu0 %2077, %v2040
          %v2079 = vpop.permute.xlu0 %2078
          %v2081 = vmul.f32 %v1445, %v2044
          %v2082 = vmul.f32 %v1486, %v2044
          %v2083 = vmul.f32 %v1527, %v2044
          %v2084 = vmul.f32 %v1568, %v2044
          %v2085 = vmul.f32 %v1448, %v2049
          %v2086 = vmul.f32 %v1489, %v2049
          %v2087 = vmul.f32 %v1530, %v2049
          %v2088 = vmul.f32 %v1571, %v2049
          %v2089 = vmul.f32 %v1451, %v2054
          %v2090 = vmul.f32 %v1492, %v2054
          %v2091 = vmul.f32 %v1533, %v2054
          %v2092 = vmul.f32 %v1574, %v2054
          %v2093 = vmul.f32 %v1454, %v2059
          %v2094 = vmul.f32 %v1495, %v2059
          %v2095 = vmul.f32 %v1536, %v2059
          %v2096 = vmul.f32 %v1577, %v2059
          %v2097 = vmul.f32 %v1457, %v2064
          %v2098 = vmul.f32 %v1498, %v2064
          %v2099 = vmul.f32 %v1539, %v2064
          %v2100 = vmul.f32 %v1580, %v2064
          %v2101 = vmul.f32 %v1460, %v2069
          %v2102 = vmul.f32 %v1501, %v2069
          %v2103 = vmul.f32 %v1542, %v2069
          %v2104 = vmul.f32 %v1583, %v2069
          %v2105 = vmul.f32 %v1463, %v2074
          %v2106 = vmul.f32 %v1504, %v2074
          %v2107 = vmul.f32 %v1545, %v2074
          %v2108 = vmul.f32 %v1586, %v2074
          %v2109 = vmul.f32 %v1466, %v2079
          %v2110 = vmul.f32 %v1507, %v2079
          %v2111 = vmul.f32 %v1548, %v2079
          %v2112 = vmul.f32 %v1589, %v2079
          %v2113 = vmax.f32 %v2081, %v2082
          %v2114 = vmax.f32 %v2113, %v2083
          %v2115 = vmax.f32 %v2114, %v2084
          %2116 = vmax.xlane.f32.xlu0 %v2115
          %v2117 = vpop.xlane.xlu0 %2116
          %v2118 = vmax.f32 %v2085, %v2086
          %v2119 = vmax.f32 %v2118, %v2087
          %v2120 = vmax.f32 %v2119, %v2088
          %2121 = vmax.xlane.f32.xlu0 %v2120
          %v2122 = vpop.xlane.xlu0 %2121
          %v2123 = vmax.f32 %v2089, %v2090
          %v2124 = vmax.f32 %v2123, %v2091
          %v2125 = vmax.f32 %v2124, %v2092
          %2126 = vmax.xlane.f32.xlu0 %v2125
          %v2127 = vpop.xlane.xlu0 %2126
          %v2128 = vmax.f32 %v2093, %v2094
          %v2129 = vmax.f32 %v2128, %v2095
          %v2130 = vmax.f32 %v2129, %v2096
          %2131 = vmax.xlane.f32.xlu0 %v2130
          %v2132 = vpop.xlane.xlu0 %2131
          %v2133 = vmax.f32 %v2097, %v2098
          %v2134 = vmax.f32 %v2133, %v2099
          %v2135 = vmax.f32 %v2134, %v2100
          %2136 = vmax.xlane.f32.xlu0 %v2135
          %v2137 = vpop.xlane.xlu0 %2136
          %v2138 = vmax.f32 %v2101, %v2102
          %v2139 = vmax.f32 %v2138, %v2103
          %v2140 = vmax.f32 %v2139, %v2104
          %2141 = vmax.xlane.f32.xlu0 %v2140
          %v2142 = vpop.xlane.xlu0 %2141
          %v2143 = vmax.f32 %v2105, %v2106
          %v2144 = vmax.f32 %v2143, %v2107
          %v2145 = vmax.f32 %v2144, %v2108
          %2146 = vmax.xlane.f32.xlu0 %v2145
          %v2147 = vpop.xlane.xlu0 %2146
          %v2148 = vmax.f32 %v2109, %v2110
          %v2149 = vmax.f32 %v2148, %v2111
          %v2150 = vmax.f32 %v2149, %v2112
          %2151 = vmax.xlane.f32.xlu0 %v2150
          %v2152 = vpop.xlane.xlu0 %2151
          // Predicated region
          $region61: #{tpu_custom_call.1} parent=59 // pred_check
            %p2153 = pneg %p192
          $region62: #{tpu_custom_call.1} parent=59 // pred_check_branch
            %2155 = sbr.rel (%p2153) target = $region64
          $region63: #{tpu_custom_call.1} parent=59 // pred_region
            %2156 = vst.msk [vmem:[#allocation7] sm:$0xff] %vm1771, %v2117
            %2157 = vst.msk [vmem:[#allocation7 + $0x8] sm:$0xff] %vm1771, %v2122
            %2158 = vst.msk [vmem:[#allocation7 + $0x10] sm:$0xff] %vm1771, %v2127
            %2159 = vst.msk [vmem:[#allocation7 + $0x18] sm:$0xff] %vm1771, %v2132
            %2160 = vst.msk [vmem:[#allocation7 + $0x20] sm:$0xff] %vm1771, %v2137
            %2161 = vst.msk [vmem:[#allocation7 + $0x28] sm:$0xff] %vm1771, %v2142
            %2162 = vst.msk [vmem:[#allocation7 + $0x30] sm:$0xff] %vm1771, %v2147
            %2163 = vst.msk [vmem:[#allocation7 + $0x38] sm:$0xff] %vm1771, %v2152
          $region64: #{tpu_custom_call.1} parent=59 // pred_fallthru
            _
          %p2164 = scmp.gt.s32.totalorder %s21, 0
          // Predicated region
          $region65: #{tpu_custom_call.1} parent=59 // pred_check
            %p2165 = pneg %p2164
          $region66: #{tpu_custom_call.1} parent=59 // pred_check_branch
            %2167 = sbr.rel (%p2165) target = $region68
          $region67: #{tpu_custom_call.1} parent=59 // pred_region
            %v2168 = vld [vmem:[#allocation7] sm:$0xff]
            %v2169 = vld [vmem:[#allocation7 + $0x8] sm:$0xff]
            %v2170 = vld [vmem:[#allocation7 + $0x10] sm:$0xff]
            %v2171 = vld [vmem:[#allocation7 + $0x18] sm:$0xff]
            %v2172 = vld [vmem:[#allocation7 + $0x20] sm:$0xff]
            %v2173 = vld [vmem:[#allocation7 + $0x28] sm:$0xff]
            %v2174 = vld [vmem:[#allocation7 + $0x30] sm:$0xff]
            %v2175 = vld [vmem:[#allocation7 + $0x38] sm:$0xff]
            %v2176 = vmax.f32 %v2168, %v2117
            %v2177 = vmax.f32 %v2169, %v2122
            %v2178 = vmax.f32 %v2170, %v2127
            %v2179 = vmax.f32 %v2171, %v2132
            %v2180 = vmax.f32 %v2172, %v2137
            %v2181 = vmax.f32 %v2173, %v2142
            %v2182 = vmax.f32 %v2174, %v2147
            %v2183 = vmax.f32 %v2175, %v2152
            %2184 = vst.msk [vmem:[#allocation7] sm:$0xff] %vm1771, %v2176
            %2185 = vst.msk [vmem:[#allocation7 + $0x8] sm:$0xff] %vm1771, %v2177
            %2186 = vst.msk [vmem:[#allocation7 + $0x10] sm:$0xff] %vm1771, %v2178
            %2187 = vst.msk [vmem:[#allocation7 + $0x18] sm:$0xff] %vm1771, %v2179
            %2188 = vst.msk [vmem:[#allocation7 + $0x20] sm:$0xff] %vm1771, %v2180
            %2189 = vst.msk [vmem:[#allocation7 + $0x28] sm:$0xff] %vm1771, %v2181
            %2190 = vst.msk [vmem:[#allocation7 + $0x30] sm:$0xff] %vm1771, %v2182
            %2191 = vst.msk [vmem:[#allocation7 + $0x38] sm:$0xff] %vm1771, %v2183
          $region68: #{tpu_custom_call.1} parent=59 // pred_fallthru
            _
          // Predicated region
          $region69: #{tpu_custom_call.1} parent=59 // pred_check
            %p2192 = pneg %p192
          $region70: #{tpu_custom_call.1} parent=59 // pred_check_branch
            %2194 = sbr.rel (%p2192) target = $region72
          $region71: #{tpu_custom_call.1} parent=59 // pred_region
            %v2195 = vlaneseq
            %v2196 = vand.u32 %v2195, 127
            %v2197 = vstv %s20
            %vm2198 = vcmp.eq.s32.totalorder %v2196, %v2197
            %v2199 = vld [vmem:[#allocation7] sm:$0xff]
            %v2200 = vld [vmem:[#allocation7 + $0x8] sm:$0xff]
            %v2201 = vld [vmem:[#allocation7 + $0x10] sm:$0xff]
            %v2202 = vld [vmem:[#allocation7 + $0x18] sm:$0xff]
            %v2203 = vld [vmem:[#allocation7 + $0x20] sm:$0xff]
            %v2204 = vld [vmem:[#allocation7 + $0x28] sm:$0xff]
            %v2205 = vld [vmem:[#allocation7 + $0x30] sm:$0xff]
            %v2206 = vld [vmem:[#allocation7 + $0x38] sm:$0xff]
            %v2207 = vld [vmem:[#allocation6] sm:$0xff]
            %v2208 = vld [vmem:[#allocation6 + $0x8] sm:$0xff]
            %v2209 = vld [vmem:[#allocation6 + $0x10] sm:$0xff]
            %v2210 = vld [vmem:[#allocation6 + $0x18] sm:$0xff]
            %v2211 = vld [vmem:[#allocation6 + $0x20] sm:$0xff]
            %v2212 = vld [vmem:[#allocation6 + $0x28] sm:$0xff]
            %v2213 = vld [vmem:[#allocation6 + $0x30] sm:$0xff]
            %v2214 = vld [vmem:[#allocation6 + $0x38] sm:$0xff]
            %2216 = vset.pattern.permute.xlu0 0
            %2217 = vperm.xlu0 %2216, %v2199
            %v2218 = vpop.permute.xlu0 %2217
            %2221 = vset.pattern.permute.xlu0 0
            %2222 = vperm.xlu0 %2221, %v2200
            %v2223 = vpop.permute.xlu0 %2222
            %2226 = vset.pattern.permute.xlu0 0
            %2227 = vperm.xlu0 %2226, %v2201
            %v2228 = vpop.permute.xlu0 %2227
            %2231 = vset.pattern.permute.xlu0 0
            %2232 = vperm.xlu0 %2231, %v2202
            %v2233 = vpop.permute.xlu0 %2232
            %2236 = vset.pattern.permute.xlu0 0
            %2237 = vperm.xlu0 %2236, %v2203
            %v2238 = vpop.permute.xlu0 %2237
            %2241 = vset.pattern.permute.xlu0 0
            %2242 = vperm.xlu0 %2241, %v2204
            %v2243 = vpop.permute.xlu0 %2242
            %2246 = vset.pattern.permute.xlu0 0
            %2247 = vperm.xlu0 %2246, %v2205
            %v2248 = vpop.permute.xlu0 %2247
            %2251 = vset.pattern.permute.xlu0 0
            %2252 = vperm.xlu0 %2251, %v2206
            %v2253 = vpop.permute.xlu0 %2252
            %v2255 = vsel %vm2198, %v2218, %v2207
            %v2256 = vsel %vm2198, %v2223, %v2208
            %v2257 = vsel %vm2198, %v2228, %v2209
            %v2258 = vsel %vm2198, %v2233, %v2210
            %v2259 = vsel %vm2198, %v2238, %v2211
            %v2260 = vsel %vm2198, %v2243, %v2212
            %v2261 = vsel %vm2198, %v2248, %v2213
            %v2262 = vsel %vm2198, %v2253, %v2214
            %vm2263 = vcmask 31744
            %2264 = vst.msk [vmem:[#allocation6] sm:$0xff] %vm2263, %v2255
            %2265 = vst.msk [vmem:[#allocation6 + $0x8] sm:$0xff] %vm2263, %v2256
            %2266 = vst.msk [vmem:[#allocation6 + $0x10] sm:$0xff] %vm2263, %v2257
            %2267 = vst.msk [vmem:[#allocation6 + $0x18] sm:$0xff] %vm2263, %v2258
            %2268 = vst.msk [vmem:[#allocation6 + $0x20] sm:$0xff] %vm2263, %v2259
            %2269 = vst.msk [vmem:[#allocation6 + $0x28] sm:$0xff] %vm2263, %v2260
            %2270 = vst.msk [vmem:[#allocation6 + $0x30] sm:$0xff] %vm2263, %v2261
            %2271 = vst.msk [vmem:[#allocation6 + $0x38] sm:$0xff] %vm2263, %v2262
          $region72: #{tpu_custom_call.1} parent=59 // pred_fallthru
            _
        $region60: #{tpu_custom_call.1} parent=51 // pred_fallthru
          _
      $region52: #{tpu_custom_call.1} parent=31 // pred_fallthru
        _
      %p2272 = pnand %p302, %p197
      %p2273 = pneg %p2272
      // Predicated region
      $region73: #{tpu_custom_call.1} parent=31 // pred_check
        _
      $region74: #{tpu_custom_call.1} parent=31 // pred_check_branch
        %2275 = sbr.rel (%p2272) target = $region76
      $region75: #{tpu_custom_call.1} parent=31 // pred_region
        %v2276 = vld [vmem:[%s2] sm:$0xff]
        %v2277 = vld [vmem:[%s2 + $0x8] sm:$0xff]
        %v2278 = vld [vmem:[%s2 + $0x10] sm:$0xff]
        %v2279 = vld [vmem:[%s2 + $0x18] sm:$0xff]
        %v2280 = vld [vmem:[%s2 + $0x20] sm:$0xff]
        %v2281 = vld [vmem:[%s2 + $0x28] sm:$0xff]
        %v2282 = vld [vmem:[%s2 + $0x30] sm:$0xff]
        %v2283 = vld [vmem:[%s2 + $0x38] sm:$0xff]
        %v2284 = vld [vmem:[#allocation4] sm:$0xff]
        %v2285 = vld [vmem:[#allocation4 + $0x8] sm:$0xff]
        %v2286 = vld [vmem:[#allocation4 + $0x10] sm:$0xff]
        %v2287 = vld [vmem:[#allocation4 + $0x18] sm:$0xff]
        %v2288 = vld [vmem:[#allocation4 + $0x20] sm:$0xff]
        %v2289 = vld [vmem:[#allocation4 + $0x28] sm:$0xff]
        %v2290 = vld [vmem:[#allocation4 + $0x30] sm:$0xff]
        %v2291 = vld [vmem:[#allocation4 + $0x38] sm:$0xff]
        %v2292 = vmul.f32 %v2284, 0.00048828125
        %v2293 = vmul.f32 %v2285, 0.00048828125
        %v2294 = vmul.f32 %v2286, 0.00048828125
        %v2295 = vmul.f32 %v2287, 0.00048828125
        %v2296 = vmul.f32 %v2288, 0.00048828125
        %v2297 = vmul.f32 %v2289, 0.00048828125
        %v2298 = vmul.f32 %v2290, 0.00048828125
        %v2299 = vmul.f32 %v2291, 0.00048828125
        %v2300 = vmul.f32 %v2292, %v2292
        %v2301 = vmul.f32 %v2293, %v2293
        %v2302 = vmul.f32 %v2294, %v2294
        %v2303 = vmul.f32 %v2295, %v2295
        %v2304 = vmul.f32 %v2296, %v2296
        %v2305 = vmul.f32 %v2297, %v2297
        %v2306 = vmul.f32 %v2298, %v2298
        %v2307 = vmul.f32 %v2299, %v2299
        %2316 = vrot.lane.b32.xlu0 %v2300, 1
        %v2317 = vpop.permute.xlu0 %2316
        %2318 = vrot.lane.b32.xlu0 %v2301, 1
        %v2319 = vpop.permute.xlu0 %2318
        %2320 = vrot.lane.b32.xlu0 %v2302, 1
        %v2321 = vpop.permute.xlu0 %2320
        %2322 = vrot.lane.b32.xlu0 %v2303, 1
        %v2323 = vpop.permute.xlu0 %2322
        %2324 = vrot.lane.b32.xlu0 %v2304, 1
        %v2325 = vpop.permute.xlu0 %2324
        %2326 = vrot.lane.b32.xlu0 %v2305, 1
        %v2327 = vpop.permute.xlu0 %2326
        %2328 = vrot.lane.b32.xlu0 %v2306, 1
        %v2329 = vpop.permute.xlu0 %2328
        %2330 = vrot.lane.b32.xlu0 %v2307, 1
        %v2331 = vpop.permute.xlu0 %2330
        %v2340 = vsub.f32 %v2292, %v2317
        %v2341 = vsub.f32 %v2293, %v2319
        %v2342 = vsub.f32 %v2294, %v2321
        %v2343 = vsub.f32 %v2295, %v2323
        %v2344 = vsub.f32 %v2296, %v2325
        %v2345 = vsub.f32 %v2297, %v2327
        %v2346 = vsub.f32 %v2298, %v2329
        %v2347 = vsub.f32 %v2299, %v2331
        %v2348 = vmax.f32 %v2340, 0.0
        %v2349 = vmax.f32 %v2341, 0.0
        %v2350 = vmax.f32 %v2342, 0.0
        %v2351 = vmax.f32 %v2343, 0.0
        %v2352 = vmax.f32 %v2344, 0.0
        %v2353 = vmax.f32 %v2345, 0.0
        %v2354 = vmax.f32 %v2346, 0.0
        %v2355 = vmax.f32 %v2347, 0.0
        %v2356 = vadd.f32 %v2348, 1e-05
        %v2357 = vadd.f32 %v2349, 1e-05
        %v2358 = vadd.f32 %v2350, 1e-05
        %v2359 = vadd.f32 %v2351, 1e-05
        %v2360 = vadd.f32 %v2352, 1e-05
        %v2361 = vadd.f32 %v2353, 1e-05
        %v2362 = vadd.f32 %v2354, 1e-05
        %v2363 = vadd.f32 %v2355, 1e-05
        %v2364 = vrsqrt.pop %v2356
        %v2365 = vmul.f32 %v2364, %v2356
        %v2366 = vmul.f32 %v2365, %v2364
        %v2367 = vmul.f32 0.5, %v2366
        %v2368 = vsub.f32 1.5, %v2367
        %v2369 = vmul.f32 %v2364, %v2368
        %vm2370 = vweird.f32 %v2356
        %vm2371 = vweird.f32 %v2364
        %vm2372 = vmor %vm2370, %vm2371
        %v2373 = vsel %vm2372, %v2364, %v2369
        %v2374 = vrsqrt.pop %v2357
        %v2375 = vmul.f32 %v2374, %v2357
        %v2376 = vmul.f32 %v2375, %v2374
        %v2377 = vmul.f32 0.5, %v2376
        %v2378 = vsub.f32 1.5, %v2377
        %v2379 = vmul.f32 %v2374, %v2378
        %vm2380 = vweird.f32 %v2357
        %vm2381 = vweird.f32 %v2374
        %vm2382 = vmor %vm2380, %vm2381
        %v2383 = vsel %vm2382, %v2374, %v2379
        %v2384 = vrsqrt.pop %v2358
        %v2385 = vmul.f32 %v2384, %v2358
        %v2386 = vmul.f32 %v2385, %v2384
        %v2387 = vmul.f32 0.5, %v2386
        %v2388 = vsub.f32 1.5, %v2387
        %v2389 = vmul.f32 %v2384, %v2388
        %vm2390 = vweird.f32 %v2358
        %vm2391 = vweird.f32 %v2384
        %vm2392 = vmor %vm2390, %vm2391
        %v2393 = vsel %vm2392, %v2384, %v2389
        %v2394 = vrsqrt.pop %v2359
        %v2395 = vmul.f32 %v2394, %v2359
        %v2396 = vmul.f32 %v2395, %v2394
        %v2397 = vmul.f32 0.5, %v2396
        %v2398 = vsub.f32 1.5, %v2397
        %v2399 = vmul.f32 %v2394, %v2398
        %vm2400 = vweird.f32 %v2359
        %vm2401 = vweird.f32 %v2394
        %vm2402 = vmor %vm2400, %vm2401
        %v2403 = vsel %vm2402, %v2394, %v2399
        %v2404 = vrsqrt.pop %v2360
        %v2405 = vmul.f32 %v2404, %v2360
        %v2406 = vmul.f32 %v2405, %v2404
        %v2407 = vmul.f32 0.5, %v2406
        %v2408 = vsub.f32 1.5, %v2407
        %v2409 = vmul.f32 %v2404, %v2408
        %vm2410 = vweird.f32 %v2360
        %vm2411 = vweird.f32 %v2404
        %vm2412 = vmor %vm2410, %vm2411
        %v2413 = vsel %vm2412, %v2404, %v2409
        %v2414 = vrsqrt.pop %v2361
        %v2415 = vmul.f32 %v2414, %v2361
        %v2416 = vmul.f32 %v2415, %v2414
        %v2417 = vmul.f32 0.5, %v2416
        %v2418 = vsub.f32 1.5, %v2417
        %v2419 = vmul.f32 %v2414, %v2418
        %vm2420 = vweird.f32 %v2361
        %vm2421 = vweird.f32 %v2414
        %vm2422 = vmor %vm2420, %vm2421
        %v2423 = vsel %vm2422, %v2414, %v2419
        %v2424 = vrsqrt.pop %v2362
        %v2425 = vmul.f32 %v2424, %v2362
        %v2426 = vmul.f32 %v2425, %v2424
        %v2427 = vmul.f32 0.5, %v2426
        %v2428 = vsub.f32 1.5, %v2427
        %v2429 = vmul.f32 %v2424, %v2428
        %vm2430 = vweird.f32 %v2362
        %vm2431 = vweird.f32 %v2424
        %vm2432 = vmor %vm2430, %vm2431
        %v2433 = vsel %vm2432, %v2424, %v2429
        %v2434 = vrsqrt.pop %v2363
        %v2435 = vmul.f32 %v2434, %v2363
        %v2436 = vmul.f32 %v2435, %v2434
        %v2437 = vmul.f32 0.5, %v2436
        %v2438 = vsub.f32 1.5, %v2437
        %v2439 = vmul.f32 %v2434, %v2438
        %vm2440 = vweird.f32 %v2363
        %vm2441 = vweird.f32 %v2434
        %vm2442 = vmor %vm2440, %vm2441
        %v2443 = vsel %vm2442, %v2434, %v2439
        %2452 = vrot.lane.b32.xlu0 %v2373, 3
        %v2453 = vpop.permute.xlu0 %2452
        %2454 = vrot.lane.b32.xlu0 %v2383, 3
        %v2455 = vpop.permute.xlu0 %2454
        %2456 = vrot.lane.b32.xlu0 %v2393, 3
        %v2457 = vpop.permute.xlu0 %2456
        %2458 = vrot.lane.b32.xlu0 %v2403, 3
        %v2459 = vpop.permute.xlu0 %2458
        %2460 = vrot.lane.b32.xlu0 %v2413, 3
        %v2461 = vpop.permute.xlu0 %2460
        %2462 = vrot.lane.b32.xlu0 %v2423, 3
        %v2463 = vpop.permute.xlu0 %2462
        %2464 = vrot.lane.b32.xlu0 %v2433, 3
        %v2465 = vpop.permute.xlu0 %2464
        %2466 = vrot.lane.b32.xlu0 %v2443, 3
        %v2467 = vpop.permute.xlu0 %2466
        %v2476 = vmul.f32 %v2276, %v2453
        %v2477 = vmul.f32 %v2277, %v2455
        %v2478 = vmul.f32 %v2278, %v2457
        %v2479 = vmul.f32 %v2279, %v2459
        %v2480 = vmul.f32 %v2280, %v2461
        %v2481 = vmul.f32 %v2281, %v2463
        %v2482 = vmul.f32 %v2282, %v2465
        %v2483 = vmul.f32 %v2283, %v2467
        %2492 = vrot.lane.b32.xlu0 %v2476, 124
        %v2493 = vpop.permute.xlu0 %2492
        %2494 = vrot.lane.b32.xlu0 %v2477, 124
        %v2495 = vpop.permute.xlu0 %2494
        %2496 = vrot.lane.b32.xlu0 %v2478, 124
        %v2497 = vpop.permute.xlu0 %2496
        %2498 = vrot.lane.b32.xlu0 %v2479, 124
        %v2499 = vpop.permute.xlu0 %2498
        %2500 = vrot.lane.b32.xlu0 %v2480, 124
        %v2501 = vpop.permute.xlu0 %2500
        %2502 = vrot.lane.b32.xlu0 %v2481, 124
        %v2503 = vpop.permute.xlu0 %2502
        %2504 = vrot.lane.b32.xlu0 %v2482, 124
        %v2505 = vpop.permute.xlu0 %2504
        %2506 = vrot.lane.b32.xlu0 %v2483, 124
        %v2507 = vpop.permute.xlu0 %2506
        %v2516 = vmul.f32 %v2292, %v2493
        %v2517 = vmul.f32 %v2293, %v2495
        %v2518 = vmul.f32 %v2294, %v2497
        %v2519 = vmul.f32 %v2295, %v2499
        %v2520 = vmul.f32 %v2296, %v2501
        %v2521 = vmul.f32 %v2297, %v2503
        %v2522 = vmul.f32 %v2298, %v2505
        %v2523 = vmul.f32 %v2299, %v2507
        %2532 = vrot.lane.b32.xlu0 %v2516, 5
        %v2533 = vpop.permute.xlu0 %2532
        %2534 = vrot.lane.b32.xlu0 %v2517, 5
        %v2535 = vpop.permute.xlu0 %2534
        %2536 = vrot.lane.b32.xlu0 %v2518, 5
        %v2537 = vpop.permute.xlu0 %2536
        %2538 = vrot.lane.b32.xlu0 %v2519, 5
        %v2539 = vpop.permute.xlu0 %2538
        %2540 = vrot.lane.b32.xlu0 %v2520, 5
        %v2541 = vpop.permute.xlu0 %2540
        %2542 = vrot.lane.b32.xlu0 %v2521, 5
        %v2543 = vpop.permute.xlu0 %2542
        %2544 = vrot.lane.b32.xlu0 %v2522, 5
        %v2545 = vpop.permute.xlu0 %2544
        %2546 = vrot.lane.b32.xlu0 %v2523, 5
        %v2547 = vpop.permute.xlu0 %2546
        %v2556 = vsub.f32 %v2276, %v2533
        %v2557 = vsub.f32 %v2277, %v2535
        %v2558 = vsub.f32 %v2278, %v2537
        %v2559 = vsub.f32 %v2279, %v2539
        %v2560 = vsub.f32 %v2280, %v2541
        %v2561 = vsub.f32 %v2281, %v2543
        %v2562 = vsub.f32 %v2282, %v2545
        %v2563 = vsub.f32 %v2283, %v2547
        %v2564 = vand.u32 2147483647, %v2476
        %v2565 = vand.u32 2147483647, %v2477
        %v2566 = vand.u32 2147483647, %v2478
        %v2567 = vand.u32 2147483647, %v2479
        %v2568 = vand.u32 2147483647, %v2480
        %v2569 = vand.u32 2147483647, %v2481
        %v2570 = vand.u32 2147483647, %v2482
        %v2571 = vand.u32 2147483647, %v2483
        %v2572 = vld [vmem:[#allocation6] sm:$0xff]
        %v2573 = vld [vmem:[#allocation6 + $0x8] sm:$0xff]
        %v2574 = vld [vmem:[#allocation6 + $0x10] sm:$0xff]
        %v2575 = vld [vmem:[#allocation6 + $0x18] sm:$0xff]
        %v2576 = vld [vmem:[#allocation6 + $0x20] sm:$0xff]
        %v2577 = vld [vmem:[#allocation6 + $0x28] sm:$0xff]
        %v2578 = vld [vmem:[#allocation6 + $0x30] sm:$0xff]
        %v2579 = vld [vmem:[#allocation6 + $0x38] sm:$0xff]
        %2581 = vset.pattern.permute.xlu0 4
        %2582 = vperm.xlu0 %2581, %v2564
        %v2583 = vpop.permute.xlu0 %2582
        %2586 = vset.pattern.permute.xlu0 4
        %2587 = vperm.xlu0 %2586, %v2565
        %v2588 = vpop.permute.xlu0 %2587
        %2591 = vset.pattern.permute.xlu0 4
        %2592 = vperm.xlu0 %2591, %v2566
        %v2593 = vpop.permute.xlu0 %2592
        %2596 = vset.pattern.permute.xlu0 4
        %2597 = vperm.xlu0 %2596, %v2567
        %v2598 = vpop.permute.xlu0 %2597
        %2601 = vset.pattern.permute.xlu0 4
        %2602 = vperm.xlu0 %2601, %v2568
        %v2603 = vpop.permute.xlu0 %2602
        %2606 = vset.pattern.permute.xlu0 4
        %2607 = vperm.xlu0 %2606, %v2569
        %v2608 = vpop.permute.xlu0 %2607
        %2611 = vset.pattern.permute.xlu0 4
        %2612 = vperm.xlu0 %2611, %v2570
        %v2613 = vpop.permute.xlu0 %2612
        %2616 = vset.pattern.permute.xlu0 4
        %2617 = vperm.xlu0 %2616, %v2571
        %v2618 = vpop.permute.xlu0 %2617
        %v2620 = vmul.f32 %v2583, %v2572
        %v2621 = vmul.f32 %v2588, %v2573
        %v2622 = vmul.f32 %v2593, %v2574
        %v2623 = vmul.f32 %v2598, %v2575
        %v2624 = vmul.f32 %v2603, %v2576
        %v2625 = vmul.f32 %v2608, %v2577
        %v2626 = vmul.f32 %v2613, %v2578
        %v2627 = vmul.f32 %v2618, %v2579
        %2629 = vset.pattern.permute.xlu0 5
        %2630 = vperm.xlu0 %2629, %v2556
        %v2631 = vpop.permute.xlu0 %2630
        %2634 = vset.pattern.permute.xlu0 5
        %2635 = vperm.xlu0 %2634, %v2557
        %v2636 = vpop.permute.xlu0 %2635
        %2639 = vset.pattern.permute.xlu0 5
        %2640 = vperm.xlu0 %2639, %v2558
        %v2641 = vpop.permute.xlu0 %2640
        %2644 = vset.pattern.permute.xlu0 5
        %2645 = vperm.xlu0 %2644, %v2559
        %v2646 = vpop.permute.xlu0 %2645
        %2649 = vset.pattern.permute.xlu0 5
        %2650 = vperm.xlu0 %2649, %v2560
        %v2651 = vpop.permute.xlu0 %2650
        %2654 = vset.pattern.permute.xlu0 5
        %2655 = vperm.xlu0 %2654, %v2561
        %v2656 = vpop.permute.xlu0 %2655
        %2659 = vset.pattern.permute.xlu0 5
        %2660 = vperm.xlu0 %2659, %v2562
        %v2661 = vpop.permute.xlu0 %2660
        %2664 = vset.pattern.permute.xlu0 5
        %2665 = vperm.xlu0 %2664, %v2563
        %v2666 = vpop.permute.xlu0 %2665
        %v2668 = vadd.f32 %v2620, %v2631
        %v2669 = vadd.f32 %v2621, %v2636
        %v2670 = vadd.f32 %v2622, %v2641
        %v2671 = vadd.f32 %v2623, %v2646
        %v2672 = vadd.f32 %v2624, %v2651
        %v2673 = vadd.f32 %v2625, %v2656
        %v2674 = vadd.f32 %v2626, %v2661
        %v2675 = vadd.f32 %v2627, %v2666
        %v2676 = vmax.f32 %v2668, 0.0
        %v2677 = vmax.f32 %v2669, 0.0
        %v2678 = vmax.f32 %v2670, 0.0
        %v2679 = vmax.f32 %v2671, 0.0
        %v2680 = vmax.f32 %v2672, 0.0
        %v2681 = vmax.f32 %v2673, 0.0
        %v2682 = vmax.f32 %v2674, 0.0
        %v2683 = vmax.f32 %v2675, 0.0
        %v2684 = vld [vmem:[%s1 + $0x70] sm:$0xff]
        %v2685 = vld [vmem:[%s1 + $0x78] sm:$0xff]
        %v2686 = vld [vmem:[%s1 + $0x80] sm:$0xff]
        %v2687 = vld [vmem:[%s1 + $0x88] sm:$0xff]
        %vm2688 = vcmask 523264
        %v2690 = vsel %vm2688, %v2684, 0
        %v2693 = vsel %vm2688, %v2685, 0
        %v2696 = vsel %vm2688, %v2686, 0
        %v2699 = vsel %vm2688, %v2687, 0
        %2701 = vmatpush.msra.mxu0 0.0
        %2702 = vmatpush.msra.mxu0 0.0
        %2703 = vmatpush.msra.mxu0 0.0
        %2704 = vmatpush.msra.mxu0 0.0
        %2705 = vmatpush.msra.mxu0 0.0
        %2706 = vmatpush.msra.mxu0 0.0
        %2707 = vmatpush.msra.mxu0 0.0
        %2708 = vmatpush.msra.mxu0 0.0
        %2709 = vmatpush.msra.mxu0 %v2683
        %2710 = vmatpush.msra.mxu0 %v2682
        %2711 = vmatpush.msra.mxu0 %v2681
        %2712 = vmatpush.msra.mxu0 %v2680
        %2713 = vmatpush.msra.mxu0 %v2679
        %2714 = vmatpush.msra.mxu0 %v2678
        %2715 = vmatpush.msra.mxu0 %v2677
        %2716 = vmatpush.msra.mxu0 %v2676
        %2717 = vmatmul.f32.gmra.mxu0 %v2690
        %v2718 = vpop.f32.mrf.mxu0
        %v2719 = vadd.f32 0.0, %v2718
        %2720 = vmatmul.f32.gmra.mxu0 %v2693
        %v2721 = vpop.f32.mrf.mxu0
        %v2722 = vadd.f32 0.0, %v2721
        %2723 = vmatmul.f32.gmra.mxu0 %v2696
        %v2724 = vpop.f32.mrf.mxu0
        %v2725 = vadd.f32 0.0, %v2724
        %2726 = vmatmul.f32.gmra.mxu0 %v2699
        %v2727 = vpop.f32.mrf.mxu0
        %v2728 = vadd.f32 0.0, %v2727
        %2729 = vdwg.mxu0
        %v2730 = vld [vmem:[%s2] sm:$0xff]
        %v2731 = vld [vmem:[%s2 + $0x8] sm:$0xff]
        %v2732 = vld [vmem:[%s2 + $0x10] sm:$0xff]
        %v2733 = vld [vmem:[%s2 + $0x18] sm:$0xff]
        %vm2734 = vcmask 31744
        %v2735 = vsel %vm2734, %v2719, 0.0
        %2736 = vadd.xlane.f32.xlu0 %v2735
        %v2737 = vpop.xlane.xlu0 %2736
        %v2738 = vsel %vm2734, %v2722, 0.0
        %2739 = vadd.xlane.f32.xlu0 %v2738
        %v2740 = vpop.xlane.xlu0 %2739
        %v2741 = vsel %vm2734, %v2725, 0.0
        %2742 = vadd.xlane.f32.xlu0 %v2741
        %v2743 = vpop.xlane.xlu0 %2742
        %v2744 = vsel %vm2734, %v2728, 0.0
        %2745 = vadd.xlane.f32.xlu0 %v2744
        %v2746 = vpop.xlane.xlu0 %2745
        %v2747 = vrcp.pop 4.0
        %v2748 = vmul.f32 4.0, %v2747
        %v2749 = vsub.f32 1.0, %v2748
        %v2750 = vmul.f32 %v2747, %v2749
        %v2751 = vadd.f32 %v2747, %v2750
        %vm2752 = vweird.f32 %v2747
        %v2753 = vsel %vm2752, %v2747, %v2751
        %v2754 = vmul.f32 %v2737, %v2753
        %v2755 = vmul.f32 %v2740, %v2753
        %v2756 = vmul.f32 %v2743, %v2753
        %v2757 = vmul.f32 %v2746, %v2753
        %v2758 = vsub.f32 %v2719, %v2754
        %v2759 = vsub.f32 %v2722, %v2755
        %v2760 = vsub.f32 %v2725, %v2756
        %v2761 = vsub.f32 %v2728, %v2757
        %v2762 = vmul.f32 %v2758, %v2758
        %v2763 = vmul.f32 %v2759, %v2759
        %v2764 = vmul.f32 %v2760, %v2760
        %v2765 = vmul.f32 %v2761, %v2761
        %v2766 = vsel %vm2734, %v2762, 0.0
        %2767 = vadd.xlane.f32.xlu0 %v2766
        %v2768 = vpop.xlane.xlu0 %2767
        %v2769 = vsel %vm2734, %v2763, 0.0
        %2770 = vadd.xlane.f32.xlu0 %v2769
        %v2771 = vpop.xlane.xlu0 %2770
        %v2772 = vsel %vm2734, %v2764, 0.0
        %2773 = vadd.xlane.f32.xlu0 %v2772
        %v2774 = vpop.xlane.xlu0 %2773
        %v2775 = vsel %vm2734, %v2765, 0.0
        %2776 = vadd.xlane.f32.xlu0 %v2775
        %v2777 = vpop.xlane.xlu0 %2776
        %v2778 = vmul.f32 %v2768, %v2753
        %v2779 = vmul.f32 %v2771, %v2753
        %v2780 = vmul.f32 %v2774, %v2753
        %v2781 = vmul.f32 %v2777, %v2753
        %v2782 = vadd.f32 %v2778, 1e-05
        %v2783 = vadd.f32 %v2779, 1e-05
        %v2784 = vadd.f32 %v2780, 1e-05
        %v2785 = vadd.f32 %v2781, 1e-05
        %v2786 = vrsqrt.pop %v2782
        %v2787 = vmul.f32 %v2786, %v2782
        %v2788 = vmul.f32 %v2787, %v2786
        %v2789 = vmul.f32 0.5, %v2788
        %v2790 = vsub.f32 1.5, %v2789
        %v2791 = vmul.f32 %v2786, %v2790
        %vm2792 = vweird.f32 %v2782
        %vm2793 = vweird.f32 %v2786
        %vm2794 = vmor %vm2792, %vm2793
        %v2795 = vsel %vm2794, %v2786, %v2791
        %v2796 = vrsqrt.pop %v2783
        %v2797 = vmul.f32 %v2796, %v2783
        %v2798 = vmul.f32 %v2797, %v2796
        %v2799 = vmul.f32 0.5, %v2798
        %v2800 = vsub.f32 1.5, %v2799
        %v2801 = vmul.f32 %v2796, %v2800
        %vm2802 = vweird.f32 %v2783
        %vm2803 = vweird.f32 %v2796
        %vm2804 = vmor %vm2802, %vm2803
        %v2805 = vsel %vm2804, %v2796, %v2801
        %v2806 = vrsqrt.pop %v2784
        %v2807 = vmul.f32 %v2806, %v2784
        %v2808 = vmul.f32 %v2807, %v2806
        %v2809 = vmul.f32 0.5, %v2808
        %v2810 = vsub.f32 1.5, %v2809
        %v2811 = vmul.f32 %v2806, %v2810
        %vm2812 = vweird.f32 %v2784
        %vm2813 = vweird.f32 %v2806
        %vm2814 = vmor %vm2812, %vm2813
        %v2815 = vsel %vm2814, %v2806, %v2811
        %v2816 = vrsqrt.pop %v2785
        %v2817 = vmul.f32 %v2816, %v2785
        %v2818 = vmul.f32 %v2817, %v2816
        %v2819 = vmul.f32 0.5, %v2818
        %v2820 = vsub.f32 1.5, %v2819
        %v2821 = vmul.f32 %v2816, %v2820
        %vm2822 = vweird.f32 %v2785
        %vm2823 = vweird.f32 %v2816
        %vm2824 = vmor %vm2822, %vm2823
        %v2825 = vsel %vm2824, %v2816, %v2821
        %v2826 = vmul.f32 %v2758, %v2795
        %v2827 = vmul.f32 %v2759, %v2805
        %v2828 = vmul.f32 %v2760, %v2815
        %v2829 = vmul.f32 %v2761, %v2825
        %2831 = vset.pattern.permute.xlu0 6
        %2832 = vperm.xlu0 %2831, %v2730
        %v2833 = vpop.permute.xlu0 %2832
        %2836 = vset.pattern.permute.xlu0 6
        %2837 = vperm.xlu0 %2836, %v2731
        %v2838 = vpop.permute.xlu0 %2837
        %2841 = vset.pattern.permute.xlu0 6
        %2842 = vperm.xlu0 %2841, %v2732
        %v2843 = vpop.permute.xlu0 %2842
        %2846 = vset.pattern.permute.xlu0 6
        %2847 = vperm.xlu0 %2846, %v2733
        %v2848 = vpop.permute.xlu0 %2847
        %v2850 = vmul.f32 %v2826, %v2833
        %v2851 = vmul.f32 %v2827, %v2838
        %v2852 = vmul.f32 %v2828, %v2843
        %v2853 = vmul.f32 %v2829, %v2848
        %2854 = vset.pattern.permute.xlu0 7
        %2855 = vperm.xlu0 %2854, %v2730
        %v2856 = vpop.permute.xlu0 %2855
        %2858 = vset.pattern.permute.xlu0 7
        %2859 = vperm.xlu0 %2858, %v2731
        %v2860 = vpop.permute.xlu0 %2859
        %2862 = vset.pattern.permute.xlu0 7
        %2863 = vperm.xlu0 %2862, %v2732
        %v2864 = vpop.permute.xlu0 %2863
        %2866 = vset.pattern.permute.xlu0 7
        %2867 = vperm.xlu0 %2866, %v2733
        %v2868 = vpop.permute.xlu0 %2867
        %v2870 = vadd.f32 %v2850, %v2856
        %v2871 = vadd.f32 %v2851, %v2860
        %v2872 = vadd.f32 %v2852, %v2864
        %v2873 = vadd.f32 %v2853, %v2868
        %v2874 = vmax.f32 %v2870, 0.0
        %v2875 = vmax.f32 %v2871, 0.0
        %v2876 = vmax.f32 %v2872, 0.0
        %v2877 = vmax.f32 %v2873, 0.0
        %v2878 = vld [vmem:[%s1 + $0x90] sm:$0xff]
        %v2879 = vld [vmem:[%s1 + $0x98] sm:$0xff]
        %vm2880 = vcmask 261120
        %v2882 = vsel %vm2880, %v2878, 0
        %v2885 = vsel %vm2880, %v2879, 0
        %2887 = vmatpush.msra.mxu0 0.0
        %2888 = vmatpush.msra.mxu0 0.0
        %2889 = vmatpush.msra.mxu0 0.0
        %2890 = vmatpush.msra.mxu0 0.0
        %2891 = vmatpush.msra.mxu0 0.0
        %2892 = vmatpush.msra.mxu0 0.0
        %2893 = vmatpush.msra.mxu0 0.0
        %2894 = vmatpush.msra.mxu0 0.0
        %2895 = vmatpush.msra.mxu0 0.0
        %2896 = vmatpush.msra.mxu0 0.0
        %2897 = vmatpush.msra.mxu0 0.0
        %2898 = vmatpush.msra.mxu0 0.0
        %2899 = vmatpush.msra.mxu0 %v2877
        %2900 = vmatpush.msra.mxu0 %v2876
        %2901 = vmatpush.msra.mxu0 %v2875
        %2902 = vmatpush.msra.mxu0 %v2874
        %2903 = vmatmul.f32.gmra.mxu0 %v2882
        %v2904 = vpop.f32.mrf.mxu0
        %v2905 = vadd.f32 0.0, %v2904
        %2906 = vmatmul.f32.gmra.mxu0 %v2885
        %v2907 = vpop.f32.mrf.mxu0
        %v2908 = vadd.f32 0.0, %v2907
        %2909 = vdwg.mxu0
        %v2910 = vld [vmem:[%s2] sm:$0xff]
        %v2911 = vld [vmem:[%s2 + $0x8] sm:$0xff]
        %v2912 = vsel %vm2734, %v2905, 0.0
        %2913 = vadd.xlane.f32.xlu0 %v2912
        %v2914 = vpop.xlane.xlu0 %2913
        %v2915 = vsel %vm2734, %v2908, 0.0
        %2916 = vadd.xlane.f32.xlu0 %v2915
        %v2917 = vpop.xlane.xlu0 %2916
        %v2918 = vmul.f32 %v2914, %v2753
        %v2919 = vmul.f32 %v2917, %v2753
        %v2920 = vsub.f32 %v2905, %v2918
        %v2921 = vsub.f32 %v2908, %v2919
        %v2922 = vmul.f32 %v2920, %v2920
        %v2923 = vmul.f32 %v2921, %v2921
        %v2924 = vsel %vm2734, %v2922, 0.0
        %2925 = vadd.xlane.f32.xlu0 %v2924
        %v2926 = vpop.xlane.xlu0 %2925
        %v2927 = vsel %vm2734, %v2923, 0.0
        %2928 = vadd.xlane.f32.xlu0 %v2927
        %v2929 = vpop.xlane.xlu0 %2928
        %v2930 = vmul.f32 %v2926, %v2753
        %v2931 = vmul.f32 %v2929, %v2753
        %v2932 = vadd.f32 %v2930, 1e-05
        %v2933 = vadd.f32 %v2931, 1e-05
        %v2934 = vrsqrt.pop %v2932
        %v2935 = vmul.f32 %v2934, %v2932
        %v2936 = vmul.f32 %v2935, %v2934
        %v2937 = vmul.f32 0.5, %v2936
        %v2938 = vsub.f32 1.5, %v2937
        %v2939 = vmul.f32 %v2934, %v2938
        %vm2940 = vweird.f32 %v2932
        %vm2941 = vweird.f32 %v2934
        %vm2942 = vmor %vm2940, %vm2941
        %v2943 = vsel %vm2942, %v2934, %v2939
        %v2944 = vrsqrt.pop %v2933
        %v2945 = vmul.f32 %v2944, %v2933
        %v2946 = vmul.f32 %v2945, %v2944
        %v2947 = vmul.f32 0.5, %v2946
        %v2948 = vsub.f32 1.5, %v2947
        %v2949 = vmul.f32 %v2944, %v2948
        %vm2950 = vweird.f32 %v2933
        %vm2951 = vweird.f32 %v2944
        %vm2952 = vmor %vm2950, %vm2951
        %v2953 = vsel %vm2952, %v2944, %v2949
        %v2954 = vmul.f32 %v2920, %v2943
        %v2955 = vmul.f32 %v2921, %v2953
        %2957 = vset.pattern.permute.xlu0 8
        %2958 = vperm.xlu0 %2957, %v2910
        %v2959 = vpop.permute.xlu0 %2958
        %2962 = vset.pattern.permute.xlu0 8
        %2963 = vperm.xlu0 %2962, %v2911
        %v2964 = vpop.permute.xlu0 %2963
        %v2966 = vmul.f32 %v2954, %v2959
        %v2967 = vmul.f32 %v2955, %v2964
        %2968 = vset.pattern.permute.xlu0 9
        %2969 = vperm.xlu0 %2968, %v2910
        %v2970 = vpop.permute.xlu0 %2969
        %2972 = vset.pattern.permute.xlu0 9
        %2973 = vperm.xlu0 %2972, %v2911
        %v2974 = vpop.permute.xlu0 %2973
        %v2976 = vadd.f32 %v2966, %v2970
        %v2977 = vadd.f32 %v2967, %v2974
        %v2978 = vmax.f32 %v2976, 0.0
        %v2979 = vmax.f32 %v2977, 0.0
        %v2980 = vld [vmem:[%s1 + $0xa0] sm:$0xff]
        %v2981 = vld [vmem:[%s1 + $0xa8] sm:$0xff]
        %v2982 = vld [vmem:[%s1 + $0xb0] sm:$0xff]
        %v2983 = vld [vmem:[%s1 + $0xb8] sm:$0x1]
        %v2984 = vld [vmem:[%s2] sm:$0xff]
        %v2985 = vld [vmem:[%s2 + $0x8] sm:$0xff]
        %v2986 = vld [vmem:[%s2 + $0x10] sm:$0xff]
        %v2987 = vld [vmem:[%s2 + $0x18] sm:$0x1]
        %2989 = vset.pattern.permute.xlu0 10
        %2990 = vperm.xlu0 %2989, %v2984
        %v2991 = vpop.permute.xlu0 %2990
        %2994 = vset.pattern.permute.xlu0 10
        %2995 = vperm.xlu0 %2994, %v2985
        %v2996 = vpop.permute.xlu0 %2995
        %2999 = vset.pattern.permute.xlu0 10
        %3000 = vperm.xlu0 %2999, %v2986
        %v3001 = vpop.permute.xlu0 %3000
        %3004 = vset.pattern.permute.xlu0 10
        %3005 = vperm.xlu0 %3004, %v2987
        %v3006 = vpop.permute.xlu0 %3005
        %vm3008 = vcmask 130048
        %v3010 = vsel %vm3008, %v2980, 0
        %v3013 = vsel %vm3008, %v2981, 0
        %v3016 = vsel %vm3008, %v2982, 0
        %v3019 = vsel %vm3008, %v2983, 0
        %3021 = vmatpush.msra.mxu0 0.0
        %3022 = vmatpush.msra.mxu0 0.0
        %3023 = vmatpush.msra.mxu0 0.0
        %3024 = vmatpush.msra.mxu0 0.0
        %3025 = vmatpush.msra.mxu0 0.0
        %3026 = vmatpush.msra.mxu0 0.0
        %3027 = vmatpush.msra.mxu0 0.0
        %3028 = vmatpush.msra.mxu0 0.0
        %3029 = vmatpush.msra.mxu0 0.0
        %3030 = vmatpush.msra.mxu0 0.0
        %3031 = vmatpush.msra.mxu0 0.0
        %3032 = vmatpush.msra.mxu0 0.0
        %3033 = vmatpush.msra.mxu0 0.0
        %3034 = vmatpush.msra.mxu0 0.0
        %3035 = vmatpush.msra.mxu0 %v2979
        %3036 = vmatpush.msra.mxu0 %v2978
        %3037 = vmatmul.f32.gmra.mxu0 %v3010
        %v3038 = vpop.f32.mrf.mxu0
        %v3039 = vadd.f32 %v2991, %v3038
        %3040 = vmatmul.f32.gmra.mxu0 %v3013
        %v3041 = vpop.f32.mrf.mxu0
        %v3042 = vadd.f32 %v2996, %v3041
        %3043 = vmatmul.f32.gmra.mxu0 %v3016
        %v3044 = vpop.f32.mrf.mxu0
        %v3045 = vadd.f32 %v3001, %v3044
        %3046 = vmatmul.f32.gmra.mxu0 %v3019
        %v3047 = vpop.f32.mrf.mxu0
        %v3048 = vadd.f32 %v3006, %v3047
        %3049 = vdwg.mxu0
        %v3050 = vlaneseq
        %v3051 = vshrl.u32 %v3050, 7
        %v3052 = vadd.s32 %v3051, 8
        %v3053 = vadd.s32 %v3051, 16
        %v3054 = vadd.s32 %v3051, 24
        %vm3055 = vcmp.lt.s32.totalorder %v3051, 0
        %v3056 = vsub.s32 0, %v3051
        %v3057 = vsel %vm3055, %v3056, %v3051
        %v3058 = vand.u32 %v3057, 65535
        %v3059 = vshrl.u32 %v3057, 16
        %v3061 = vmul.u32 %v3058, 43691
        %v3062 = vmul.u32 %v3058, 43690
        %v3063 = vmul.u32 %v3059, 43691
        %v3064 = vmul.u32 %v3059, 43690
        %v3065 = vshll.u32 %v3062, 16
        %v3066 = vshrl.u32 %v3062, 16
        %v3067 = vshll.u32 %v3063, 16
        %v3068 = vshrl.u32 %v3063, 16
        %vm3069 = vc.u32 %v3061, %v3065
        %v3070 = vsel %vm3069, 1, 0
        %v3071 = vadd.s32 %v3061, %v3065
        %v3072 = vadd.s32 %v3064, %v3070
        %vm3073 = vc.u32 %v3071, %v3067
        %v3074 = vsel %vm3073, 1, 0
        %v3075 = vadd.s32 %v3071, %v3067
        %v3076 = vadd.s32 %v3072, %v3074
        %v3077 = vadd.s32 %v3076, %v3066
        %v3078 = vadd.s32 %v3077, %v3068
        %v3079 = vshrl.u32 %v3078, 2
        %v3080 = vmul.u32 %v3079, 6
        %v3081 = vsub.s32 %v3057, %v3080
        %v3082 = vsub.s32 0, %v3081
        %v3083 = vsel %vm3055, %v3082, %v3081
        %vm3084 = vcmp.lt.s32.totalorder %v3052, 0
        %v3085 = vsub.s32 0, %v3052
        %v3086 = vsel %vm3084, %v3085, %v3052
        %v3087 = vand.u32 %v3086, 65535
        %v3088 = vshrl.u32 %v3086, 16
        %v3090 = vmul.u32 %v3087, 43691
        %v3091 = vmul.u32 %v3087, 43690
        %v3092 = vmul.u32 %v3088, 43691
        %v3093 = vmul.u32 %v3088, 43690
        %v3094 = vshll.u32 %v3091, 16
        %v3095 = vshrl.u32 %v3091, 16
        %v3096 = vshll.u32 %v3092, 16
        %v3097 = vshrl.u32 %v3092, 16
        %vm3098 = vc.u32 %v3090, %v3094
        %v3099 = vsel %vm3098, 1, 0
        %v3100 = vadd.s32 %v3090, %v3094
        %v3101 = vadd.s32 %v3093, %v3099
        %vm3102 = vc.u32 %v3100, %v3096
        %v3103 = vsel %vm3102, 1, 0
        %v3104 = vadd.s32 %v3100, %v3096
        %v3105 = vadd.s32 %v3101, %v3103
        %v3106 = vadd.s32 %v3105, %v3095
        %v3107 = vadd.s32 %v3106, %v3097
        %v3108 = vshrl.u32 %v3107, 2
        %v3109 = vmul.u32 %v3108, 6
        %v3110 = vsub.s32 %v3086, %v3109
        %v3111 = vsub.s32 0, %v3110
        %v3112 = vsel %vm3084, %v3111, %v3110
        %vm3113 = vcmp.lt.s32.totalorder %v3053, 0
        %v3114 = vsub.s32 0, %v3053
        %v3115 = vsel %vm3113, %v3114, %v3053
        %v3116 = vand.u32 %v3115, 65535
        %v3117 = vshrl.u32 %v3115, 16
        %v3119 = vmul.u32 %v3116, 43691
        %v3120 = vmul.u32 %v3116, 43690
        %v3121 = vmul.u32 %v3117, 43691
        %v3122 = vmul.u32 %v3117, 43690
        %v3123 = vshll.u32 %v3120, 16
        %v3124 = vshrl.u32 %v3120, 16
        %v3125 = vshll.u32 %v3121, 16
        %v3126 = vshrl.u32 %v3121, 16
        %vm3127 = vc.u32 %v3119, %v3123
        %v3128 = vsel %vm3127, 1, 0
        %v3129 = vadd.s32 %v3119, %v3123
        %v3130 = vadd.s32 %v3122, %v3128
        %vm3131 = vc.u32 %v3129, %v3125
        %v3132 = vsel %vm3131, 1, 0
        %v3133 = vadd.s32 %v3129, %v3125
        %v3134 = vadd.s32 %v3130, %v3132
        %v3135 = vadd.s32 %v3134, %v3124
        %v3136 = vadd.s32 %v3135, %v3126
        %v3137 = vshrl.u32 %v3136, 2
        %v3138 = vmul.u32 %v3137, 6
        %v3139 = vsub.s32 %v3115, %v3138
        %v3140 = vsub.s32 0, %v3139
        %v3141 = vsel %vm3113, %v3140, %v3139
        %vm3142 = vcmp.lt.s32.totalorder %v3054, 0
        %v3143 = vsub.s32 0, %v3054
        %v3144 = vsel %vm3142, %v3143, %v3054
        %v3145 = vand.u32 %v3144, 65535
        %v3146 = vshrl.u32 %v3144, 16
        %v3148 = vmul.u32 %v3145, 43691
        %v3149 = vmul.u32 %v3145, 43690
        %v3150 = vmul.u32 %v3146, 43691
        %v3151 = vmul.u32 %v3146, 43690
        %v3152 = vshll.u32 %v3149, 16
        %v3153 = vshrl.u32 %v3149, 16
        %v3154 = vshll.u32 %v3150, 16
        %v3155 = vshrl.u32 %v3150, 16
        %vm3156 = vc.u32 %v3148, %v3152
        %v3157 = vsel %vm3156, 1, 0
        %v3158 = vadd.s32 %v3148, %v3152
        %v3159 = vadd.s32 %v3151, %v3157
        %vm3160 = vc.u32 %v3158, %v3154
        %v3161 = vsel %vm3160, 1, 0
        %v3162 = vadd.s32 %v3158, %v3154
        %v3163 = vadd.s32 %v3159, %v3161
        %v3164 = vadd.s32 %v3163, %v3153
        %v3165 = vadd.s32 %v3164, %v3155
        %v3166 = vshrl.u32 %v3165, 2
        %v3167 = vmul.u32 %v3166, 6
        %v3168 = vsub.s32 %v3144, %v3167
        %v3169 = vsub.s32 0, %v3168
        %v3170 = vsel %vm3142, %v3169, %v3168
        %vm3171 = vcmp.ne.s32.totalorder %v3083, 0
        %vm3172 = vcmp.ne.s32.totalorder %v3112, 0
        %vm3173 = vcmp.ne.s32.totalorder %v3141, 0
        %vm3174 = vcmp.ne.s32.totalorder %v3170, 0
        %vm3175 = vcmp.lt.s32.totalorder %v3083, 0
        %vm3176 = vcmp.lt.s32.totalorder %v3112, 0
        %vm3177 = vcmp.lt.s32.totalorder %v3141, 0
        %vm3178 = vcmp.lt.s32.totalorder %v3170, 0
        %vm3179 = vmand %vm3175, %vm3171
        %vm3180 = vmand %vm3176, %vm3172
        %vm3181 = vmand %vm3177, %vm3173
        %vm3182 = vmand %vm3178, %vm3174
        %v3183 = vadd.s32 %v3083, 6
        %v3184 = vadd.s32 %v3112, 6
        %v3185 = vadd.s32 %v3141, 6
        %v3186 = vadd.s32 %v3170, 6
        %v3187 = vsel %vm3179, %v3183, %v3083
        %v3188 = vsel %vm3180, %v3184, %v3112
        %v3189 = vsel %vm3181, %v3185, %v3141
        %v3190 = vsel %vm3182, %v3186, %v3170
        %vm3191 = vcmp.eq.s32.totalorder %v3187, 0
        %vm3192 = vcmp.eq.s32.totalorder %v3188, 0
        %vm3193 = vcmp.eq.s32.totalorder %v3189, 0
        %vm3194 = vcmp.eq.s32.totalorder %v3190, 0
        %v3195 = vsel %vm3191, 1, 0
        %v3196 = vsel %vm3192, 1, 0
        %v3197 = vsel %vm3193, 1, 0
        %v3198 = vsel %vm3194, 1, 0
        %v3199 = vcvt.s32.f32 %v3195
        %v3200 = vcvt.s32.f32 %v3196
        %v3201 = vcvt.s32.f32 %v3197
        %v3202 = vcvt.s32.f32 %v3198
        %v3203 = vadd.f32 %v3039, %v3199
        %v3204 = vadd.f32 %v3042, %v3200
        %v3205 = vadd.f32 %v3045, %v3201
        %v3206 = vadd.f32 %v3048, %v3202
        %3207 = vst.msk [vmem:[%s3] sm:$0xff] %vm2734, %v3203
        %3208 = vst.msk [vmem:[%s3 + $0x8] sm:$0xff] %vm2734, %v3204
        %3209 = vst.msk [vmem:[%s3 + $0x10] sm:$0xff] %vm2734, %v3205
        %vm3210 = vcmask 24576
        %3211 = vst.msk [vmem:[%s3 + $0x18] sm:$0x1] %vm3210, %v3206
      $region76: #{tpu_custom_call.1} parent=31 // pred_fallthru
        _
      // Predicated region
      $region77: #{tpu_custom_call.1} parent=31 // pred_check
        %p3212 = pneg %p116
      $region78: #{tpu_custom_call.1} parent=31 // pred_check_branch
        %3214 = sbr.rel (%p3212) target = $region80
      $region79: #{tpu_custom_call.1} parent=31 // pred_region
        _
      $region80: #{tpu_custom_call.1} parent=31 // pred_fallthru
        _
      // Predicated region
      $region81: #{tpu_custom_call.1} parent=31 // pred_check
        %p3215 = pneg %p116
      $region82: #{tpu_custom_call.1} parent=31 // pred_check_branch
        %3217 = sbr.rel (%p3215) target = $region84
      $region83: #{tpu_custom_call.1} parent=31 // pred_region
        _
      $region84: #{tpu_custom_call.1} parent=31 // pred_fallthru
        _
    $region32: #{tpu_custom_call.1} parent=5 // pred_fallthru
      _
    %p3218 = scmp.le.s32.totalorder 2, %s9
    // Predicated region
    $region85: #{tpu_custom_call.1} parent=5 // pred_check
      %p3219 = pneg %p3218
    $region86: #{tpu_custom_call.1} parent=5 // pred_check_branch
      %3221 = sbr.rel (%p3219) target = $region88
    $region87: #{tpu_custom_call.1} parent=5 // pred_region
      %s3222 = ssub.s32 %s9, 2
    $region88: #{tpu_custom_call.1} parent=5 // pred_fallthru
      _
  $region6: #{tpu_custom_call.1} parent=0 // loop_footer
    %s13 = sadd.s32 1, %s9
  $region7: #{tpu_custom_call.1} parent=0 // loop_footer_branch
    %8 = sbr.rel target = $region3
  $region8: #{tpu_custom_call.1} parent=0 // loop_exit
    _

</llo_original>
